<compile_context>
chip_gen: v7x
topology: tpu7x:2x2x1
jax: 0.10.0
libtpu: 0.0.40
codegen_flags: <defaults>
</compile_context>

<pallas_src>
import jax
import jax.numpy as jnp
from jax.experimental import pallas as pl
from jax.experimental.pallas import tpu as pltpu

# Logical layer dims matching the PyTorch module: (in_features, out_features, leaky_relu?)
LAYER_DIMS = [
    (28 * 28, 512, True),
    (512, 512, True),
    (512, 256, True),
    (256, 128, True),
    (128, 64, True),
    (64, 128, True),
    (128, 10, False),
]
NEG_SLOPE = 0.01  # PyTorch nn.LeakyReLU default
LANE = 128


def _round_up(x, m):
    return (x + m - 1) // m * m


# Lane-dense padded dims. Zero padding is numerically exact: padded weight
# rows see zero activations, padded weight columns + zero bias give zero
# pre-activations, and LeakyReLU(0) == 0, so zeros propagate.
PADDED_DIMS = [(_round_up(i, LANE), _round_up(o, LANE), act) for (i, o, act) in LAYER_DIMS]
IN_PAD = PADDED_DIMS[0][0]        # 896 = 7 * 128
OUT_PAD = PADDED_DIMS[-1][1]      # 128
OUT_LOGICAL = LAYER_DIMS[-1][1]   # 10


def mlp_kernel(x_ref, *refs):
    """refs = (w1, b1, ..., w7, b7, out_ref). x/weights bf16, biases/out fp32."""
    out_ref = refs[-1]
    param_refs = refs[:-1]

    h = x_ref[...]  # (TM, IN_PAD) bf16
    for li, (_, _, act) in enumerate(PADDED_DIMS):
        w_ref = param_refs[2 * li]
        b_ref = param_refs[2 * li + 1]
        # bf16 x bf16 MXU matmul with fp32 accumulation, fp32 bias add.
        acc = jnp.dot(h, w_ref[...], preferred_element_type=jnp.float32)
        acc = acc + b_ref[...]
        if act:
            # LeakyReLU: max(x, 0.01*x) is exact for slope in (0, 1).
            acc = jnp.maximum(acc, NEG_SLOPE * acc)
            h = acc.astype(jnp.bfloat16)  # bf16 operand for the next matmul
        else:
            h = acc  # final layer stays fp32
    out_ref[...] = h.astype(out_ref.dtype)


def init_params(key):
    """Deterministic init mimicking PyTorch Linear default: U(-1/sqrt(in), 1/sqrt(in)).

    Weights stored as (in_features, out_features) fp32 (transpose of nn.Linear.weight),
    biases as (1, out_features) fp32.
    """
    params = []
    for (fan_in, fan_out, _) in LAYER_DIMS:
        key, kw, kb = jax.random.split(key, 3)
        bound = 1.0 / (fan_in ** 0.5)
        w = jax.random.uniform(kw, (fan_in, fan_out), jnp.float32, -bound, bound)
        b = jax.random.uniform(kb, (1, fan_out), jnp.float32, -bound, bound)
        params.append((w, b))
    return params


def prepare_params(params):
    """Zero-pad every layer to lane-multiple dims; weights -> bf16, biases stay fp32."""
    prepared = []
    for (w, b), (ip, op, _) in zip(params, PADDED_DIMS):
        wp = jnp.zeros((ip, op), jnp.float32).at[: w.shape[0], : w.shape[1]].set(w)
        bp = jnp.zeros((1, op), jnp.float32).at[:, : b.shape[1]].set(b)
        prepared.append((wp.astype(jnp.bfloat16), bp))
    return prepared


def neural_network_forward(x_nchw, params, *, max_tm=256):
    """x_nchw: (B, 1, 28, 28) -> logits (B, 10) fp32."""
    B = x_nchw.shape[0]
    x_flat = x_nchw.reshape(B, -1).astype(jnp.float32)  # nn.Flatten: (B, 784)

    # Batch tile: 256 rows when the batch is big (fills the 256x256 MXU on
    # v6e/v7x); for small batches pad up to a bf16 sublane multiple (16).
    TM = min(max_tm, _round_up(max(B, 16), 16))
    B_pad = _round_up(B, TM)
    grid = (B_pad // TM,)

    # Pad batch and the 784 feature dim to lane-dense (B_pad, 896) bf16.
    x_pad = jnp.zeros((B_pad, IN_PAD), jnp.float32)
    x_pad = x_pad.at[:B, : x_flat.shape[1]].set(x_flat).astype(jnp.bfloat16)

    prepared = prepare_params(params)
    flat_params = []
    for w, b in prepared:
        flat_params.extend([w, b])

    # Activation tiles stream over the batch grid; params use a constant
    # index_map so they are loaded once and stay resident in VMEM.
    in_specs = [pl.BlockSpec((TM, IN_PAD), lambda i: (i, 0))]
    for p in flat_params:
        in_specs.append(pl.BlockSpec(p.shape, lambda i: (0, 0)))
    out_specs = pl.BlockSpec((TM, OUT_PAD), lambda i: (i, 0))

    flops = 2 * B_pad * sum(ip * op for ip, op, _ in PADDED_DIMS)
    bytes_accessed = (
        sum(p.size * p.dtype.itemsize for p in flat_params)
        + x_pad.size * x_pad.dtype.itemsize
        + B_pad * OUT_PAD * 4
    )

    out = pl.pallas_call(
        mlp_kernel,
        out_shape=jax.ShapeDtypeStruct((B_pad, OUT_PAD), jnp.float32),
        grid=grid,
        in_specs=in_specs,
        out_specs=out_specs,
        compiler_params=pltpu.CompilerParams(
            dimension_semantics=("parallel",),   # shard batch tiles across v7x's 2 TCs
            vmem_limit_bytes=16 << 20,           # actual footprint ~8 MiB
        ),
        cost_estimate=pl.CostEstimate(
            flops=flops, transcendentals=0, bytes_accessed=bytes_accessed),
    )(x_pad, *flat_params)

    # Slice away batch padding and the padded output lanes (128 -> 10).
    return out[:B, :OUT_LOGICAL]


def reference_forward_same_recipe(x_nchw, params):
    """Pure-JAX reference using the same padded bf16-operand / fp32-accum recipe."""
    prepared = prepare_params(params)
    B = x_nchw.shape[0]
    h = x_nchw.reshape(B, -1).astype(jnp.float32)
    h = jnp.pad(h, ((0, 0), (0, IN_PAD - h.shape[1]))).astype(jnp.bfloat16)
    for li, (w, b) in enumerate(prepared):
        acc = jnp.dot(h.astype(jnp.float32), w.astype(jnp.float32)) + b
        if PADDED_DIMS[li][2]:
            acc = jnp.maximum(acc, NEG_SLOPE * acc)
            h = acc.astype(jnp.bfloat16)
        else:
            h = acc
    return h[:, :OUT_LOGICAL]


def reference_forward_fp32(x_nchw, params):
    """Full-precision PyTorch-semantics reference (fp32 end to end)."""
    h = x_nchw.reshape(x_nchw.shape[0], -1)
    for li, (w, b) in enumerate(params):
        h = h @ w + b
        if LAYER_DIMS[li][2]:
            h = jnp.where(h > 0, h, NEG_SLOPE * h)
    return h


if __name__ == "__main__":
    key = jax.random.PRNGKey(0)
    key, kx = jax.random.split(key)

    # Small MNIST-like NCHW batch, consistent with the module.
    x = jax.random.normal(kx, (2, 1, 28, 28), dtype=jnp.float32)
    params = init_params(key)

    logits = neural_network_forward(x, params)
    logits = jax.block_until_ready(logits)
    assert logits.shape == (2, 10), logits.shape

    # Tight check vs. a pure-JAX implementation of the exact same numeric recipe.
    ref_same = reference_forward_same_recipe(x, params)
    assert jnp.allclose(logits, ref_same, atol=1e-2, rtol=1e-2), "mismatch vs bf16-recipe reference"

    # Loose check vs. the fp32 PyTorch-semantics reference (bf16 weight quantization).
    ref_fp32 = reference_forward_fp32(x, params)
    assert jnp.allclose(logits, ref_fp32, atol=1e-1, rtol=1e-1), "mismatch vs fp32 reference"

    print("KERNEL_OK")
</pallas_src>

<mosaic_0001>
module attributes {stable_mosaic.version = 11 : i64} {
  func.func @mlp_kernel(%arg0: i32, %arg1: memref<16x896xbf16, #tpu.memory_space<vmem>>, %arg2: memref<896x512xbf16, #tpu.memory_space<vmem>>, %arg3: memref<1x512xf32, #tpu.memory_space<vmem>>, %arg4: memref<512x512xbf16, #tpu.memory_space<vmem>>, %arg5: memref<1x512xf32, #tpu.memory_space<vmem>>, %arg6: memref<512x256xbf16, #tpu.memory_space<vmem>>, %arg7: memref<1x256xf32, #tpu.memory_space<vmem>>, %arg8: memref<256x128xbf16, #tpu.memory_space<vmem>>, %arg9: memref<1x128xf32, #tpu.memory_space<vmem>>, %arg10: memref<128x128xbf16, #tpu.memory_space<vmem>>, %arg11: memref<1x128xf32, #tpu.memory_space<vmem>>, %arg12: memref<128x128xbf16, #tpu.memory_space<vmem>>, %arg13: memref<1x128xf32, #tpu.memory_space<vmem>>, %arg14: memref<128x128xbf16, #tpu.memory_space<vmem>>, %arg15: memref<1x128xf32, #tpu.memory_space<vmem>>, %arg16: memref<16x128xf32, #tpu.memory_space<vmem>>) attributes {dimension_semantics = [#tpu.dimension_semantics<parallel>], iteration_bounds = array<i64: 1>, scalar_prefetch = 0 : i64, scratch_operands = 0 : i64, tpu.core_type = #tpu.core_type<tc>, window_params = [{transform_indices = @transform_0, window_bounds = array<i64: 16, 896>}, {pipeline_mode = #tpu.pipeline_mode<synchronous>, transform_indices = @transform_1, window_bounds = array<i64: 896, 512>}, {pipeline_mode = #tpu.pipeline_mode<synchronous>, transform_indices = @transform_2, window_bounds = array<i64: 1, 512>}, {pipeline_mode = #tpu.pipeline_mode<synchronous>, transform_indices = @transform_3, window_bounds = array<i64: 512, 512>}, {pipeline_mode = #tpu.pipeline_mode<synchronous>, transform_indices = @transform_4, window_bounds = array<i64: 1, 512>}, {pipeline_mode = #tpu.pipeline_mode<synchronous>, transform_indices = @transform_5, window_bounds = array<i64: 512, 256>}, {pipeline_mode = #tpu.pipeline_mode<synchronous>, transform_indices = @transform_6, window_bounds = array<i64: 1, 256>}, {pipeline_mode = #tpu.pipeline_mode<synchronous>, transform_indices = @transform_7, window_bounds = array<i64: 256, 128>}, {pipeline_mode = #tpu.pipeline_mode<synchronous>, transform_indices = @transform_8, window_bounds = array<i64: 1, 128>}, {pipeline_mode = #tpu.pipeline_mode<synchronous>, transform_indices = @transform_9, window_bounds = array<i64: 128, 128>}, {pipeline_mode = #tpu.pipeline_mode<synchronous>, transform_indices = @transform_10, window_bounds = array<i64: 1, 128>}, {pipeline_mode = #tpu.pipeline_mode<synchronous>, transform_indices = @transform_11, window_bounds = array<i64: 128, 128>}, {pipeline_mode = #tpu.pipeline_mode<synchronous>, transform_indices = @transform_12, window_bounds = array<i64: 1, 128>}, {pipeline_mode = #tpu.pipeline_mode<synchronous>, transform_indices = @transform_13, window_bounds = array<i64: 128, 128>}, {pipeline_mode = #tpu.pipeline_mode<synchronous>, transform_indices = @transform_14, window_bounds = array<i64: 1, 128>}, {transform_indices = @transform_15, window_bounds = array<i64: 16, 128>}]} {
    %c0 = arith.constant 0 : index
    %c0_0 = arith.constant 0 : index
    %0 = vector.load %arg1[%c0, %c0_0] : memref<16x896xbf16, #tpu.memory_space<vmem>>, vector<16x896xbf16>
    %c0_1 = arith.constant 0 : index
    %c0_2 = arith.constant 0 : index
    %1 = vector.load %arg2[%c0_1, %c0_2] : memref<896x512xbf16, #tpu.memory_space<vmem>>, vector<896x512xbf16>
    %cst = arith.constant dense<0.000000e+00> : vector<16x512xf32>
    %2 = tpu.matmul %0, %1, %cst {dimension_numbers = #tpu.dot_dimension_numbers<[1], [0], [0], [1], [0, 0, 1, 1], [], []>} : vector<16x896xbf16>, vector<896x512xbf16>, vector<16x512xf32> -> vector<16x512xf32>
    %c0_3 = arith.constant 0 : index
    %c0_4 = arith.constant 0 : index
    %3 = vector.load %arg3[%c0_3, %c0_4] : memref<1x512xf32, #tpu.memory_space<vmem>>, vector<1x512xf32>
    %4 = vector.broadcast %3 : vector<1x512xf32> to vector<16x512xf32>
    %5 = arith.addf %2, %4 : vector<16x512xf32>
    %cst_5 = arith.constant 0.00999999977 : f32
    %6 = vector.broadcast %cst_5 : f32 to vector<16x512xf32>
    %7 = arith.mulf %6, %5 : vector<16x512xf32>
    %8 = arith.maximumf %5, %7 : vector<16x512xf32>
    %9 = arith.truncf %8 : vector<16x512xf32> to vector<16x512xbf16>
    %c0_6 = arith.constant 0 : index
    %c0_7 = arith.constant 0 : index
    %10 = vector.load %arg4[%c0_6, %c0_7] : memref<512x512xbf16, #tpu.memory_space<vmem>>, vector<512x512xbf16>
    %cst_8 = arith.constant dense<0.000000e+00> : vector<16x512xf32>
    %11 = tpu.matmul %9, %10, %cst_8 {dimension_numbers = #tpu.dot_dimension_numbers<[1], [0], [0], [1], [0, 0, 1, 1], [], []>} : vector<16x512xbf16>, vector<512x512xbf16>, vector<16x512xf32> -> vector<16x512xf32>
    %c0_9 = arith.constant 0 : index
    %c0_10 = arith.constant 0 : index
    %12 = vector.load %arg5[%c0_9, %c0_10] : memref<1x512xf32, #tpu.memory_space<vmem>>, vector<1x512xf32>
    %13 = vector.broadcast %12 : vector<1x512xf32> to vector<16x512xf32>
    %14 = arith.addf %11, %13 : vector<16x512xf32>
    %cst_11 = arith.constant 0.00999999977 : f32
    %15 = vector.broadcast %cst_11 : f32 to vector<16x512xf32>
    %16 = arith.mulf %15, %14 : vector<16x512xf32>
    %17 = arith.maximumf %14, %16 : vector<16x512xf32>
    %18 = arith.truncf %17 : vector<16x512xf32> to vector<16x512xbf16>
    %c0_12 = arith.constant 0 : index
    %c0_13 = arith.constant 0 : index
    %19 = vector.load %arg6[%c0_12, %c0_13] : memref<512x256xbf16, #tpu.memory_space<vmem>>, vector<512x256xbf16>
    %cst_14 = arith.constant dense<0.000000e+00> : vector<16x256xf32>
    %20 = tpu.matmul %18, %19, %cst_14 {dimension_numbers = #tpu.dot_dimension_numbers<[1], [0], [0], [1], [0, 0, 1, 1], [], []>} : vector<16x512xbf16>, vector<512x256xbf16>, vector<16x256xf32> -> vector<16x256xf32>
    %c0_15 = arith.constant 0 : index
    %c0_16 = arith.constant 0 : index
    %21 = vector.load %arg7[%c0_15, %c0_16] : memref<1x256xf32, #tpu.memory_space<vmem>>, vector<1x256xf32>
    %22 = vector.broadcast %21 : vector<1x256xf32> to vector<16x256xf32>
    %23 = arith.addf %20, %22 : vector<16x256xf32>
    %cst_17 = arith.constant 0.00999999977 : f32
    %24 = vector.broadcast %cst_17 : f32 to vector<16x256xf32>
    %25 = arith.mulf %24, %23 : vector<16x256xf32>
    %26 = arith.maximumf %23, %25 : vector<16x256xf32>
    %27 = arith.truncf %26 : vector<16x256xf32> to vector<16x256xbf16>
    %c0_18 = arith.constant 0 : index
    %c0_19 = arith.constant 0 : index
    %28 = vector.load %arg8[%c0_18, %c0_19] : memref<256x128xbf16, #tpu.memory_space<vmem>>, vector<256x128xbf16>
    %cst_20 = arith.constant dense<0.000000e+00> : vector<16x128xf32>
    %29 = tpu.matmul %27, %28, %cst_20 {dimension_numbers = #tpu.dot_dimension_numbers<[1], [0], [0], [1], [0, 0, 1, 1], [], []>} : vector<16x256xbf16>, vector<256x128xbf16>, vector<16x128xf32> -> vector<16x128xf32>
    %c0_21 = arith.constant 0 : index
    %c0_22 = arith.constant 0 : index
    %30 = vector.load %arg9[%c0_21, %c0_22] : memref<1x128xf32, #tpu.memory_space<vmem>>, vector<1x128xf32>
    %31 = vector.broadcast %30 : vector<1x128xf32> to vector<16x128xf32>
    %32 = arith.addf %29, %31 : vector<16x128xf32>
    %cst_23 = arith.constant 0.00999999977 : f32
    %33 = vector.broadcast %cst_23 : f32 to vector<16x128xf32>
    %34 = arith.mulf %33, %32 : vector<16x128xf32>
    %35 = arith.maximumf %32, %34 : vector<16x128xf32>
    %36 = arith.truncf %35 : vector<16x128xf32> to vector<16x128xbf16>
    %c0_24 = arith.constant 0 : index
    %c0_25 = arith.constant 0 : index
    %37 = vector.load %arg10[%c0_24, %c0_25] : memref<128x128xbf16, #tpu.memory_space<vmem>>, vector<128x128xbf16>
    %cst_26 = arith.constant dense<0.000000e+00> : vector<16x128xf32>
    %38 = tpu.matmul %36, %37, %cst_26 {dimension_numbers = #tpu.dot_dimension_numbers<[1], [0], [0], [1], [0, 0, 1, 1], [], []>} : vector<16x128xbf16>, vector<128x128xbf16>, vector<16x128xf32> -> vector<16x128xf32>
    %c0_27 = arith.constant 0 : index
    %c0_28 = arith.constant 0 : index
    %39 = vector.load %arg11[%c0_27, %c0_28] : memref<1x128xf32, #tpu.memory_space<vmem>>, vector<1x128xf32>
    %40 = vector.broadcast %39 : vector<1x128xf32> to vector<16x128xf32>
    %41 = arith.addf %38, %40 : vector<16x128xf32>
    %cst_29 = arith.constant 0.00999999977 : f32
    %42 = vector.broadcast %cst_29 : f32 to vector<16x128xf32>
    %43 = arith.mulf %42, %41 : vector<16x128xf32>
    %44 = arith.maximumf %41, %43 : vector<16x128xf32>
    %45 = arith.truncf %44 : vector<16x128xf32> to vector<16x128xbf16>
    %c0_30 = arith.constant 0 : index
    %c0_31 = arith.constant 0 : index
    %46 = vector.load %arg12[%c0_30, %c0_31] : memref<128x128xbf16, #tpu.memory_space<vmem>>, vector<128x128xbf16>
    %cst_32 = arith.constant dense<0.000000e+00> : vector<16x128xf32>
    %47 = tpu.matmul %45, %46, %cst_32 {dimension_numbers = #tpu.dot_dimension_numbers<[1], [0], [0], [1], [0, 0, 1, 1], [], []>} : vector<16x128xbf16>, vector<128x128xbf16>, vector<16x128xf32> -> vector<16x128xf32>
    %c0_33 = arith.constant 0 : index
    %c0_34 = arith.constant 0 : index
    %48 = vector.load %arg13[%c0_33, %c0_34] : memref<1x128xf32, #tpu.memory_space<vmem>>, vector<1x128xf32>
    %49 = vector.broadcast %48 : vector<1x128xf32> to vector<16x128xf32>
    %50 = arith.addf %47, %49 : vector<16x128xf32>
    %cst_35 = arith.constant 0.00999999977 : f32
    %51 = vector.broadcast %cst_35 : f32 to vector<16x128xf32>
    %52 = arith.mulf %51, %50 : vector<16x128xf32>
    %53 = arith.maximumf %50, %52 : vector<16x128xf32>
    %54 = arith.truncf %53 : vector<16x128xf32> to vector<16x128xbf16>
    %c0_36 = arith.constant 0 : index
    %c0_37 = arith.constant 0 : index
    %55 = vector.load %arg14[%c0_36, %c0_37] : memref<128x128xbf16, #tpu.memory_space<vmem>>, vector<128x128xbf16>
    %cst_38 = arith.constant dense<0.000000e+00> : vector<16x128xf32>
    %56 = tpu.matmul %54, %55, %cst_38 {dimension_numbers = #tpu.dot_dimension_numbers<[1], [0], [0], [1], [0, 0, 1, 1], [], []>} : vector<16x128xbf16>, vector<128x128xbf16>, vector<16x128xf32> -> vector<16x128xf32>
    %c0_39 = arith.constant 0 : index
    %c0_40 = arith.constant 0 : index
    %57 = vector.load %arg15[%c0_39, %c0_40] : memref<1x128xf32, #tpu.memory_space<vmem>>, vector<1x128xf32>
    %58 = vector.broadcast %57 : vector<1x128xf32> to vector<16x128xf32>
    %59 = arith.addf %56, %58 : vector<16x128xf32>
    %c0_41 = arith.constant 0 : index
    %c0_42 = arith.constant 0 : index
    %60 = vector.load %arg16[%c0_41, %c0_42] : memref<16x128xf32, #tpu.memory_space<vmem>>, vector<16x128xf32>
    tpu.vector_store %arg16[%c0_41, %c0_42], %59 {strides = array<i32>} : memref<16x128xf32, #tpu.memory_space<vmem>>, vector<16x128xf32>,
    return
  }
  func.func @transform_0(%arg0: i32) -> (i32, i32) {
    %c0_i32 = arith.constant 0 : i32
    %c0_i32_0 = arith.constant 0 : i32
    return %arg0, %c0_i32 : i32, i32
  }
  func.func @transform_1(%arg0: i32) -> (i32, i32) {
    %c0_i32 = arith.constant 0 : i32
    %c0_i32_0 = arith.constant 0 : i32
    %c0_i32_1 = arith.constant 0 : i32
    return %c0_i32, %c0_i32_0 : i32, i32
  }
  func.func @transform_2(%arg0: i32) -> (i32, i32) {
    %c0_i32 = arith.constant 0 : i32
    %c0_i32_0 = arith.constant 0 : i32
    %c0_i32_1 = arith.constant 0 : i32
    return %c0_i32, %c0_i32_0 : i32, i32
  }
  func.func @transform_3(%arg0: i32) -> (i32, i32) {
    %c0_i32 = arith.constant 0 : i32
    %c0_i32_0 = arith.constant 0 : i32
    %c0_i32_1 = arith.constant 0 : i32
    return %c0_i32, %c0_i32_0 : i32, i32
  }
  func.func @transform_4(%arg0: i32) -> (i32, i32) {
    %c0_i32 = arith.constant 0 : i32
    %c0_i32_0 = arith.constant 0 : i32
    %c0_i32_1 = arith.constant 0 : i32
    return %c0_i32, %c0_i32_0 : i32, i32
  }
  func.func @transform_5(%arg0: i32) -> (i32, i32) {
    %c0_i32 = arith.constant 0 : i32
    %c0_i32_0 = arith.constant 0 : i32
    %c0_i32_1 = arith.constant 0 : i32
    return %c0_i32, %c0_i32_0 : i32, i32
  }
  func.func @transform_6(%arg0: i32) -> (i32, i32) {
    %c0_i32 = arith.constant 0 : i32
    %c0_i32_0 = arith.constant 0 : i32
    %c0_i32_1 = arith.constant 0 : i32
    return %c0_i32, %c0_i32_0 : i32, i32
  }
  func.func @transform_7(%arg0: i32) -> (i32, i32) {
    %c0_i32 = arith.constant 0 : i32
    %c0_i32_0 = arith.constant 0 : i32
    %c0_i32_1 = arith.constant 0 : i32
    return %c0_i32, %c0_i32_0 : i32, i32
  }
  func.func @transform_8(%arg0: i32) -> (i32, i32) {
    %c0_i32 = arith.constant 0 : i32
    %c0_i32_0 = arith.constant 0 : i32
    %c0_i32_1 = arith.constant 0 : i32
    return %c0_i32, %c0_i32_0 : i32, i32
  }
  func.func @transform_9(%arg0: i32) -> (i32, i32) {
    %c0_i32 = arith.constant 0 : i32
    %c0_i32_0 = arith.constant 0 : i32
    %c0_i32_1 = arith.constant 0 : i32
    return %c0_i32, %c0_i32_0 : i32, i32
  }
  func.func @transform_10(%arg0: i32) -> (i32, i32) {
    %c0_i32 = arith.constant 0 : i32
    %c0_i32_0 = arith.constant 0 : i32
    %c0_i32_1 = arith.constant 0 : i32
    return %c0_i32, %c0_i32_0 : i32, i32
  }
  func.func @transform_11(%arg0: i32) -> (i32, i32) {
    %c0_i32 = arith.constant 0 : i32
    %c0_i32_0 = arith.constant 0 : i32
    %c0_i32_1 = arith.constant 0 : i32
    return %c0_i32, %c0_i32_0 : i32, i32
  }
  func.func @transform_12(%arg0: i32) -> (i32, i32) {
    %c0_i32 = arith.constant 0 : i32
    %c0_i32_0 = arith.constant 0 : i32
    %c0_i32_1 = arith.constant 0 : i32
    return %c0_i32, %c0_i32_0 : i32, i32
  }
  func.func @transform_13(%arg0: i32) -> (i32, i32) {
    %c0_i32 = arith.constant 0 : i32
    %c0_i32_0 = arith.constant 0 : i32
    %c0_i32_1 = arith.constant 0 : i32
    return %c0_i32, %c0_i32_0 : i32, i32
  }
  func.func @transform_14(%arg0: i32) -> (i32, i32) {
    %c0_i32 = arith.constant 0 : i32
    %c0_i32_0 = arith.constant 0 : i32
    %c0_i32_1 = arith.constant 0 : i32
    return %c0_i32, %c0_i32_0 : i32, i32
  }
  func.func @transform_15(%arg0: i32) -> (i32, i32) {
    %c0_i32 = arith.constant 0 : i32
    %c0_i32_0 = arith.constant 0 : i32
    return %arg0, %c0_i32 : i32, i32
  }
}

</mosaic_0001>

<llo_original>
// kernel: tpu_custom_call.1
$region0: #{tpu_custom_call.1}
  #allocation0 [shape = 'u32[]', space=smem, size = 0x4, offset = 0x4, fixed_abs, tag = 'smem constant byte address 0x4 - core index']
  #allocation1 [shape = 'u32[144,128]{1,0:T(1,128)}', space=vmem, size = 0x12000, scoped, tag = 'internal scratch']
  %s0 = inlined_call_operand.hbm [shape: bf16[16,896], index: 0, kind: input, shape index: {}]
  %s1 = inlined_call_operand.hbm [shape: bf16[896,512], index: 1, kind: input, shape index: {}]
  %s2 = inlined_call_operand.vmem [shape: f32[1,512], index: 2, kind: input, shape index: {}]
  %s3 = inlined_call_operand.hbm [shape: bf16[512,512], index: 3, kind: input, shape index: {}]
  %s4 = inlined_call_operand.vmem [shape: f32[1,512], index: 4, kind: input, shape index: {}]
  %s5 = inlined_call_operand.hbm [shape: bf16[512,256], index: 5, kind: input, shape index: {}]
  %s6 = inlined_call_operand.vmem [shape: f32[1,256], index: 6, kind: input, shape index: {}]
  %s7 = inlined_call_operand.hbm [shape: bf16[256,128], index: 7, kind: input, shape index: {}]
  %s8 = inlined_call_operand.vmem [shape: f32[1,128], index: 8, kind: input, shape index: {}]
  %s9 = inlined_call_operand.hbm [shape: bf16[128,128], index: 9, kind: input, shape index: {}]
  %s10 = inlined_call_operand.vmem [shape: f32[1,128], index: 10, kind: input, shape index: {}]
  %s11 = inlined_call_operand.hbm [shape: bf16[128,128], index: 11, kind: input, shape index: {}]
  %s12 = inlined_call_operand.vmem [shape: f32[1,128], index: 12, kind: input, shape index: {}]
  %s13 = inlined_call_operand.hbm [shape: bf16[128,128], index: 13, kind: input, shape index: {}]
  %s14 = inlined_call_operand.vmem [shape: f32[1,128], index: 14, kind: input, shape index: {}]
  %s15 = inlined_call_operand.hbm [shape: f32[16,128], index: 15, kind: output, shape index: {}]
  %s16 = sld [smem:[#allocation0]]
  $region102: #{tpu_custom_call.1} parent=0
    _
  %s18 = ssub.s32 1, %s16
  %s19 = scalar_select 0, %s18, %s16
  $region1: #{tpu_custom_call.1} parent=0
    #allocation2 [shape = 'u8[28672]{0}', space=vmem, size = 0x7000, scoped, tag = 'input window, operand 0, single buffered']
    #allocation3 [shape = 's32[1]{0}', space=sflag, size = 0x4, scoped, tag = 'scoped memory for tpu_custom_call.1']
    #allocation4 [shape = 's32[1]{0}', space=sflag, size = 0x4, scoped, tag = 'scoped memory for tpu_custom_call.1']
    #allocation5 [shape = 'u8[917504]{0}', space=vmem, size = 0xe0000, scoped, tag = 'input window, operand 1, single buffered']
    #allocation6 [shape = 's32[1]{0}', space=sflag, size = 0x4, scoped, tag = 'scoped memory for tpu_custom_call.1']
    #allocation7 [shape = 'u8[524288]{0}', space=vmem, size = 0x80000, scoped, tag = 'input window, operand 3, single buffered']
    #allocation8 [shape = 'u8[262144]{0}', space=vmem, size = 0x40000, scoped, tag = 'input window, operand 5, single buffered']
    #allocation9 [shape = 's32[1]{0}', space=sflag, size = 0x4, scoped, tag = 'scoped memory for tpu_custom_call.1']
    #allocation10 [shape = 'u8[65536]{0}', space=vmem, size = 0x10000, scoped, tag = 'input window, operand 7, single buffered']
    #allocation11 [shape = 'u8[32768]{0}', space=vmem, size = 0x8000, scoped, tag = 'input window, operand 9, single buffered']
    #allocation12 [shape = 's32[1]{0}', space=sflag, size = 0x4, scoped, tag = 'scoped memory for tpu_custom_call.1']
    #allocation13 [shape = 'u8[32768]{0}', space=vmem, size = 0x8000, scoped, tag = 'input window, operand 11, single buffered']
    #allocation14 [shape = 'u8[32768]{0}', space=vmem, size = 0x8000, scoped, tag = 'input window, operand 13, single buffered']
    #allocation15 [shape = 's32[1]{0}', space=sflag, size = 0x4, scoped, tag = 'scoped memory for tpu_custom_call.1']
    #allocation16 [shape = 'u8[8192]{0}', space=vmem, size = 0x2000, scoped, tag = 'output window, operand 0, single buffered']
    %20 = vsyncpa [#allocation3], 0
    %21 = vsyncpa [#allocation6], 0
    %22 = vsyncpa [#allocation9], 0
    %23 = vsyncpa [#allocation12], 0
    %24 = vsyncpa [#allocation15], 0
    %25 = vsyncpa [#allocation4], 0
    // Predicated region
    $region2: #{tpu_custom_call.1} parent=1 // pred_check
      _
    $region3: #{tpu_custom_call.1} parent=1 // pred_check_branch
      %27 = sbr.rel (0) target = $region5
    $region4: #{tpu_custom_call.1} parent=1 // pred_region
      %s29 = ssub.s32 896, 896
      %30 = vsyncadd [#allocation3], %s29
      %s31 = sshll.u32 [#allocation2], 4
      %s32 = int_to_ptr.vmem [resolvable:$true] %s31
      %37 = dma.hbm_to_vmem [thread:$0]  %s0, 896, %s32, [#allocation3], 448, 448, 28
    $region5: #{tpu_custom_call.1} parent=1 // pred_fallthru
      _
    // Predicated region
    $region6: #{tpu_custom_call.1} parent=1 // pred_check
      _
    $region7: #{tpu_custom_call.1} parent=1 // pred_check_branch
      %39 = sbr.rel (0) target = $region9
    $region8: #{tpu_custom_call.1} parent=1 // pred_region
      %s41 = ssub.s32 28672, 28672
      %42 = vsyncadd [#allocation6], %s41
      %s43 = sshll.u32 [#allocation5], 4
      %s44 = int_to_ptr.vmem [resolvable:$true] %s43
      %49 = dma.hbm_to_vmem [thread:$0]  %s1, 28672, %s44, [#allocation6], 256, 256, 16
    $region9: #{tpu_custom_call.1} parent=1 // pred_fallthru
      _
    // Predicated region
    $region10: #{tpu_custom_call.1} parent=1 // pred_check
      _
    $region11: #{tpu_custom_call.1} parent=1 // pred_check_branch
      %51 = sbr.rel (0) target = $region13
    $region12: #{tpu_custom_call.1} parent=1 // pred_region
      _
    $region13: #{tpu_custom_call.1} parent=1 // pred_fallthru
      _
    // Predicated region
    $region14: #{tpu_custom_call.1} parent=1 // pred_check
      _
    $region15: #{tpu_custom_call.1} parent=1 // pred_check_branch
      %53 = sbr.rel (0) target = $region17
    $region16: #{tpu_custom_call.1} parent=1 // pred_region
      %s55 = ssub.s32 16384, 16384
      %56 = vsyncadd [#allocation6], %s55
      %s57 = sshll.u32 [#allocation7], 4
      %s58 = int_to_ptr.vmem [resolvable:$true] %s57
      %63 = dma.hbm_to_vmem [thread:$0]  %s3, 16384, %s58, [#allocation6], 256, 256, 16
    $region17: #{tpu_custom_call.1} parent=1 // pred_fallthru
      _
    // Predicated region
    $region18: #{tpu_custom_call.1} parent=1 // pred_check
      _
    $region19: #{tpu_custom_call.1} parent=1 // pred_check_branch
      %65 = sbr.rel (0) target = $region21
    $region20: #{tpu_custom_call.1} parent=1 // pred_region
      _
    $region21: #{tpu_custom_call.1} parent=1 // pred_fallthru
      _
    // Predicated region
    $region22: #{tpu_custom_call.1} parent=1 // pred_check
      _
    $region23: #{tpu_custom_call.1} parent=1 // pred_check_branch
      %67 = sbr.rel (0) target = $region25
    $region24: #{tpu_custom_call.1} parent=1 // pred_region
      %s69 = ssub.s32 8192, 8192
      %70 = vsyncadd [#allocation9], %s69
      %s71 = sshll.u32 [#allocation8], 4
      %s72 = int_to_ptr.vmem [resolvable:$true] %s71
      %77 = dma.hbm_to_vmem [thread:$0]  %s5, 8192, %s72, [#allocation9], 128, 128, 8
    $region25: #{tpu_custom_call.1} parent=1 // pred_fallthru
      _
    // Predicated region
    $region26: #{tpu_custom_call.1} parent=1 // pred_check
      _
    $region27: #{tpu_custom_call.1} parent=1 // pred_check_branch
      %79 = sbr.rel (0) target = $region29
    $region28: #{tpu_custom_call.1} parent=1 // pred_region
      _
    $region29: #{tpu_custom_call.1} parent=1 // pred_fallthru
      _
    // Predicated region
    $region30: #{tpu_custom_call.1} parent=1 // pred_check
      _
    $region31: #{tpu_custom_call.1} parent=1 // pred_check_branch
      %81 = sbr.rel (0) target = $region33
    $region32: #{tpu_custom_call.1} parent=1 // pred_region
      %s83 = ssub.s32 2048, 2048
      %84 = vsyncadd [#allocation9], %s83
      %s85 = sshll.u32 [#allocation10], 4
      %s86 = int_to_ptr.vmem [resolvable:$true] %s85
      %91 = dma.hbm_to_vmem [thread:$0]  %s7, 2048, %s86, [#allocation9], 64, 64, 4
    $region33: #{tpu_custom_call.1} parent=1 // pred_fallthru
      _
    // Predicated region
    $region34: #{tpu_custom_call.1} parent=1 // pred_check
      _
    $region35: #{tpu_custom_call.1} parent=1 // pred_check_branch
      %93 = sbr.rel (0) target = $region37
    $region36: #{tpu_custom_call.1} parent=1 // pred_region
      _
    $region37: #{tpu_custom_call.1} parent=1 // pred_fallthru
      _
    // Predicated region
    $region38: #{tpu_custom_call.1} parent=1 // pred_check
      _
    $region39: #{tpu_custom_call.1} parent=1 // pred_check_branch
      %95 = sbr.rel (0) target = $region41
    $region40: #{tpu_custom_call.1} parent=1 // pred_region
      %s97 = ssub.s32 1024, 1024
      %98 = vsyncadd [#allocation12], %s97
      %s99 = sshll.u32 [#allocation11], 4
      %s100 = int_to_ptr.vmem [resolvable:$true] %s99
      %105 = dma.hbm_to_vmem [thread:$0]  %s9, 1024, %s100, [#allocation12], 64, 64, 4
    $region41: #{tpu_custom_call.1} parent=1 // pred_fallthru
      _
    // Predicated region
    $region42: #{tpu_custom_call.1} parent=1 // pred_check
      _
    $region43: #{tpu_custom_call.1} parent=1 // pred_check_branch
      %107 = sbr.rel (0) target = $region45
    $region44: #{tpu_custom_call.1} parent=1 // pred_region
      _
    $region45: #{tpu_custom_call.1} parent=1 // pred_fallthru
      _
    // Predicated region
    $region46: #{tpu_custom_call.1} parent=1 // pred_check
      _
    $region47: #{tpu_custom_call.1} parent=1 // pred_check_branch
      %109 = sbr.rel (0) target = $region49
    $region48: #{tpu_custom_call.1} parent=1 // pred_region
      %s111 = ssub.s32 1024, 1024
      %112 = vsyncadd [#allocation12], %s111
      %s113 = sshll.u32 [#allocation13], 4
      %s114 = int_to_ptr.vmem [resolvable:$true] %s113
      %119 = dma.hbm_to_vmem [thread:$0]  %s11, 1024, %s114, [#allocation12], 64, 64, 4
    $region49: #{tpu_custom_call.1} parent=1 // pred_fallthru
      _
    // Predicated region
    $region50: #{tpu_custom_call.1} parent=1 // pred_check
      _
    $region51: #{tpu_custom_call.1} parent=1 // pred_check_branch
      %121 = sbr.rel (0) target = $region53
    $region52: #{tpu_custom_call.1} parent=1 // pred_region
      _
    $region53: #{tpu_custom_call.1} parent=1 // pred_fallthru
      _
    // Predicated region
    $region54: #{tpu_custom_call.1} parent=1 // pred_check
      _
    $region55: #{tpu_custom_call.1} parent=1 // pred_check_branch
      %123 = sbr.rel (0) target = $region57
    $region56: #{tpu_custom_call.1} parent=1 // pred_region
      %s125 = ssub.s32 1024, 1024
      %126 = vsyncadd [#allocation15], %s125
      %s127 = sshll.u32 [#allocation14], 4
      %s128 = int_to_ptr.vmem [resolvable:$true] %s127
      %133 = dma.hbm_to_vmem [thread:$0]  %s13, 1024, %s128, [#allocation15], 64, 64, 4
    $region57: #{tpu_custom_call.1} parent=1 // pred_fallthru
      _
    // Predicated region
    $region58: #{tpu_custom_call.1} parent=1 // pred_check
      _
    $region59: #{tpu_custom_call.1} parent=1 // pred_check_branch
      %135 = sbr.rel (0) target = $region61
    $region60: #{tpu_custom_call.1} parent=1 // pred_region
      _
    $region61: #{tpu_custom_call.1} parent=1 // pred_fallthru
      _
    // Predicated region
    $region62: #{tpu_custom_call.1} parent=1 // pred_check
      _
    $region63: #{tpu_custom_call.1} parent=1 // pred_check_branch
      %137 = sbr.rel (0) target = $region65
    $region64: #{tpu_custom_call.1} parent=1 // pred_region
      %138 = dma.done [#allocation3], 896
    $region65: #{tpu_custom_call.1} parent=1 // pred_fallthru
      _
    // Predicated region
    $region66: #{tpu_custom_call.1} parent=1 // pred_check
      _
    $region67: #{tpu_custom_call.1} parent=1 // pred_check_branch
      %140 = sbr.rel (0) target = $region69
    $region68: #{tpu_custom_call.1} parent=1 // pred_region
      %141 = dma.done [#allocation6], 28672
    $region69: #{tpu_custom_call.1} parent=1 // pred_fallthru
      _
    // Predicated region
    $region70: #{tpu_custom_call.1} parent=1 // pred_check
      _
    $region71: #{tpu_custom_call.1} parent=1 // pred_check_branch
      %143 = sbr.rel (0) target = $region73
    $region72: #{tpu_custom_call.1} parent=1 // pred_region
      %144 = dma.done [#allocation6], 16384
    $region73: #{tpu_custom_call.1} parent=1 // pred_fallthru
      _
    // Predicated region
    $region74: #{tpu_custom_call.1} parent=1 // pred_check
      _
    $region75: #{tpu_custom_call.1} parent=1 // pred_check_branch
      %146 = sbr.rel (0) target = $region77
    $region76: #{tpu_custom_call.1} parent=1 // pred_region
      %147 = dma.done [#allocation9], 8192
    $region77: #{tpu_custom_call.1} parent=1 // pred_fallthru
      _
    // Predicated region
    $region78: #{tpu_custom_call.1} parent=1 // pred_check
      _
    $region79: #{tpu_custom_call.1} parent=1 // pred_check_branch
      %149 = sbr.rel (0) target = $region81
    $region80: #{tpu_custom_call.1} parent=1 // pred_region
      %150 = dma.done [#allocation9], 2048
    $region81: #{tpu_custom_call.1} parent=1 // pred_fallthru
      _
    // Predicated region
    $region82: #{tpu_custom_call.1} parent=1 // pred_check
      _
    $region83: #{tpu_custom_call.1} parent=1 // pred_check_branch
      %152 = sbr.rel (0) target = $region85
    $region84: #{tpu_custom_call.1} parent=1 // pred_region
      %153 = dma.done [#allocation12], 1024
    $region85: #{tpu_custom_call.1} parent=1 // pred_fallthru
      _
    // Predicated region
    $region86: #{tpu_custom_call.1} parent=1 // pred_check
      _
    $region87: #{tpu_custom_call.1} parent=1 // pred_check_branch
      %155 = sbr.rel (0) target = $region89
    $region88: #{tpu_custom_call.1} parent=1 // pred_region
      %156 = dma.done [#allocation12], 1024
    $region89: #{tpu_custom_call.1} parent=1 // pred_fallthru
      _
    // Predicated region
    $region90: #{tpu_custom_call.1} parent=1 // pred_check
      _
    $region91: #{tpu_custom_call.1} parent=1 // pred_check_branch
      %158 = sbr.rel (0) target = $region93
    $region92: #{tpu_custom_call.1} parent=1 // pred_region
      %159 = dma.done [#allocation15], 1024
    $region93: #{tpu_custom_call.1} parent=1 // pred_fallthru
      _
    %v161 = vld [vmem:[#allocation2] sm:$0xff]
    %v162 = vld [vmem:[#allocation2 + $0x8] sm:$0xff]
    %v163 = vld [vmem:[#allocation2 + $0x10] sm:$0xff]
    %v164 = vld [vmem:[#allocation2 + $0x18] sm:$0xf]
    %v165 = vld [vmem:[#allocation2 + $0x1c] sm:$0xff]
    %v166 = vld [vmem:[#allocation2 + $0x24] sm:$0xff]
    %v167 = vld [vmem:[#allocation2 + $0x2c] sm:$0xff]
    %v168 = vld [vmem:[#allocation2 + $0x34] sm:$0xf]
    %v169 = vld [vmem:[#allocation5] sm:$0xff]
    %v170 = vld [vmem:[#allocation5 + $0x8] sm:$0xff]
    %v171 = vld [vmem:[#allocation5 + $0x10] sm:$0xff]
    %v172 = vld [vmem:[#allocation5 + $0x18] sm:$0xff]
    %v173 = vld [vmem:[#allocation5 + $0x20] sm:$0xff]
    %v174 = vld [vmem:[#allocation5 + $0x28] sm:$0xff]
    %v175 = vld [vmem:[#allocation5 + $0x30] sm:$0xff]
    %v176 = vld [vmem:[#allocation5 + $0x38] sm:$0xff]
    %v177 = vld [vmem:[#allocation5 + $0x40] sm:$0xff]
    %v178 = vld [vmem:[#allocation5 + $0x48] sm:$0xff]
    %v179 = vld [vmem:[#allocation5 + $0x50] sm:$0xff]
    %v180 = vld [vmem:[#allocation5 + $0x58] sm:$0xff]
    %v181 = vld [vmem:[#allocation5 + $0x60] sm:$0xff]
    %v182 = vld [vmem:[#allocation5 + $0x68] sm:$0xff]
    %v183 = vld [vmem:[#allocation5 + $0x70] sm:$0xff]
    %v184 = vld [vmem:[#allocation5 + $0x78] sm:$0xff]
    %v185 = vld [vmem:[#allocation5 + $0x80] sm:$0xff]
    %v186 = vld [vmem:[#allocation5 + $0x88] sm:$0xff]
    %v187 = vld [vmem:[#allocation5 + $0x90] sm:$0xff]
    %v188 = vld [vmem:[#allocation5 + $0x98] sm:$0xff]
    %v189 = vld [vmem:[#allocation5 + $0xa0] sm:$0xff]
    %v190 = vld [vmem:[#allocation5 + $0xa8] sm:$0xff]
    %v191 = vld [vmem:[#allocation5 + $0xb0] sm:$0xff]
    %v192 = vld [vmem:[#allocation5 + $0xb8] sm:$0xff]
    %v193 = vld [vmem:[#allocation5 + $0xc0] sm:$0xff]
    %v194 = vld [vmem:[#allocation5 + $0xc8] sm:$0xff]
    %v195 = vld [vmem:[#allocation5 + $0xd0] sm:$0xff]
    %v196 = vld [vmem:[#allocation5 + $0xd8] sm:$0xff]
    %v197 = vld [vmem:[#allocation5 + $0xe0] sm:$0xff]
    %v198 = vld [vmem:[#allocation5 + $0xe8] sm:$0xff]
    %v199 = vld [vmem:[#allocation5 + $0xf0] sm:$0xff]
    %v200 = vld [vmem:[#allocation5 + $0xf8] sm:$0xff]
    %v201 = vld [vmem:[#allocation5 + $0x100] sm:$0xff]
    %v202 = vld [vmem:[#allocation5 + $0x108] sm:$0xff]
    %v203 = vld [vmem:[#allocation5 + $0x110] sm:$0xff]
    %v204 = vld [vmem:[#allocation5 + $0x118] sm:$0xff]
    %v205 = vld [vmem:[#allocation5 + $0x120] sm:$0xff]
    %v206 = vld [vmem:[#allocation5 + $0x128] sm:$0xff]
    %v207 = vld [vmem:[#allocation5 + $0x130] sm:$0xff]
    %v208 = vld [vmem:[#allocation5 + $0x138] sm:$0xff]
    %v209 = vld [vmem:[#allocation5 + $0x140] sm:$0xff]
    %v210 = vld [vmem:[#allocation5 + $0x148] sm:$0xff]
    %v211 = vld [vmem:[#allocation5 + $0x150] sm:$0xff]
    %v212 = vld [vmem:[#allocation5 + $0x158] sm:$0xff]
    %v213 = vld [vmem:[#allocation5 + $0x160] sm:$0xff]
    %v214 = vld [vmem:[#allocation5 + $0x168] sm:$0xff]
    %v215 = vld [vmem:[#allocation5 + $0x170] sm:$0xff]
    %v216 = vld [vmem:[#allocation5 + $0x178] sm:$0xff]
    %v217 = vld [vmem:[#allocation5 + $0x180] sm:$0xff]
    %v218 = vld [vmem:[#allocation5 + $0x188] sm:$0xff]
    %v219 = vld [vmem:[#allocation5 + $0x190] sm:$0xff]
    %v220 = vld [vmem:[#allocation5 + $0x198] sm:$0xff]
    %v221 = vld [vmem:[#allocation5 + $0x1a0] sm:$0xff]
    %v222 = vld [vmem:[#allocation5 + $0x1a8] sm:$0xff]
    %v223 = vld [vmem:[#allocation5 + $0x1b0] sm:$0xff]
    %v224 = vld [vmem:[#allocation5 + $0x1b8] sm:$0xff]
    %v225 = vld [vmem:[#allocation5 + $0x1c0] sm:$0xff]
    %v226 = vld [vmem:[#allocation5 + $0x1c8] sm:$0xff]
    %v227 = vld [vmem:[#allocation5 + $0x1d0] sm:$0xff]
    %v228 = vld [vmem:[#allocation5 + $0x1d8] sm:$0xff]
    %v229 = vld [vmem:[#allocation5 + $0x1e0] sm:$0xff]
    %v230 = vld [vmem:[#allocation5 + $0x1e8] sm:$0xff]
    %v231 = vld [vmem:[#allocation5 + $0x1f0] sm:$0xff]
    %v232 = vld [vmem:[#allocation5 + $0x1f8] sm:$0xff]
    %v233 = vld [vmem:[#allocation5 + $0x200] sm:$0xff]
    %v234 = vld [vmem:[#allocation5 + $0x208] sm:$0xff]
    %v235 = vld [vmem:[#allocation5 + $0x210] sm:$0xff]
    %v236 = vld [vmem:[#allocation5 + $0x218] sm:$0xff]
    %v237 = vld [vmem:[#allocation5 + $0x220] sm:$0xff]
    %v238 = vld [vmem:[#allocation5 + $0x228] sm:$0xff]
    %v239 = vld [vmem:[#allocation5 + $0x230] sm:$0xff]
    %v240 = vld [vmem:[#allocation5 + $0x238] sm:$0xff]
    %v241 = vld [vmem:[#allocation5 + $0x240] sm:$0xff]
    %v242 = vld [vmem:[#allocation5 + $0x248] sm:$0xff]
    %v243 = vld [vmem:[#allocation5 + $0x250] sm:$0xff]
    %v244 = vld [vmem:[#allocation5 + $0x258] sm:$0xff]
    %v245 = vld [vmem:[#allocation5 + $0x260] sm:$0xff]
    %v246 = vld [vmem:[#allocation5 + $0x268] sm:$0xff]
    %v247 = vld [vmem:[#allocation5 + $0x270] sm:$0xff]
    %v248 = vld [vmem:[#allocation5 + $0x278] sm:$0xff]
    %v249 = vld [vmem:[#allocation5 + $0x280] sm:$0xff]
    %v250 = vld [vmem:[#allocation5 + $0x288] sm:$0xff]
    %v251 = vld [vmem:[#allocation5 + $0x290] sm:$0xff]
    %v252 = vld [vmem:[#allocation5 + $0x298] sm:$0xff]
    %v253 = vld [vmem:[#allocation5 + $0x2a0] sm:$0xff]
    %v254 = vld [vmem:[#allocation5 + $0x2a8] sm:$0xff]
    %v255 = vld [vmem:[#allocation5 + $0x2b0] sm:$0xff]
    %v256 = vld [vmem:[#allocation5 + $0x2b8] sm:$0xff]
    %v257 = vld [vmem:[#allocation5 + $0x2c0] sm:$0xff]
    %v258 = vld [vmem:[#allocation5 + $0x2c8] sm:$0xff]
    %v259 = vld [vmem:[#allocation5 + $0x2d0] sm:$0xff]
    %v260 = vld [vmem:[#allocation5 + $0x2d8] sm:$0xff]
    %v261 = vld [vmem:[#allocation5 + $0x2e0] sm:$0xff]
    %v262 = vld [vmem:[#allocation5 + $0x2e8] sm:$0xff]
    %v263 = vld [vmem:[#allocation5 + $0x2f0] sm:$0xff]
    %v264 = vld [vmem:[#allocation5 + $0x2f8] sm:$0xff]
    %v265 = vld [vmem:[#allocation5 + $0x300] sm:$0xff]
    %v266 = vld [vmem:[#allocation5 + $0x308] sm:$0xff]
    %v267 = vld [vmem:[#allocation5 + $0x310] sm:$0xff]
    %v268 = vld [vmem:[#allocation5 + $0x318] sm:$0xff]
    %v269 = vld [vmem:[#allocation5 + $0x320] sm:$0xff]
    %v270 = vld [vmem:[#allocation5 + $0x328] sm:$0xff]
    %v271 = vld [vmem:[#allocation5 + $0x330] sm:$0xff]
    %v272 = vld [vmem:[#allocation5 + $0x338] sm:$0xff]
    %v273 = vld [vmem:[#allocation5 + $0x340] sm:$0xff]
    %v274 = vld [vmem:[#allocation5 + $0x348] sm:$0xff]
    %v275 = vld [vmem:[#allocation5 + $0x350] sm:$0xff]
    %v276 = vld [vmem:[#allocation5 + $0x358] sm:$0xff]
    %v277 = vld [vmem:[#allocation5 + $0x360] sm:$0xff]
    %v278 = vld [vmem:[#allocation5 + $0x368] sm:$0xff]
    %v279 = vld [vmem:[#allocation5 + $0x370] sm:$0xff]
    %v280 = vld [vmem:[#allocation5 + $0x378] sm:$0xff]
    %v281 = vld [vmem:[#allocation5 + $0x380] sm:$0xff]
    %v282 = vld [vmem:[#allocation5 + $0x388] sm:$0xff]
    %v283 = vld [vmem:[#allocation5 + $0x390] sm:$0xff]
    %v284 = vld [vmem:[#allocation5 + $0x398] sm:$0xff]
    %v285 = vld [vmem:[#allocation5 + $0x3a0] sm:$0xff]
    %v286 = vld [vmem:[#allocation5 + $0x3a8] sm:$0xff]
    %v287 = vld [vmem:[#allocation5 + $0x3b0] sm:$0xff]
    %v288 = vld [vmem:[#allocation5 + $0x3b8] sm:$0xff]
    %v289 = vld [vmem:[#allocation5 + $0x3c0] sm:$0xff]
    %v290 = vld [vmem:[#allocation5 + $0x3c8] sm:$0xff]
    %v291 = vld [vmem:[#allocation5 + $0x3d0] sm:$0xff]
    %v292 = vld [vmem:[#allocation5 + $0x3d8] sm:$0xff]
    %v293 = vld [vmem:[#allocation5 + $0x3e0] sm:$0xff]
    %v294 = vld [vmem:[#allocation5 + $0x3e8] sm:$0xff]
    %v295 = vld [vmem:[#allocation5 + $0x3f0] sm:$0xff]
    %v296 = vld [vmem:[#allocation5 + $0x3f8] sm:$0xff]
    %v297 = vld [vmem:[#allocation5 + $0x400] sm:$0xff]
    %v298 = vld [vmem:[#allocation5 + $0x408] sm:$0xff]
    %v299 = vld [vmem:[#allocation5 + $0x410] sm:$0xff]
    %v300 = vld [vmem:[#allocation5 + $0x418] sm:$0xff]
    %v301 = vld [vmem:[#allocation5 + $0x420] sm:$0xff]
    %v302 = vld [vmem:[#allocation5 + $0x428] sm:$0xff]
    %v303 = vld [vmem:[#allocation5 + $0x430] sm:$0xff]
    %v304 = vld [vmem:[#allocation5 + $0x438] sm:$0xff]
    %v305 = vld [vmem:[#allocation5 + $0x440] sm:$0xff]
    %v306 = vld [vmem:[#allocation5 + $0x448] sm:$0xff]
    %v307 = vld [vmem:[#allocation5 + $0x450] sm:$0xff]
    %v308 = vld [vmem:[#allocation5 + $0x458] sm:$0xff]
    %v309 = vld [vmem:[#allocation5 + $0x460] sm:$0xff]
    %v310 = vld [vmem:[#allocation5 + $0x468] sm:$0xff]
    %v311 = vld [vmem:[#allocation5 + $0x470] sm:$0xff]
    %v312 = vld [vmem:[#allocation5 + $0x478] sm:$0xff]
    %v313 = vld [vmem:[#allocation5 + $0x480] sm:$0xff]
    %v314 = vld [vmem:[#allocation5 + $0x488] sm:$0xff]
    %v315 = vld [vmem:[#allocation5 + $0x490] sm:$0xff]
    %v316 = vld [vmem:[#allocation5 + $0x498] sm:$0xff]
    %v317 = vld [vmem:[#allocation5 + $0x4a0] sm:$0xff]
    %v318 = vld [vmem:[#allocation5 + $0x4a8] sm:$0xff]
    %v319 = vld [vmem:[#allocation5 + $0x4b0] sm:$0xff]
    %v320 = vld [vmem:[#allocation5 + $0x4b8] sm:$0xff]
    %v321 = vld [vmem:[#allocation5 + $0x4c0] sm:$0xff]
    %v322 = vld [vmem:[#allocation5 + $0x4c8] sm:$0xff]
    %v323 = vld [vmem:[#allocation5 + $0x4d0] sm:$0xff]
    %v324 = vld [vmem:[#allocation5 + $0x4d8] sm:$0xff]
    %v325 = vld [vmem:[#allocation5 + $0x4e0] sm:$0xff]
    %v326 = vld [vmem:[#allocation5 + $0x4e8] sm:$0xff]
    %v327 = vld [vmem:[#allocation5 + $0x4f0] sm:$0xff]
    %v328 = vld [vmem:[#allocation5 + $0x4f8] sm:$0xff]
    %v329 = vld [vmem:[#allocation5 + $0x500] sm:$0xff]
    %v330 = vld [vmem:[#allocation5 + $0x508] sm:$0xff]
    %v331 = vld [vmem:[#allocation5 + $0x510] sm:$0xff]
    %v332 = vld [vmem:[#allocation5 + $0x518] sm:$0xff]
    %v333 = vld [vmem:[#allocation5 + $0x520] sm:$0xff]
    %v334 = vld [vmem:[#allocation5 + $0x528] sm:$0xff]
    %v335 = vld [vmem:[#allocation5 + $0x530] sm:$0xff]
    %v336 = vld [vmem:[#allocation5 + $0x538] sm:$0xff]
    %v337 = vld [vmem:[#allocation5 + $0x540] sm:$0xff]
    %v338 = vld [vmem:[#allocation5 + $0x548] sm:$0xff]
    %v339 = vld [vmem:[#allocation5 + $0x550] sm:$0xff]
    %v340 = vld [vmem:[#allocation5 + $0x558] sm:$0xff]
    %v341 = vld [vmem:[#allocation5 + $0x560] sm:$0xff]
    %v342 = vld [vmem:[#allocation5 + $0x568] sm:$0xff]
    %v343 = vld [vmem:[#allocation5 + $0x570] sm:$0xff]
    %v344 = vld [vmem:[#allocation5 + $0x578] sm:$0xff]
    %v345 = vld [vmem:[#allocation5 + $0x580] sm:$0xff]
    %v346 = vld [vmem:[#allocation5 + $0x588] sm:$0xff]
    %v347 = vld [vmem:[#allocation5 + $0x590] sm:$0xff]
    %v348 = vld [vmem:[#allocation5 + $0x598] sm:$0xff]
    %v349 = vld [vmem:[#allocation5 + $0x5a0] sm:$0xff]
    %v350 = vld [vmem:[#allocation5 + $0x5a8] sm:$0xff]
    %v351 = vld [vmem:[#allocation5 + $0x5b0] sm:$0xff]
    %v352 = vld [vmem:[#allocation5 + $0x5b8] sm:$0xff]
    %v353 = vld [vmem:[#allocation5 + $0x5c0] sm:$0xff]
    %v354 = vld [vmem:[#allocation5 + $0x5c8] sm:$0xff]
    %v355 = vld [vmem:[#allocation5 + $0x5d0] sm:$0xff]
    %v356 = vld [vmem:[#allocation5 + $0x5d8] sm:$0xff]
    %v357 = vld [vmem:[#allocation5 + $0x5e0] sm:$0xff]
    %v358 = vld [vmem:[#allocation5 + $0x5e8] sm:$0xff]
    %v359 = vld [vmem:[#allocation5 + $0x5f0] sm:$0xff]
    %v360 = vld [vmem:[#allocation5 + $0x5f8] sm:$0xff]
    %v361 = vld [vmem:[#allocation5 + $0x600] sm:$0xff]
    %v362 = vld [vmem:[#allocation5 + $0x608] sm:$0xff]
    %v363 = vld [vmem:[#allocation5 + $0x610] sm:$0xff]
    %v364 = vld [vmem:[#allocation5 + $0x618] sm:$0xff]
    %v365 = vld [vmem:[#allocation5 + $0x620] sm:$0xff]
    %v366 = vld [vmem:[#allocation5 + $0x628] sm:$0xff]
    %v367 = vld [vmem:[#allocation5 + $0x630] sm:$0xff]
    %v368 = vld [vmem:[#allocation5 + $0x638] sm:$0xff]
    %v369 = vld [vmem:[#allocation5 + $0x640] sm:$0xff]
    %v370 = vld [vmem:[#allocation5 + $0x648] sm:$0xff]
    %v371 = vld [vmem:[#allocation5 + $0x650] sm:$0xff]
    %v372 = vld [vmem:[#allocation5 + $0x658] sm:$0xff]
    %v373 = vld [vmem:[#allocation5 + $0x660] sm:$0xff]
    %v374 = vld [vmem:[#allocation5 + $0x668] sm:$0xff]
    %v375 = vld [vmem:[#allocation5 + $0x670] sm:$0xff]
    %v376 = vld [vmem:[#allocation5 + $0x678] sm:$0xff]
    %v377 = vld [vmem:[#allocation5 + $0x680] sm:$0xff]
    %v378 = vld [vmem:[#allocation5 + $0x688] sm:$0xff]
    %v379 = vld [vmem:[#allocation5 + $0x690] sm:$0xff]
    %v380 = vld [vmem:[#allocation5 + $0x698] sm:$0xff]
    %v381 = vld [vmem:[#allocation5 + $0x6a0] sm:$0xff]
    %v382 = vld [vmem:[#allocation5 + $0x6a8] sm:$0xff]
    %v383 = vld [vmem:[#allocation5 + $0x6b0] sm:$0xff]
    %v384 = vld [vmem:[#allocation5 + $0x6b8] sm:$0xff]
    %v385 = vld [vmem:[#allocation5 + $0x6c0] sm:$0xff]
    %v386 = vld [vmem:[#allocation5 + $0x6c8] sm:$0xff]
    %v387 = vld [vmem:[#allocation5 + $0x6d0] sm:$0xff]
    %v388 = vld [vmem:[#allocation5 + $0x6d8] sm:$0xff]
    %v389 = vld [vmem:[#allocation5 + $0x6e0] sm:$0xff]
    %v390 = vld [vmem:[#allocation5 + $0x6e8] sm:$0xff]
    %v391 = vld [vmem:[#allocation5 + $0x6f0] sm:$0xff]
    %v392 = vld [vmem:[#allocation5 + $0x6f8] sm:$0xff]
    %v393 = vld [vmem:[%s2] sm:$0xf]
    %v395 = vlaneseq
    %v396 = vshrl.u32 %v395, 7
    %v397 = vsub.s32 0, %v396
    %v398 = vrot.slane %v393, %v397
    %v399 = vlaneseq
    %v400 = vshrl.u32 %v399, 7
    %v401 = vsub.s32 1, %v400
    %v402 = vrot.slane %v393, %v401
    %v403 = vlaneseq
    %v404 = vshrl.u32 %v403, 7
    %v405 = vsub.s32 2, %v404
    %v406 = vrot.slane %v393, %v405
    %v407 = vlaneseq
    %v408 = vshrl.u32 %v407, 7
    %v409 = vsub.s32 3, %v408
    %v410 = vrot.slane %v393, %v409
    %v423 = vunpack.c.l.b16 %v161
    %v424 = vunpack.c.h.b16 %v161
    %v425 = vunpack.c.l.b16 %v162
    %v426 = vunpack.c.h.b16 %v162
    %v427 = vunpack.c.l.b16 %v163
    %v428 = vunpack.c.h.b16 %v163
    %v429 = vunpack.c.l.b16 %v164
    %v430 = vunpack.c.l.b16 %v165
    %v431 = vunpack.c.h.b16 %v165
    %v432 = vunpack.c.l.b16 %v166
    %v433 = vunpack.c.h.b16 %v166
    %v434 = vunpack.c.l.b16 %v167
    %v435 = vunpack.c.h.b16 %v167
    %v436 = vunpack.c.l.b16 %v168
    %v437 = vpack.c.b16 %v430, %v423
    %v438 = vpack.c.b16 %v431, %v424
    %v439 = vpack.c.b16 %v432, %v425
    %v440 = vpack.c.b16 %v433, %v426
    %v441 = vpack.c.b16 %v434, %v427
    %v442 = vpack.c.b16 %v435, %v428
    %v443 = vpack.c.b16 %v436, %v429
    %v675 = vunpack.c.l.b16 %v169
    %v676 = vunpack.c.h.b16 %v169
    %v677 = vunpack.c.l.b16 %v170
    %v678 = vunpack.c.h.b16 %v170
    %v679 = vunpack.c.l.b16 %v171
    %v680 = vunpack.c.h.b16 %v171
    %v681 = vunpack.c.l.b16 %v172
    %v682 = vunpack.c.h.b16 %v172
    %v683 = vunpack.c.l.b16 %v173
    %v684 = vunpack.c.h.b16 %v173
    %v685 = vunpack.c.l.b16 %v174
    %v686 = vunpack.c.h.b16 %v174
    %v687 = vunpack.c.l.b16 %v175
    %v688 = vunpack.c.h.b16 %v175
    %v689 = vunpack.c.l.b16 %v176
    %v690 = vunpack.c.h.b16 %v176
    %v691 = vunpack.c.l.b16 %v177
    %v692 = vunpack.c.h.b16 %v177
    %v693 = vunpack.c.l.b16 %v178
    %v694 = vunpack.c.h.b16 %v178
    %v695 = vunpack.c.l.b16 %v179
    %v696 = vunpack.c.h.b16 %v179
    %v697 = vunpack.c.l.b16 %v180
    %v698 = vunpack.c.h.b16 %v180
    %v699 = vunpack.c.l.b16 %v181
    %v700 = vunpack.c.h.b16 %v181
    %v701 = vunpack.c.l.b16 %v182
    %v702 = vunpack.c.h.b16 %v182
    %v703 = vunpack.c.l.b16 %v183
    %v704 = vunpack.c.h.b16 %v183
    %v705 = vunpack.c.l.b16 %v184
    %v706 = vunpack.c.h.b16 %v184
    %v707 = vunpack.c.l.b16 %v185
    %v708 = vunpack.c.h.b16 %v185
    %v709 = vunpack.c.l.b16 %v186
    %v710 = vunpack.c.h.b16 %v186
    %v711 = vunpack.c.l.b16 %v187
    %v712 = vunpack.c.h.b16 %v187
    %v713 = vunpack.c.l.b16 %v188
    %v714 = vunpack.c.h.b16 %v188
    %v715 = vunpack.c.l.b16 %v189
    %v716 = vunpack.c.h.b16 %v189
    %v717 = vunpack.c.l.b16 %v190
    %v718 = vunpack.c.h.b16 %v190
    %v719 = vunpack.c.l.b16 %v191
    %v720 = vunpack.c.h.b16 %v191
    %v721 = vunpack.c.l.b16 %v192
    %v722 = vunpack.c.h.b16 %v192
    %v723 = vunpack.c.l.b16 %v193
    %v724 = vunpack.c.h.b16 %v193
    %v725 = vunpack.c.l.b16 %v194
    %v726 = vunpack.c.h.b16 %v194
    %v727 = vunpack.c.l.b16 %v195
    %v728 = vunpack.c.h.b16 %v195
    %v729 = vunpack.c.l.b16 %v196
    %v730 = vunpack.c.h.b16 %v196
    %v731 = vunpack.c.l.b16 %v197
    %v732 = vunpack.c.h.b16 %v197
    %v733 = vunpack.c.l.b16 %v198
    %v734 = vunpack.c.h.b16 %v198
    %v735 = vunpack.c.l.b16 %v199
    %v736 = vunpack.c.h.b16 %v199
    %v737 = vunpack.c.l.b16 %v200
    %v738 = vunpack.c.h.b16 %v200
    %v739 = vunpack.c.l.b16 %v201
    %v740 = vunpack.c.h.b16 %v201
    %v741 = vunpack.c.l.b16 %v202
    %v742 = vunpack.c.h.b16 %v202
    %v743 = vunpack.c.l.b16 %v203
    %v744 = vunpack.c.h.b16 %v203
    %v745 = vunpack.c.l.b16 %v204
    %v746 = vunpack.c.h.b16 %v204
    %v747 = vunpack.c.l.b16 %v205
    %v748 = vunpack.c.h.b16 %v205
    %v749 = vunpack.c.l.b16 %v206
    %v750 = vunpack.c.h.b16 %v206
    %v751 = vunpack.c.l.b16 %v207
    %v752 = vunpack.c.h.b16 %v207
    %v753 = vunpack.c.l.b16 %v208
    %v754 = vunpack.c.h.b16 %v208
    %v755 = vunpack.c.l.b16 %v209
    %v756 = vunpack.c.h.b16 %v209
    %v757 = vunpack.c.l.b16 %v210
    %v758 = vunpack.c.h.b16 %v210
    %v759 = vunpack.c.l.b16 %v211
    %v760 = vunpack.c.h.b16 %v211
    %v761 = vunpack.c.l.b16 %v212
    %v762 = vunpack.c.h.b16 %v212
    %v763 = vunpack.c.l.b16 %v213
    %v764 = vunpack.c.h.b16 %v213
    %v765 = vunpack.c.l.b16 %v214
    %v766 = vunpack.c.h.b16 %v214
    %v767 = vunpack.c.l.b16 %v215
    %v768 = vunpack.c.h.b16 %v215
    %v769 = vunpack.c.l.b16 %v216
    %v770 = vunpack.c.h.b16 %v216
    %v771 = vunpack.c.l.b16 %v217
    %v772 = vunpack.c.h.b16 %v217
    %v773 = vunpack.c.l.b16 %v218
    %v774 = vunpack.c.h.b16 %v218
    %v775 = vunpack.c.l.b16 %v219
    %v776 = vunpack.c.h.b16 %v219
    %v777 = vunpack.c.l.b16 %v220
    %v778 = vunpack.c.h.b16 %v220
    %v779 = vunpack.c.l.b16 %v221
    %v780 = vunpack.c.h.b16 %v221
    %v781 = vunpack.c.l.b16 %v222
    %v782 = vunpack.c.h.b16 %v222
    %v783 = vunpack.c.l.b16 %v223
    %v784 = vunpack.c.h.b16 %v223
    %v785 = vunpack.c.l.b16 %v224
    %v786 = vunpack.c.h.b16 %v224
    %v787 = vunpack.c.l.b16 %v225
    %v788 = vunpack.c.h.b16 %v225
    %v789 = vunpack.c.l.b16 %v226
    %v790 = vunpack.c.h.b16 %v226
    %v791 = vunpack.c.l.b16 %v227
    %v792 = vunpack.c.h.b16 %v227
    %v793 = vunpack.c.l.b16 %v228
    %v794 = vunpack.c.h.b16 %v228
    %v795 = vunpack.c.l.b16 %v229
    %v796 = vunpack.c.h.b16 %v229
    %v797 = vunpack.c.l.b16 %v230
    %v798 = vunpack.c.h.b16 %v230
    %v799 = vunpack.c.l.b16 %v231
    %v800 = vunpack.c.h.b16 %v231
    %v801 = vunpack.c.l.b16 %v232
    %v802 = vunpack.c.h.b16 %v232
    %v803 = vunpack.c.l.b16 %v233
    %v804 = vunpack.c.h.b16 %v233
    %v805 = vunpack.c.l.b16 %v234
    %v806 = vunpack.c.h.b16 %v234
    %v807 = vunpack.c.l.b16 %v235
    %v808 = vunpack.c.h.b16 %v235
    %v809 = vunpack.c.l.b16 %v236
    %v810 = vunpack.c.h.b16 %v236
    %v811 = vunpack.c.l.b16 %v237
    %v812 = vunpack.c.h.b16 %v237
    %v813 = vunpack.c.l.b16 %v238
    %v814 = vunpack.c.h.b16 %v238
    %v815 = vunpack.c.l.b16 %v239
    %v816 = vunpack.c.h.b16 %v239
    %v817 = vunpack.c.l.b16 %v240
    %v818 = vunpack.c.h.b16 %v240
    %v819 = vunpack.c.l.b16 %v241
    %v820 = vunpack.c.h.b16 %v241
    %v821 = vunpack.c.l.b16 %v242
    %v822 = vunpack.c.h.b16 %v242
    %v823 = vunpack.c.l.b16 %v243
    %v824 = vunpack.c.h.b16 %v243
    %v825 = vunpack.c.l.b16 %v244
    %v826 = vunpack.c.h.b16 %v244
    %v827 = vunpack.c.l.b16 %v245
    %v828 = vunpack.c.h.b16 %v245
    %v829 = vunpack.c.l.b16 %v246
    %v830 = vunpack.c.h.b16 %v246
    %v831 = vunpack.c.l.b16 %v247
    %v832 = vunpack.c.h.b16 %v247
    %v833 = vunpack.c.l.b16 %v248
    %v834 = vunpack.c.h.b16 %v248
    %v835 = vunpack.c.l.b16 %v249
    %v836 = vunpack.c.h.b16 %v249
    %v837 = vunpack.c.l.b16 %v250
    %v838 = vunpack.c.h.b16 %v250
    %v839 = vunpack.c.l.b16 %v251
    %v840 = vunpack.c.h.b16 %v251
    %v841 = vunpack.c.l.b16 %v252
    %v842 = vunpack.c.h.b16 %v252
    %v843 = vunpack.c.l.b16 %v253
    %v844 = vunpack.c.h.b16 %v253
    %v845 = vunpack.c.l.b16 %v254
    %v846 = vunpack.c.h.b16 %v254
    %v847 = vunpack.c.l.b16 %v255
    %v848 = vunpack.c.h.b16 %v255
    %v849 = vunpack.c.l.b16 %v256
    %v850 = vunpack.c.h.b16 %v256
    %v851 = vunpack.c.l.b16 %v257
    %v852 = vunpack.c.h.b16 %v257
    %v853 = vunpack.c.l.b16 %v258
    %v854 = vunpack.c.h.b16 %v258
    %v855 = vunpack.c.l.b16 %v259
    %v856 = vunpack.c.h.b16 %v259
    %v857 = vunpack.c.l.b16 %v260
    %v858 = vunpack.c.h.b16 %v260
    %v859 = vunpack.c.l.b16 %v261
    %v860 = vunpack.c.h.b16 %v261
    %v861 = vunpack.c.l.b16 %v262
    %v862 = vunpack.c.h.b16 %v262
    %v863 = vunpack.c.l.b16 %v263
    %v864 = vunpack.c.h.b16 %v263
    %v865 = vunpack.c.l.b16 %v264
    %v866 = vunpack.c.h.b16 %v264
    %v867 = vunpack.c.l.b16 %v265
    %v868 = vunpack.c.h.b16 %v265
    %v869 = vunpack.c.l.b16 %v266
    %v870 = vunpack.c.h.b16 %v266
    %v871 = vunpack.c.l.b16 %v267
    %v872 = vunpack.c.h.b16 %v267
    %v873 = vunpack.c.l.b16 %v268
    %v874 = vunpack.c.h.b16 %v268
    %v875 = vunpack.c.l.b16 %v269
    %v876 = vunpack.c.h.b16 %v269
    %v877 = vunpack.c.l.b16 %v270
    %v878 = vunpack.c.h.b16 %v270
    %v879 = vunpack.c.l.b16 %v271
    %v880 = vunpack.c.h.b16 %v271
    %v881 = vunpack.c.l.b16 %v272
    %v882 = vunpack.c.h.b16 %v272
    %v883 = vunpack.c.l.b16 %v273
    %v884 = vunpack.c.h.b16 %v273
    %v885 = vunpack.c.l.b16 %v274
    %v886 = vunpack.c.h.b16 %v274
    %v887 = vunpack.c.l.b16 %v275
    %v888 = vunpack.c.h.b16 %v275
    %v889 = vunpack.c.l.b16 %v276
    %v890 = vunpack.c.h.b16 %v276
    %v891 = vunpack.c.l.b16 %v277
    %v892 = vunpack.c.h.b16 %v277
    %v893 = vunpack.c.l.b16 %v278
    %v894 = vunpack.c.h.b16 %v278
    %v895 = vunpack.c.l.b16 %v279
    %v896 = vunpack.c.h.b16 %v279
    %v897 = vunpack.c.l.b16 %v280
    %v898 = vunpack.c.h.b16 %v280
    %v899 = vunpack.c.l.b16 %v281
    %v900 = vunpack.c.h.b16 %v281
    %v901 = vunpack.c.l.b16 %v282
    %v902 = vunpack.c.h.b16 %v282
    %v903 = vunpack.c.l.b16 %v283
    %v904 = vunpack.c.h.b16 %v283
    %v905 = vunpack.c.l.b16 %v284
    %v906 = vunpack.c.h.b16 %v284
    %v907 = vunpack.c.l.b16 %v285
    %v908 = vunpack.c.h.b16 %v285
    %v909 = vunpack.c.l.b16 %v286
    %v910 = vunpack.c.h.b16 %v286
    %v911 = vunpack.c.l.b16 %v287
    %v912 = vunpack.c.h.b16 %v287
    %v913 = vunpack.c.l.b16 %v288
    %v914 = vunpack.c.h.b16 %v288
    %v915 = vunpack.c.l.b16 %v289
    %v916 = vunpack.c.h.b16 %v289
    %v917 = vunpack.c.l.b16 %v290
    %v918 = vunpack.c.h.b16 %v290
    %v919 = vunpack.c.l.b16 %v291
    %v920 = vunpack.c.h.b16 %v291
    %v921 = vunpack.c.l.b16 %v292
    %v922 = vunpack.c.h.b16 %v292
    %v923 = vunpack.c.l.b16 %v293
    %v924 = vunpack.c.h.b16 %v293
    %v925 = vunpack.c.l.b16 %v294
    %v926 = vunpack.c.h.b16 %v294
    %v927 = vunpack.c.l.b16 %v295
    %v928 = vunpack.c.h.b16 %v295
    %v929 = vunpack.c.l.b16 %v296
    %v930 = vunpack.c.h.b16 %v296
    %v931 = vunpack.c.l.b16 %v297
    %v932 = vunpack.c.h.b16 %v297
    %v933 = vunpack.c.l.b16 %v298
    %v934 = vunpack.c.h.b16 %v298
    %v935 = vunpack.c.l.b16 %v299
    %v936 = vunpack.c.h.b16 %v299
    %v937 = vunpack.c.l.b16 %v300
    %v938 = vunpack.c.h.b16 %v300
    %v939 = vunpack.c.l.b16 %v301
    %v940 = vunpack.c.h.b16 %v301
    %v941 = vunpack.c.l.b16 %v302
    %v942 = vunpack.c.h.b16 %v302
    %v943 = vunpack.c.l.b16 %v303
    %v944 = vunpack.c.h.b16 %v303
    %v945 = vunpack.c.l.b16 %v304
    %v946 = vunpack.c.h.b16 %v304
    %v947 = vunpack.c.l.b16 %v305
    %v948 = vunpack.c.h.b16 %v305
    %v949 = vunpack.c.l.b16 %v306
    %v950 = vunpack.c.h.b16 %v306
    %v951 = vunpack.c.l.b16 %v307
    %v952 = vunpack.c.h.b16 %v307
    %v953 = vunpack.c.l.b16 %v308
    %v954 = vunpack.c.h.b16 %v308
    %v955 = vunpack.c.l.b16 %v309
    %v956 = vunpack.c.h.b16 %v309
    %v957 = vunpack.c.l.b16 %v310
    %v958 = vunpack.c.h.b16 %v310
    %v959 = vunpack.c.l.b16 %v311
    %v960 = vunpack.c.h.b16 %v311
    %v961 = vunpack.c.l.b16 %v312
    %v962 = vunpack.c.h.b16 %v312
    %v963 = vunpack.c.l.b16 %v313
    %v964 = vunpack.c.h.b16 %v313
    %v965 = vunpack.c.l.b16 %v314
    %v966 = vunpack.c.h.b16 %v314
    %v967 = vunpack.c.l.b16 %v315
    %v968 = vunpack.c.h.b16 %v315
    %v969 = vunpack.c.l.b16 %v316
    %v970 = vunpack.c.h.b16 %v316
    %v971 = vunpack.c.l.b16 %v317
    %v972 = vunpack.c.h.b16 %v317
    %v973 = vunpack.c.l.b16 %v318
    %v974 = vunpack.c.h.b16 %v318
    %v975 = vunpack.c.l.b16 %v319
    %v976 = vunpack.c.h.b16 %v319
    %v977 = vunpack.c.l.b16 %v320
    %v978 = vunpack.c.h.b16 %v320
    %v979 = vunpack.c.l.b16 %v321
    %v980 = vunpack.c.h.b16 %v321
    %v981 = vunpack.c.l.b16 %v322
    %v982 = vunpack.c.h.b16 %v322
    %v983 = vunpack.c.l.b16 %v323
    %v984 = vunpack.c.h.b16 %v323
    %v985 = vunpack.c.l.b16 %v324
    %v986 = vunpack.c.h.b16 %v324
    %v987 = vunpack.c.l.b16 %v325
    %v988 = vunpack.c.h.b16 %v325
    %v989 = vunpack.c.l.b16 %v326
    %v990 = vunpack.c.h.b16 %v326
    %v991 = vunpack.c.l.b16 %v327
    %v992 = vunpack.c.h.b16 %v327
    %v993 = vunpack.c.l.b16 %v328
    %v994 = vunpack.c.h.b16 %v328
    %v995 = vunpack.c.l.b16 %v329
    %v996 = vunpack.c.h.b16 %v329
    %v997 = vunpack.c.l.b16 %v330
    %v998 = vunpack.c.h.b16 %v330
    %v999 = vunpack.c.l.b16 %v331
    %v1000 = vunpack.c.h.b16 %v331
    %v1001 = vunpack.c.l.b16 %v332
    %v1002 = vunpack.c.h.b16 %v332
    %v1003 = vunpack.c.l.b16 %v333
    %v1004 = vunpack.c.h.b16 %v333
    %v1005 = vunpack.c.l.b16 %v334
    %v1006 = vunpack.c.h.b16 %v334
    %v1007 = vunpack.c.l.b16 %v335
    %v1008 = vunpack.c.h.b16 %v335
    %v1009 = vunpack.c.l.b16 %v336
    %v1010 = vunpack.c.h.b16 %v336
    %v1011 = vunpack.c.l.b16 %v337
    %v1012 = vunpack.c.h.b16 %v337
    %v1013 = vunpack.c.l.b16 %v338
    %v1014 = vunpack.c.h.b16 %v338
    %v1015 = vunpack.c.l.b16 %v339
    %v1016 = vunpack.c.h.b16 %v339
    %v1017 = vunpack.c.l.b16 %v340
    %v1018 = vunpack.c.h.b16 %v340
    %v1019 = vunpack.c.l.b16 %v341
    %v1020 = vunpack.c.h.b16 %v341
    %v1021 = vunpack.c.l.b16 %v342
    %v1022 = vunpack.c.h.b16 %v342
    %v1023 = vunpack.c.l.b16 %v343
    %v1024 = vunpack.c.h.b16 %v343
    %v1025 = vunpack.c.l.b16 %v344
    %v1026 = vunpack.c.h.b16 %v344
    %v1027 = vunpack.c.l.b16 %v345
    %v1028 = vunpack.c.h.b16 %v345
    %v1029 = vunpack.c.l.b16 %v346
    %v1030 = vunpack.c.h.b16 %v346
    %v1031 = vunpack.c.l.b16 %v347
    %v1032 = vunpack.c.h.b16 %v347
    %v1033 = vunpack.c.l.b16 %v348
    %v1034 = vunpack.c.h.b16 %v348
    %v1035 = vunpack.c.l.b16 %v349
    %v1036 = vunpack.c.h.b16 %v349
    %v1037 = vunpack.c.l.b16 %v350
    %v1038 = vunpack.c.h.b16 %v350
    %v1039 = vunpack.c.l.b16 %v351
    %v1040 = vunpack.c.h.b16 %v351
    %v1041 = vunpack.c.l.b16 %v352
    %v1042 = vunpack.c.h.b16 %v352
    %v1043 = vunpack.c.l.b16 %v353
    %v1044 = vunpack.c.h.b16 %v353
    %v1045 = vunpack.c.l.b16 %v354
    %v1046 = vunpack.c.h.b16 %v354
    %v1047 = vunpack.c.l.b16 %v355
    %v1048 = vunpack.c.h.b16 %v355
    %v1049 = vunpack.c.l.b16 %v356
    %v1050 = vunpack.c.h.b16 %v356
    %v1051 = vunpack.c.l.b16 %v357
    %v1052 = vunpack.c.h.b16 %v357
    %v1053 = vunpack.c.l.b16 %v358
    %v1054 = vunpack.c.h.b16 %v358
    %v1055 = vunpack.c.l.b16 %v359
    %v1056 = vunpack.c.h.b16 %v359
    %v1057 = vunpack.c.l.b16 %v360
    %v1058 = vunpack.c.h.b16 %v360
    %v1059 = vunpack.c.l.b16 %v361
    %v1060 = vunpack.c.h.b16 %v361
    %v1061 = vunpack.c.l.b16 %v362
    %v1062 = vunpack.c.h.b16 %v362
    %v1063 = vunpack.c.l.b16 %v363
    %v1064 = vunpack.c.h.b16 %v363
    %v1065 = vunpack.c.l.b16 %v364
    %v1066 = vunpack.c.h.b16 %v364
    %v1067 = vunpack.c.l.b16 %v365
    %v1068 = vunpack.c.h.b16 %v365
    %v1069 = vunpack.c.l.b16 %v366
    %v1070 = vunpack.c.h.b16 %v366
    %v1071 = vunpack.c.l.b16 %v367
    %v1072 = vunpack.c.h.b16 %v367
    %v1073 = vunpack.c.l.b16 %v368
    %v1074 = vunpack.c.h.b16 %v368
    %v1075 = vunpack.c.l.b16 %v369
    %v1076 = vunpack.c.h.b16 %v369
    %v1077 = vunpack.c.l.b16 %v370
    %v1078 = vunpack.c.h.b16 %v370
    %v1079 = vunpack.c.l.b16 %v371
    %v1080 = vunpack.c.h.b16 %v371
    %v1081 = vunpack.c.l.b16 %v372
    %v1082 = vunpack.c.h.b16 %v372
    %v1083 = vunpack.c.l.b16 %v373
    %v1084 = vunpack.c.h.b16 %v373
    %v1085 = vunpack.c.l.b16 %v374
    %v1086 = vunpack.c.h.b16 %v374
    %v1087 = vunpack.c.l.b16 %v375
    %v1088 = vunpack.c.h.b16 %v375
    %v1089 = vunpack.c.l.b16 %v376
    %v1090 = vunpack.c.h.b16 %v376
    %v1091 = vunpack.c.l.b16 %v377
    %v1092 = vunpack.c.h.b16 %v377
    %v1093 = vunpack.c.l.b16 %v378
    %v1094 = vunpack.c.h.b16 %v378
    %v1095 = vunpack.c.l.b16 %v379
    %v1096 = vunpack.c.h.b16 %v379
    %v1097 = vunpack.c.l.b16 %v380
    %v1098 = vunpack.c.h.b16 %v380
    %v1099 = vunpack.c.l.b16 %v381
    %v1100 = vunpack.c.h.b16 %v381
    %v1101 = vunpack.c.l.b16 %v382
    %v1102 = vunpack.c.h.b16 %v382
    %v1103 = vunpack.c.l.b16 %v383
    %v1104 = vunpack.c.h.b16 %v383
    %v1105 = vunpack.c.l.b16 %v384
    %v1106 = vunpack.c.h.b16 %v384
    %v1107 = vunpack.c.l.b16 %v385
    %v1108 = vunpack.c.h.b16 %v385
    %v1109 = vunpack.c.l.b16 %v386
    %v1110 = vunpack.c.h.b16 %v386
    %v1111 = vunpack.c.l.b16 %v387
    %v1112 = vunpack.c.h.b16 %v387
    %v1113 = vunpack.c.l.b16 %v388
    %v1114 = vunpack.c.h.b16 %v388
    %v1115 = vunpack.c.l.b16 %v389
    %v1116 = vunpack.c.h.b16 %v389
    %v1117 = vunpack.c.l.b16 %v390
    %v1118 = vunpack.c.h.b16 %v390
    %v1119 = vunpack.c.l.b16 %v391
    %v1120 = vunpack.c.h.b16 %v391
    %v1121 = vunpack.c.l.b16 %v392
    %v1122 = vunpack.c.h.b16 %v392
    %v1123 = vpack.c.b16 %v679, %v675
    %v1124 = vpack.c.b16 %v680, %v676
    %v1125 = vpack.c.b16 %v681, %v677
    %v1126 = vpack.c.b16 %v682, %v678
    %v1127 = vpack.c.b16 %v687, %v683
    %v1128 = vpack.c.b16 %v688, %v684
    %v1129 = vpack.c.b16 %v689, %v685
    %v1130 = vpack.c.b16 %v690, %v686
    %v1131 = vpack.c.b16 %v695, %v691
    %v1132 = vpack.c.b16 %v696, %v692
    %v1133 = vpack.c.b16 %v697, %v693
    %v1134 = vpack.c.b16 %v698, %v694
    %v1135 = vpack.c.b16 %v703, %v699
    %v1136 = vpack.c.b16 %v704, %v700
    %v1137 = vpack.c.b16 %v705, %v701
    %v1138 = vpack.c.b16 %v706, %v702
    %v1139 = vpack.c.b16 %v711, %v707
    %v1140 = vpack.c.b16 %v712, %v708
    %v1141 = vpack.c.b16 %v713, %v709
    %v1142 = vpack.c.b16 %v714, %v710
    %v1143 = vpack.c.b16 %v719, %v715
    %v1144 = vpack.c.b16 %v720, %v716
    %v1145 = vpack.c.b16 %v721, %v717
    %v1146 = vpack.c.b16 %v722, %v718
    %v1147 = vpack.c.b16 %v727, %v723
    %v1148 = vpack.c.b16 %v728, %v724
    %v1149 = vpack.c.b16 %v729, %v725
    %v1150 = vpack.c.b16 %v730, %v726
    %v1151 = vpack.c.b16 %v735, %v731
    %v1152 = vpack.c.b16 %v736, %v732
    %v1153 = vpack.c.b16 %v737, %v733
    %v1154 = vpack.c.b16 %v738, %v734
    %v1155 = vpack.c.b16 %v743, %v739
    %v1156 = vpack.c.b16 %v744, %v740
    %v1157 = vpack.c.b16 %v745, %v741
    %v1158 = vpack.c.b16 %v746, %v742
    %v1159 = vpack.c.b16 %v751, %v747
    %v1160 = vpack.c.b16 %v752, %v748
    %v1161 = vpack.c.b16 %v753, %v749
    %v1162 = vpack.c.b16 %v754, %v750
    %v1163 = vpack.c.b16 %v759, %v755
    %v1164 = vpack.c.b16 %v760, %v756
    %v1165 = vpack.c.b16 %v761, %v757
    %v1166 = vpack.c.b16 %v762, %v758
    %v1167 = vpack.c.b16 %v767, %v763
    %v1168 = vpack.c.b16 %v768, %v764
    %v1169 = vpack.c.b16 %v769, %v765
    %v1170 = vpack.c.b16 %v770, %v766
    %v1171 = vpack.c.b16 %v775, %v771
    %v1172 = vpack.c.b16 %v776, %v772
    %v1173 = vpack.c.b16 %v777, %v773
    %v1174 = vpack.c.b16 %v778, %v774
    %v1175 = vpack.c.b16 %v783, %v779
    %v1176 = vpack.c.b16 %v784, %v780
    %v1177 = vpack.c.b16 %v785, %v781
    %v1178 = vpack.c.b16 %v786, %v782
    %v1179 = vpack.c.b16 %v791, %v787
    %v1180 = vpack.c.b16 %v792, %v788
    %v1181 = vpack.c.b16 %v793, %v789
    %v1182 = vpack.c.b16 %v794, %v790
    %v1183 = vpack.c.b16 %v799, %v795
    %v1184 = vpack.c.b16 %v800, %v796
    %v1185 = vpack.c.b16 %v801, %v797
    %v1186 = vpack.c.b16 %v802, %v798
    %v1187 = vpack.c.b16 %v807, %v803
    %v1188 = vpack.c.b16 %v808, %v804
    %v1189 = vpack.c.b16 %v809, %v805
    %v1190 = vpack.c.b16 %v810, %v806
    %v1191 = vpack.c.b16 %v815, %v811
    %v1192 = vpack.c.b16 %v816, %v812
    %v1193 = vpack.c.b16 %v817, %v813
    %v1194 = vpack.c.b16 %v818, %v814
    %v1195 = vpack.c.b16 %v823, %v819
    %v1196 = vpack.c.b16 %v824, %v820
    %v1197 = vpack.c.b16 %v825, %v821
    %v1198 = vpack.c.b16 %v826, %v822
    %v1199 = vpack.c.b16 %v831, %v827
    %v1200 = vpack.c.b16 %v832, %v828
    %v1201 = vpack.c.b16 %v833, %v829
    %v1202 = vpack.c.b16 %v834, %v830
    %v1203 = vpack.c.b16 %v839, %v835
    %v1204 = vpack.c.b16 %v840, %v836
    %v1205 = vpack.c.b16 %v841, %v837
    %v1206 = vpack.c.b16 %v842, %v838
    %v1207 = vpack.c.b16 %v847, %v843
    %v1208 = vpack.c.b16 %v848, %v844
    %v1209 = vpack.c.b16 %v849, %v845
    %v1210 = vpack.c.b16 %v850, %v846
    %v1211 = vpack.c.b16 %v855, %v851
    %v1212 = vpack.c.b16 %v856, %v852
    %v1213 = vpack.c.b16 %v857, %v853
    %v1214 = vpack.c.b16 %v858, %v854
    %v1215 = vpack.c.b16 %v863, %v859
    %v1216 = vpack.c.b16 %v864, %v860
    %v1217 = vpack.c.b16 %v865, %v861
    %v1218 = vpack.c.b16 %v866, %v862
    %v1219 = vpack.c.b16 %v871, %v867
    %v1220 = vpack.c.b16 %v872, %v868
    %v1221 = vpack.c.b16 %v873, %v869
    %v1222 = vpack.c.b16 %v874, %v870
    %v1223 = vpack.c.b16 %v879, %v875
    %v1224 = vpack.c.b16 %v880, %v876
    %v1225 = vpack.c.b16 %v881, %v877
    %v1226 = vpack.c.b16 %v882, %v878
    %v1227 = vpack.c.b16 %v887, %v883
    %v1228 = vpack.c.b16 %v888, %v884
    %v1229 = vpack.c.b16 %v889, %v885
    %v1230 = vpack.c.b16 %v890, %v886
    %v1231 = vpack.c.b16 %v895, %v891
    %v1232 = vpack.c.b16 %v896, %v892
    %v1233 = vpack.c.b16 %v897, %v893
    %v1234 = vpack.c.b16 %v898, %v894
    %v1235 = vpack.c.b16 %v903, %v899
    %v1236 = vpack.c.b16 %v904, %v900
    %v1237 = vpack.c.b16 %v905, %v901
    %v1238 = vpack.c.b16 %v906, %v902
    %v1239 = vpack.c.b16 %v911, %v907
    %v1240 = vpack.c.b16 %v912, %v908
    %v1241 = vpack.c.b16 %v913, %v909
    %v1242 = vpack.c.b16 %v914, %v910
    %v1243 = vpack.c.b16 %v919, %v915
    %v1244 = vpack.c.b16 %v920, %v916
    %v1245 = vpack.c.b16 %v921, %v917
    %v1246 = vpack.c.b16 %v922, %v918
    %v1247 = vpack.c.b16 %v927, %v923
    %v1248 = vpack.c.b16 %v928, %v924
    %v1249 = vpack.c.b16 %v929, %v925
    %v1250 = vpack.c.b16 %v930, %v926
    %v1251 = vpack.c.b16 %v935, %v931
    %v1252 = vpack.c.b16 %v936, %v932
    %v1253 = vpack.c.b16 %v937, %v933
    %v1254 = vpack.c.b16 %v938, %v934
    %v1255 = vpack.c.b16 %v943, %v939
    %v1256 = vpack.c.b16 %v944, %v940
    %v1257 = vpack.c.b16 %v945, %v941
    %v1258 = vpack.c.b16 %v946, %v942
    %v1259 = vpack.c.b16 %v951, %v947
    %v1260 = vpack.c.b16 %v952, %v948
    %v1261 = vpack.c.b16 %v953, %v949
    %v1262 = vpack.c.b16 %v954, %v950
    %v1263 = vpack.c.b16 %v959, %v955
    %v1264 = vpack.c.b16 %v960, %v956
    %v1265 = vpack.c.b16 %v961, %v957
    %v1266 = vpack.c.b16 %v962, %v958
    %v1267 = vpack.c.b16 %v967, %v963
    %v1268 = vpack.c.b16 %v968, %v964
    %v1269 = vpack.c.b16 %v969, %v965
    %v1270 = vpack.c.b16 %v970, %v966
    %v1271 = vpack.c.b16 %v975, %v971
    %v1272 = vpack.c.b16 %v976, %v972
    %v1273 = vpack.c.b16 %v977, %v973
    %v1274 = vpack.c.b16 %v978, %v974
    %v1275 = vpack.c.b16 %v983, %v979
    %v1276 = vpack.c.b16 %v984, %v980
    %v1277 = vpack.c.b16 %v985, %v981
    %v1278 = vpack.c.b16 %v986, %v982
    %v1279 = vpack.c.b16 %v991, %v987
    %v1280 = vpack.c.b16 %v992, %v988
    %v1281 = vpack.c.b16 %v993, %v989
    %v1282 = vpack.c.b16 %v994, %v990
    %v1283 = vpack.c.b16 %v999, %v995
    %v1284 = vpack.c.b16 %v1000, %v996
    %v1285 = vpack.c.b16 %v1001, %v997
    %v1286 = vpack.c.b16 %v1002, %v998
    %v1287 = vpack.c.b16 %v1007, %v1003
    %v1288 = vpack.c.b16 %v1008, %v1004
    %v1289 = vpack.c.b16 %v1009, %v1005
    %v1290 = vpack.c.b16 %v1010, %v1006
    %v1291 = vpack.c.b16 %v1015, %v1011
    %v1292 = vpack.c.b16 %v1016, %v1012
    %v1293 = vpack.c.b16 %v1017, %v1013
    %v1294 = vpack.c.b16 %v1018, %v1014
    %v1295 = vpack.c.b16 %v1023, %v1019
    %v1296 = vpack.c.b16 %v1024, %v1020
    %v1297 = vpack.c.b16 %v1025, %v1021
    %v1298 = vpack.c.b16 %v1026, %v1022
    %v1299 = vpack.c.b16 %v1031, %v1027
    %v1300 = vpack.c.b16 %v1032, %v1028
    %v1301 = vpack.c.b16 %v1033, %v1029
    %v1302 = vpack.c.b16 %v1034, %v1030
    %v1303 = vpack.c.b16 %v1039, %v1035
    %v1304 = vpack.c.b16 %v1040, %v1036
    %v1305 = vpack.c.b16 %v1041, %v1037
    %v1306 = vpack.c.b16 %v1042, %v1038
    %v1307 = vpack.c.b16 %v1047, %v1043
    %v1308 = vpack.c.b16 %v1048, %v1044
    %v1309 = vpack.c.b16 %v1049, %v1045
    %v1310 = vpack.c.b16 %v1050, %v1046
    %v1311 = vpack.c.b16 %v1055, %v1051
    %v1312 = vpack.c.b16 %v1056, %v1052
    %v1313 = vpack.c.b16 %v1057, %v1053
    %v1314 = vpack.c.b16 %v1058, %v1054
    %v1315 = vpack.c.b16 %v1063, %v1059
    %v1316 = vpack.c.b16 %v1064, %v1060
    %v1317 = vpack.c.b16 %v1065, %v1061
    %v1318 = vpack.c.b16 %v1066, %v1062
    %v1319 = vpack.c.b16 %v1071, %v1067
    %v1320 = vpack.c.b16 %v1072, %v1068
    %v1321 = vpack.c.b16 %v1073, %v1069
    %v1322 = vpack.c.b16 %v1074, %v1070
    %v1323 = vpack.c.b16 %v1079, %v1075
    %v1324 = vpack.c.b16 %v1080, %v1076
    %v1325 = vpack.c.b16 %v1081, %v1077
    %v1326 = vpack.c.b16 %v1082, %v1078
    %v1327 = vpack.c.b16 %v1087, %v1083
    %v1328 = vpack.c.b16 %v1088, %v1084
    %v1329 = vpack.c.b16 %v1089, %v1085
    %v1330 = vpack.c.b16 %v1090, %v1086
    %v1331 = vpack.c.b16 %v1095, %v1091
    %v1332 = vpack.c.b16 %v1096, %v1092
    %v1333 = vpack.c.b16 %v1097, %v1093
    %v1334 = vpack.c.b16 %v1098, %v1094
    %v1335 = vpack.c.b16 %v1103, %v1099
    %v1336 = vpack.c.b16 %v1104, %v1100
    %v1337 = vpack.c.b16 %v1105, %v1101
    %v1338 = vpack.c.b16 %v1106, %v1102
    %v1339 = vpack.c.b16 %v1111, %v1107
    %v1340 = vpack.c.b16 %v1112, %v1108
    %v1341 = vpack.c.b16 %v1113, %v1109
    %v1342 = vpack.c.b16 %v1114, %v1110
    %v1343 = vpack.c.b16 %v1119, %v1115
    %v1344 = vpack.c.b16 %v1120, %v1116
    %v1345 = vpack.c.b16 %v1121, %v1117
    %v1346 = vpack.c.b16 %v1122, %v1118
    %1571 = vmatprep.subr.bf16.mxu0 %v1124
    %1572 = vmatpush1.bf16.msra.mxu0 %v1123
    %1573 = vmatprep.subr.bf16.mxu0 %v1128
    %1574 = vmatpush1.bf16.msra.mxu0 %v1127
    %1575 = vmatprep.subr.bf16.mxu0 %v1132
    %1576 = vmatpush1.bf16.msra.mxu0 %v1131
    %1577 = vmatprep.subr.bf16.mxu0 %v1136
    %1578 = vmatpush1.bf16.msra.mxu0 %v1135
    %1579 = vmatprep.subr.bf16.mxu0 %v1140
    %1580 = vmatpush1.bf16.msra.mxu0 %v1139
    %1581 = vmatprep.subr.bf16.mxu0 %v1144
    %1582 = vmatpush1.bf16.msra.mxu0 %v1143
    %1583 = vmatprep.subr.bf16.mxu0 %v1148
    %1584 = vmatpush1.bf16.msra.mxu0 %v1147
    %1585 = vmatprep.subr.bf16.mxu0 %v1152
    %1586 = vmatpush1.bf16.msra.mxu0 %v1151
    %1587 = vmatprep.subr.bf16.mxu0 %v1156
    %1588 = vmatpush1.bf16.msra.mxu0 %v1155
    %1589 = vmatprep.subr.bf16.mxu0 %v1160
    %1590 = vmatpush1.bf16.msra.mxu0 %v1159
    %1591 = vmatprep.subr.bf16.mxu0 %v1164
    %1592 = vmatpush1.bf16.msra.mxu0 %v1163
    %1593 = vmatprep.subr.bf16.mxu0 %v1168
    %1594 = vmatpush1.bf16.msra.mxu0 %v1167
    %1595 = vmatprep.subr.bf16.mxu0 %v1172
    %1596 = vmatpush1.bf16.msra.mxu0 %v1171
    %1597 = vmatprep.subr.bf16.mxu0 %v1176
    %1598 = vmatpush1.bf16.msra.mxu0 %v1175
    %1599 = vmatprep.subr.bf16.mxu0 %v1180
    %1600 = vmatpush1.bf16.msra.mxu0 %v1179
    %1601 = vmatprep.subr.bf16.mxu0 %v1184
    %1602 = vmatpush1.bf16.msra.mxu0 %v1183
    %1603 = vmatprep.mubr.bf16.mxu0 %v438
    %1604 = vmatmul.mubr.bf16.gmra.mrb[0].mxu0 %v437
    %v1605 = vpop.f32.mrb[0].mxu0
    %v1606 = vadd.f32 %v398, %v1605
    %v1607 = vpop.f32.mrb[0].mxu0
    %v1608 = vadd.f32 %v402, %v1607
    %v1609 = vpop.f32.mrb[0].mxu0
    %v1610 = vadd.f32 %v398, %v1609
    %v1611 = vpop.f32.mrb[0].mxu0
    %v1612 = vadd.f32 %v402, %v1611
    %1613 = vdwg.mxu0
    %1614 = vmatprep.subr.bf16.mxu0 %v1188
    %1615 = vmatpush1.bf16.msra.mxu0 %v1187
    %1616 = vmatprep.subr.bf16.mxu0 %v1192
    %1617 = vmatpush1.bf16.msra.mxu0 %v1191
    %1618 = vmatprep.subr.bf16.mxu0 %v1196
    %1619 = vmatpush1.bf16.msra.mxu0 %v1195
    %1620 = vmatprep.subr.bf16.mxu0 %v1200
    %1621 = vmatpush1.bf16.msra.mxu0 %v1199
    %1622 = vmatprep.subr.bf16.mxu0 %v1204
    %1623 = vmatpush1.bf16.msra.mxu0 %v1203
    %1624 = vmatprep.subr.bf16.mxu0 %v1208
    %1625 = vmatpush1.bf16.msra.mxu0 %v1207
    %1626 = vmatprep.subr.bf16.mxu0 %v1212
    %1627 = vmatpush1.bf16.msra.mxu0 %v1211
    %1628 = vmatprep.subr.bf16.mxu0 %v1216
    %1629 = vmatpush1.bf16.msra.mxu0 %v1215
    %1630 = vmatprep.subr.bf16.mxu0 %v1220
    %1631 = vmatpush1.bf16.msra.mxu0 %v1219
    %1632 = vmatprep.subr.bf16.mxu0 %v1224
    %1633 = vmatpush1.bf16.msra.mxu0 %v1223
    %1634 = vmatprep.subr.bf16.mxu0 %v1228
    %1635 = vmatpush1.bf16.msra.mxu0 %v1227
    %1636 = vmatprep.subr.bf16.mxu0 %v1232
    %1637 = vmatpush1.bf16.msra.mxu0 %v1231
    %1638 = vmatprep.subr.bf16.mxu0 %v1236
    %1639 = vmatpush1.bf16.msra.mxu0 %v1235
    %1640 = vmatprep.subr.bf16.mxu0 %v1240
    %1641 = vmatpush1.bf16.msra.mxu0 %v1239
    %1642 = vmatprep.subr.bf16.mxu0 %v1244
    %1643 = vmatpush1.bf16.msra.mxu0 %v1243
    %1644 = vmatprep.subr.bf16.mxu0 %v1248
    %1645 = vmatpush1.bf16.msra.mxu0 %v1247
    %1646 = vmatprep.mubr.bf16.mxu0 %v440
    %1647 = vmatmul.mubr.bf16.gmra.mrb[0].mxu0 %v439
    %v1648 = vpop.f32.mrb[0].mxu0
    %v1649 = vadd.f32 %v1606, %v1648
    %v1650 = vpop.f32.mrb[0].mxu0
    %v1651 = vadd.f32 %v1608, %v1650
    %v1652 = vpop.f32.mrb[0].mxu0
    %v1653 = vadd.f32 %v1610, %v1652
    %v1654 = vpop.f32.mrb[0].mxu0
    %v1655 = vadd.f32 %v1612, %v1654
    %1656 = vdwg.mxu0
    %1657 = vmatprep.subr.bf16.mxu0 %v1252
    %1658 = vmatpush1.bf16.msra.mxu0 %v1251
    %1659 = vmatprep.subr.bf16.mxu0 %v1256
    %1660 = vmatpush1.bf16.msra.mxu0 %v1255
    %1661 = vmatprep.subr.bf16.mxu0 %v1260
    %1662 = vmatpush1.bf16.msra.mxu0 %v1259
    %1663 = vmatprep.subr.bf16.mxu0 %v1264
    %1664 = vmatpush1.bf16.msra.mxu0 %v1263
    %1665 = vmatprep.subr.bf16.mxu0 %v1268
    %1666 = vmatpush1.bf16.msra.mxu0 %v1267
    %1667 = vmatprep.subr.bf16.mxu0 %v1272
    %1668 = vmatpush1.bf16.msra.mxu0 %v1271
    %1669 = vmatprep.subr.bf16.mxu0 %v1276
    %1670 = vmatpush1.bf16.msra.mxu0 %v1275
    %1671 = vmatprep.subr.bf16.mxu0 %v1280
    %1672 = vmatpush1.bf16.msra.mxu0 %v1279
    %1673 = vmatprep.subr.bf16.mxu0 %v1284
    %1674 = vmatpush1.bf16.msra.mxu0 %v1283
    %1675 = vmatprep.subr.bf16.mxu0 %v1288
    %1676 = vmatpush1.bf16.msra.mxu0 %v1287
    %1677 = vmatprep.subr.bf16.mxu0 %v1292
    %1678 = vmatpush1.bf16.msra.mxu0 %v1291
    %1679 = vmatprep.subr.bf16.mxu0 %v1296
    %1680 = vmatpush1.bf16.msra.mxu0 %v1295
    %1681 = vmatprep.subr.bf16.mxu0 %v1300
    %1682 = vmatpush1.bf16.msra.mxu0 %v1299
    %1683 = vmatprep.subr.bf16.mxu0 %v1304
    %1684 = vmatpush1.bf16.msra.mxu0 %v1303
    %1685 = vmatprep.subr.bf16.mxu0 %v1308
    %1686 = vmatpush1.bf16.msra.mxu0 %v1307
    %1687 = vmatprep.subr.bf16.mxu0 %v1312
    %1688 = vmatpush1.bf16.msra.mxu0 %v1311
    %1689 = vmatprep.mubr.bf16.mxu0 %v442
    %1690 = vmatmul.mubr.bf16.gmra.mrb[0].mxu0 %v441
    %v1691 = vpop.f32.mrb[0].mxu0
    %v1692 = vadd.f32 %v1649, %v1691
    %v1693 = vpop.f32.mrb[0].mxu0
    %v1694 = vadd.f32 %v1651, %v1693
    %v1695 = vpop.f32.mrb[0].mxu0
    %v1696 = vadd.f32 %v1653, %v1695
    %v1697 = vpop.f32.mrb[0].mxu0
    %v1698 = vadd.f32 %v1655, %v1697
    %1699 = vdwg.mxu0
    %1700 = vmatprep.subr.bf16.mxu0 %v1316
    %1701 = vmatpush1.bf16.msra.mxu0 %v1315
    %1702 = vmatprep.subr.bf16.mxu0 %v1320
    %1703 = vmatpush1.bf16.msra.mxu0 %v1319
    %1704 = vmatprep.subr.bf16.mxu0 %v1324
    %1705 = vmatpush1.bf16.msra.mxu0 %v1323
    %1706 = vmatprep.subr.bf16.mxu0 %v1328
    %1707 = vmatpush1.bf16.msra.mxu0 %v1327
    %1708 = vmatprep.subr.bf16.mxu0 %v1332
    %1709 = vmatpush1.bf16.msra.mxu0 %v1331
    %1710 = vmatprep.subr.bf16.mxu0 %v1336
    %1711 = vmatpush1.bf16.msra.mxu0 %v1335
    %1712 = vmatprep.subr.bf16.mxu0 %v1340
    %1713 = vmatpush1.bf16.msra.mxu0 %v1339
    %1714 = vmatprep.subr.bf16.mxu0 %v1344
    %1715 = vmatpush1.bf16.msra.mxu0 %v1343
    %1716 = vmatprep.subr.bf16.mxu0 0
    %1717 = vmatpush1.bf16.msra.mxu0 0
    %1718 = vmatprep.subr.bf16.mxu0 0
    %1719 = vmatpush1.bf16.msra.mxu0 0
    %1720 = vmatprep.subr.bf16.mxu0 0
    %1721 = vmatpush1.bf16.msra.mxu0 0
    %1722 = vmatprep.subr.bf16.mxu0 0
    %1723 = vmatpush1.bf16.msra.mxu0 0
    %1724 = vmatprep.subr.bf16.mxu0 0
    %1725 = vmatpush1.bf16.msra.mxu0 0
    %1726 = vmatprep.subr.bf16.mxu0 0
    %1727 = vmatpush1.bf16.msra.mxu0 0
    %1728 = vmatprep.subr.bf16.mxu0 0
    %1729 = vmatpush1.bf16.msra.mxu0 0
    %1730 = vmatprep.subr.bf16.mxu0 0
    %1731 = vmatpush1.bf16.msra.mxu0 0
    %1732 = vmatprep.mubr.bf16.mxu0 0
    %1733 = vmatmul.mubr.bf16.gmra.mrb[0].mxu0 %v443
    %v1734 = vpop.f32.mrb[0].mxu0
    %v1735 = vadd.f32 %v1692, %v1734
    %v1736 = vpop.f32.mrb[0].mxu0
    %v1737 = vadd.f32 %v1694, %v1736
    %v1738 = vpop.f32.mrb[0].mxu0
    %v1739 = vadd.f32 %v1696, %v1738
    %v1740 = vpop.f32.mrb[0].mxu0
    %v1741 = vadd.f32 %v1698, %v1740
    %1742 = vdwg.mxu0
    %1743 = vmatprep.subr.bf16.mxu0 %v1126
    %1744 = vmatpush1.bf16.msra.mxu0 %v1125
    %1745 = vmatprep.subr.bf16.mxu0 %v1130
    %1746 = vmatpush1.bf16.msra.mxu0 %v1129
    %1747 = vmatprep.subr.bf16.mxu0 %v1134
    %1748 = vmatpush1.bf16.msra.mxu0 %v1133
    %1749 = vmatprep.subr.bf16.mxu0 %v1138
    %1750 = vmatpush1.bf16.msra.mxu0 %v1137
    %1751 = vmatprep.subr.bf16.mxu0 %v1142
    %1752 = vmatpush1.bf16.msra.mxu0 %v1141
    %1753 = vmatprep.subr.bf16.mxu0 %v1146
    %1754 = vmatpush1.bf16.msra.mxu0 %v1145
    %1755 = vmatprep.subr.bf16.mxu0 %v1150
    %1756 = vmatpush1.bf16.msra.mxu0 %v1149
    %1757 = vmatprep.subr.bf16.mxu0 %v1154
    %1758 = vmatpush1.bf16.msra.mxu0 %v1153
    %1759 = vmatprep.subr.bf16.mxu0 %v1158
    %1760 = vmatpush1.bf16.msra.mxu0 %v1157
    %1761 = vmatprep.subr.bf16.mxu0 %v1162
    %1762 = vmatpush1.bf16.msra.mxu0 %v1161
    %1763 = vmatprep.subr.bf16.mxu0 %v1166
    %1764 = vmatpush1.bf16.msra.mxu0 %v1165
    %1765 = vmatprep.subr.bf16.mxu0 %v1170
    %1766 = vmatpush1.bf16.msra.mxu0 %v1169
    %1767 = vmatprep.subr.bf16.mxu0 %v1174
    %1768 = vmatpush1.bf16.msra.mxu0 %v1173
    %1769 = vmatprep.subr.bf16.mxu0 %v1178
    %1770 = vmatpush1.bf16.msra.mxu0 %v1177
    %1771 = vmatprep.subr.bf16.mxu0 %v1182
    %1772 = vmatpush1.bf16.msra.mxu0 %v1181
    %1773 = vmatprep.subr.bf16.mxu0 %v1186
    %1774 = vmatpush1.bf16.msra.mxu0 %v1185
    %1775 = vmatprep.mubr.bf16.mxu0 %v438
    %1776 = vmatmul.mubr.bf16.gmra.mrb[0].mxu0 %v437
    %v1777 = vpop.f32.mrb[0].mxu0
    %v1778 = vadd.f32 %v406, %v1777
    %v1779 = vpop.f32.mrb[0].mxu0
    %v1780 = vadd.f32 %v410, %v1779
    %v1781 = vpop.f32.mrb[0].mxu0
    %v1782 = vadd.f32 %v406, %v1781
    %v1783 = vpop.f32.mrb[0].mxu0
    %v1784 = vadd.f32 %v410, %v1783
    %1785 = vdwg.mxu0
    %1786 = vmatprep.subr.bf16.mxu0 %v1190
    %1787 = vmatpush1.bf16.msra.mxu0 %v1189
    %1788 = vmatprep.subr.bf16.mxu0 %v1194
    %1789 = vmatpush1.bf16.msra.mxu0 %v1193
    %1790 = vmatprep.subr.bf16.mxu0 %v1198
    %1791 = vmatpush1.bf16.msra.mxu0 %v1197
    %1792 = vmatprep.subr.bf16.mxu0 %v1202
    %1793 = vmatpush1.bf16.msra.mxu0 %v1201
    %1794 = vmatprep.subr.bf16.mxu0 %v1206
    %1795 = vmatpush1.bf16.msra.mxu0 %v1205
    %1796 = vmatprep.subr.bf16.mxu0 %v1210
    %1797 = vmatpush1.bf16.msra.mxu0 %v1209
    %1798 = vmatprep.subr.bf16.mxu0 %v1214
    %1799 = vmatpush1.bf16.msra.mxu0 %v1213
    %1800 = vmatprep.subr.bf16.mxu0 %v1218
    %1801 = vmatpush1.bf16.msra.mxu0 %v1217
    %1802 = vmatprep.subr.bf16.mxu0 %v1222
    %1803 = vmatpush1.bf16.msra.mxu0 %v1221
    %1804 = vmatprep.subr.bf16.mxu0 %v1226
    %1805 = vmatpush1.bf16.msra.mxu0 %v1225
    %1806 = vmatprep.subr.bf16.mxu0 %v1230
    %1807 = vmatpush1.bf16.msra.mxu0 %v1229
    %1808 = vmatprep.subr.bf16.mxu0 %v1234
    %1809 = vmatpush1.bf16.msra.mxu0 %v1233
    %1810 = vmatprep.subr.bf16.mxu0 %v1238
    %1811 = vmatpush1.bf16.msra.mxu0 %v1237
    %1812 = vmatprep.subr.bf16.mxu0 %v1242
    %1813 = vmatpush1.bf16.msra.mxu0 %v1241
    %1814 = vmatprep.subr.bf16.mxu0 %v1246
    %1815 = vmatpush1.bf16.msra.mxu0 %v1245
    %1816 = vmatprep.subr.bf16.mxu0 %v1250
    %1817 = vmatpush1.bf16.msra.mxu0 %v1249
    %1818 = vmatprep.mubr.bf16.mxu0 %v440
    %1819 = vmatmul.mubr.bf16.gmra.mrb[0].mxu0 %v439
    %v1820 = vpop.f32.mrb[0].mxu0
    %v1821 = vadd.f32 %v1778, %v1820
    %v1822 = vpop.f32.mrb[0].mxu0
    %v1823 = vadd.f32 %v1780, %v1822
    %v1824 = vpop.f32.mrb[0].mxu0
    %v1825 = vadd.f32 %v1782, %v1824
    %v1826 = vpop.f32.mrb[0].mxu0
    %v1827 = vadd.f32 %v1784, %v1826
    %1828 = vdwg.mxu0
    %1829 = vmatprep.subr.bf16.mxu0 %v1254
    %1830 = vmatpush1.bf16.msra.mxu0 %v1253
    %1831 = vmatprep.subr.bf16.mxu0 %v1258
    %1832 = vmatpush1.bf16.msra.mxu0 %v1257
    %1833 = vmatprep.subr.bf16.mxu0 %v1262
    %1834 = vmatpush1.bf16.msra.mxu0 %v1261
    %1835 = vmatprep.subr.bf16.mxu0 %v1266
    %1836 = vmatpush1.bf16.msra.mxu0 %v1265
    %1837 = vmatprep.subr.bf16.mxu0 %v1270
    %1838 = vmatpush1.bf16.msra.mxu0 %v1269
    %1839 = vmatprep.subr.bf16.mxu0 %v1274
    %1840 = vmatpush1.bf16.msra.mxu0 %v1273
    %1841 = vmatprep.subr.bf16.mxu0 %v1278
    %1842 = vmatpush1.bf16.msra.mxu0 %v1277
    %1843 = vmatprep.subr.bf16.mxu0 %v1282
    %1844 = vmatpush1.bf16.msra.mxu0 %v1281
    %1845 = vmatprep.subr.bf16.mxu0 %v1286
    %1846 = vmatpush1.bf16.msra.mxu0 %v1285
    %1847 = vmatprep.subr.bf16.mxu0 %v1290
    %1848 = vmatpush1.bf16.msra.mxu0 %v1289
    %1849 = vmatprep.subr.bf16.mxu0 %v1294
    %1850 = vmatpush1.bf16.msra.mxu0 %v1293
    %1851 = vmatprep.subr.bf16.mxu0 %v1298
    %1852 = vmatpush1.bf16.msra.mxu0 %v1297
    %1853 = vmatprep.subr.bf16.mxu0 %v1302
    %1854 = vmatpush1.bf16.msra.mxu0 %v1301
    %1855 = vmatprep.subr.bf16.mxu0 %v1306
    %1856 = vmatpush1.bf16.msra.mxu0 %v1305
    %1857 = vmatprep.subr.bf16.mxu0 %v1310
    %1858 = vmatpush1.bf16.msra.mxu0 %v1309
    %1859 = vmatprep.subr.bf16.mxu0 %v1314
    %1860 = vmatpush1.bf16.msra.mxu0 %v1313
    %1861 = vmatprep.mubr.bf16.mxu0 %v442
    %1862 = vmatmul.mubr.bf16.gmra.mrb[0].mxu0 %v441
    %v1863 = vpop.f32.mrb[0].mxu0
    %v1864 = vadd.f32 %v1821, %v1863
    %v1865 = vpop.f32.mrb[0].mxu0
    %v1866 = vadd.f32 %v1823, %v1865
    %v1867 = vpop.f32.mrb[0].mxu0
    %v1868 = vadd.f32 %v1825, %v1867
    %v1869 = vpop.f32.mrb[0].mxu0
    %v1870 = vadd.f32 %v1827, %v1869
    %1871 = vdwg.mxu0
    %1872 = vmatprep.subr.bf16.mxu0 %v1318
    %1873 = vmatpush1.bf16.msra.mxu0 %v1317
    %1874 = vmatprep.subr.bf16.mxu0 %v1322
    %1875 = vmatpush1.bf16.msra.mxu0 %v1321
    %1876 = vmatprep.subr.bf16.mxu0 %v1326
    %1877 = vmatpush1.bf16.msra.mxu0 %v1325
    %1878 = vmatprep.subr.bf16.mxu0 %v1330
    %1879 = vmatpush1.bf16.msra.mxu0 %v1329
    %1880 = vmatprep.subr.bf16.mxu0 %v1334
    %1881 = vmatpush1.bf16.msra.mxu0 %v1333
    %1882 = vmatprep.subr.bf16.mxu0 %v1338
    %1883 = vmatpush1.bf16.msra.mxu0 %v1337
    %1884 = vmatprep.subr.bf16.mxu0 %v1342
    %1885 = vmatpush1.bf16.msra.mxu0 %v1341
    %1886 = vmatprep.subr.bf16.mxu0 %v1346
    %1887 = vmatpush1.bf16.msra.mxu0 %v1345
    %1888 = vmatprep.subr.bf16.mxu0 0
    %1889 = vmatpush1.bf16.msra.mxu0 0
    %1890 = vmatprep.subr.bf16.mxu0 0
    %1891 = vmatpush1.bf16.msra.mxu0 0
    %1892 = vmatprep.subr.bf16.mxu0 0
    %1893 = vmatpush1.bf16.msra.mxu0 0
    %1894 = vmatprep.subr.bf16.mxu0 0
    %1895 = vmatpush1.bf16.msra.mxu0 0
    %1896 = vmatprep.subr.bf16.mxu0 0
    %1897 = vmatpush1.bf16.msra.mxu0 0
    %1898 = vmatprep.subr.bf16.mxu0 0
    %1899 = vmatpush1.bf16.msra.mxu0 0
    %1900 = vmatprep.subr.bf16.mxu0 0
    %1901 = vmatpush1.bf16.msra.mxu0 0
    %1902 = vmatprep.subr.bf16.mxu0 0
    %1903 = vmatpush1.bf16.msra.mxu0 0
    %1904 = vmatprep.mubr.bf16.mxu0 0
    %1905 = vmatmul.mubr.bf16.gmra.mrb[0].mxu0 %v443
    %v1906 = vpop.f32.mrb[0].mxu0
    %v1907 = vadd.f32 %v1864, %v1906
    %v1908 = vpop.f32.mrb[0].mxu0
    %v1909 = vadd.f32 %v1866, %v1908
    %v1910 = vpop.f32.mrb[0].mxu0
    %v1911 = vadd.f32 %v1868, %v1910
    %v1912 = vpop.f32.mrb[0].mxu0
    %v1913 = vadd.f32 %v1870, %v1912
    %1914 = vdwg.mxu0
    %v1915 = vmul.f32 %v1735, 0.01
    %v1916 = vmul.f32 %v1737, 0.01
    %v1917 = vmul.f32 %v1907, 0.01
    %v1918 = vmul.f32 %v1909, 0.01
    %v1919 = vmul.f32 %v1739, 0.01
    %v1920 = vmul.f32 %v1741, 0.01
    %v1921 = vmul.f32 %v1911, 0.01
    %v1922 = vmul.f32 %v1913, 0.01
    %v1923 = vmax.f32 %v1735, %v1915
    %v1924 = vmax.f32 %v1737, %v1916
    %v1925 = vmax.f32 %v1907, %v1917
    %v1926 = vmax.f32 %v1909, %v1918
    %v1927 = vmax.f32 %v1739, %v1919
    %v1928 = vmax.f32 %v1741, %v1920
    %v1929 = vmax.f32 %v1911, %v1921
    %v1930 = vmax.f32 %v1913, %v1922
    %v1931 = vpack.c.bf16 %v1927, %v1923
    %v1932 = vpack.c.bf16 %v1928, %v1924
    %v1933 = vpack.c.bf16 %v1929, %v1925
    %v1934 = vpack.c.bf16 %v1930, %v1926
    %v1935 = vld [vmem:[#allocation7] sm:$0xff]
    %v1936 = vld [vmem:[#allocation7 + $0x8] sm:$0xff]
    %v1937 = vld [vmem:[#allocation7 + $0x10] sm:$0xff]
    %v1938 = vld [vmem:[#allocation7 + $0x18] sm:$0xff]
    %v1939 = vld [vmem:[#allocation7 + $0x20] sm:$0xff]
    %v1940 = vld [vmem:[#allocation7 + $0x28] sm:$0xff]
    %v1941 = vld [vmem:[#allocation7 + $0x30] sm:$0xff]
    %v1942 = vld [vmem:[#allocation7 + $0x38] sm:$0xff]
    %v1943 = vld [vmem:[#allocation7 + $0x40] sm:$0xff]
    %v1944 = vld [vmem:[#allocation7 + $0x48] sm:$0xff]
    %v1945 = vld [vmem:[#allocation7 + $0x50] sm:$0xff]
    %v1946 = vld [vmem:[#allocation7 + $0x58] sm:$0xff]
    %v1947 = vld [vmem:[#allocation7 + $0x60] sm:$0xff]
    %v1948 = vld [vmem:[#allocation7 + $0x68] sm:$0xff]
    %v1949 = vld [vmem:[#allocation7 + $0x70] sm:$0xff]
    %v1950 = vld [vmem:[#allocation7 + $0x78] sm:$0xff]
    %v1951 = vld [vmem:[#allocation7 + $0x80] sm:$0xff]
    %v1952 = vld [vmem:[#allocation7 + $0x88] sm:$0xff]
    %v1953 = vld [vmem:[#allocation7 + $0x90] sm:$0xff]
    %v1954 = vld [vmem:[#allocation7 + $0x98] sm:$0xff]
    %v1955 = vld [vmem:[#allocation7 + $0xa0] sm:$0xff]
    %v1956 = vld [vmem:[#allocation7 + $0xa8] sm:$0xff]
    %v1957 = vld [vmem:[#allocation7 + $0xb0] sm:$0xff]
    %v1958 = vld [vmem:[#allocation7 + $0xb8] sm:$0xff]
    %v1959 = vld [vmem:[#allocation7 + $0xc0] sm:$0xff]
    %v1960 = vld [vmem:[#allocation7 + $0xc8] sm:$0xff]
    %v1961 = vld [vmem:[#allocation7 + $0xd0] sm:$0xff]
    %v1962 = vld [vmem:[#allocation7 + $0xd8] sm:$0xff]
    %v1963 = vld [vmem:[#allocation7 + $0xe0] sm:$0xff]
    %v1964 = vld [vmem:[#allocation7 + $0xe8] sm:$0xff]
    %v1965 = vld [vmem:[#allocation7 + $0xf0] sm:$0xff]
    %v1966 = vld [vmem:[#allocation7 + $0xf8] sm:$0xff]
    %v1967 = vld [vmem:[#allocation7 + $0x100] sm:$0xff]
    %v1968 = vld [vmem:[#allocation7 + $0x108] sm:$0xff]
    %v1969 = vld [vmem:[#allocation7 + $0x110] sm:$0xff]
    %v1970 = vld [vmem:[#allocation7 + $0x118] sm:$0xff]
    %v1971 = vld [vmem:[#allocation7 + $0x120] sm:$0xff]
    %v1972 = vld [vmem:[#allocation7 + $0x128] sm:$0xff]
    %v1973 = vld [vmem:[#allocation7 + $0x130] sm:$0xff]
    %v1974 = vld [vmem:[#allocation7 + $0x138] sm:$0xff]
    %v1975 = vld [vmem:[#allocation7 + $0x140] sm:$0xff]
    %v1976 = vld [vmem:[#allocation7 + $0x148] sm:$0xff]
    %v1977 = vld [vmem:[#allocation7 + $0x150] sm:$0xff]
    %v1978 = vld [vmem:[#allocation7 + $0x158] sm:$0xff]
    %v1979 = vld [vmem:[#allocation7 + $0x160] sm:$0xff]
    %v1980 = vld [vmem:[#allocation7 + $0x168] sm:$0xff]
    %v1981 = vld [vmem:[#allocation7 + $0x170] sm:$0xff]
    %v1982 = vld [vmem:[#allocation7 + $0x178] sm:$0xff]
    %v1983 = vld [vmem:[#allocation7 + $0x180] sm:$0xff]
    %v1984 = vld [vmem:[#allocation7 + $0x188] sm:$0xff]
    %v1985 = vld [vmem:[#allocation7 + $0x190] sm:$0xff]
    %v1986 = vld [vmem:[#allocation7 + $0x198] sm:$0xff]
    %v1987 = vld [vmem:[#allocation7 + $0x1a0] sm:$0xff]
    %v1988 = vld [vmem:[#allocation7 + $0x1a8] sm:$0xff]
    %v1989 = vld [vmem:[#allocation7 + $0x1b0] sm:$0xff]
    %v1990 = vld [vmem:[#allocation7 + $0x1b8] sm:$0xff]
    %v1991 = vld [vmem:[#allocation7 + $0x1c0] sm:$0xff]
    %v1992 = vld [vmem:[#allocation7 + $0x1c8] sm:$0xff]
    %v1993 = vld [vmem:[#allocation7 + $0x1d0] sm:$0xff]
    %v1994 = vld [vmem:[#allocation7 + $0x1d8] sm:$0xff]
    %v1995 = vld [vmem:[#allocation7 + $0x1e0] sm:$0xff]
    %v1996 = vld [vmem:[#allocation7 + $0x1e8] sm:$0xff]
    %v1997 = vld [vmem:[#allocation7 + $0x1f0] sm:$0xff]
    %v1998 = vld [vmem:[#allocation7 + $0x1f8] sm:$0xff]
    %v1999 = vld [vmem:[#allocation7 + $0x200] sm:$0xff]
    %v2000 = vld [vmem:[#allocation7 + $0x208] sm:$0xff]
    %v2001 = vld [vmem:[#allocation7 + $0x210] sm:$0xff]
    %v2002 = vld [vmem:[#allocation7 + $0x218] sm:$0xff]
    %v2003 = vld [vmem:[#allocation7 + $0x220] sm:$0xff]
    %v2004 = vld [vmem:[#allocation7 + $0x228] sm:$0xff]
    %v2005 = vld [vmem:[#allocation7 + $0x230] sm:$0xff]
    %v2006 = vld [vmem:[#allocation7 + $0x238] sm:$0xff]
    %v2007 = vld [vmem:[#allocation7 + $0x240] sm:$0xff]
    %v2008 = vld [vmem:[#allocation7 + $0x248] sm:$0xff]
    %v2009 = vld [vmem:[#allocation7 + $0x250] sm:$0xff]
    %v2010 = vld [vmem:[#allocation7 + $0x258] sm:$0xff]
    %v2011 = vld [vmem:[#allocation7 + $0x260] sm:$0xff]
    %v2012 = vld [vmem:[#allocation7 + $0x268] sm:$0xff]
    %v2013 = vld [vmem:[#allocation7 + $0x270] sm:$0xff]
    %v2014 = vld [vmem:[#allocation7 + $0x278] sm:$0xff]
    %v2015 = vld [vmem:[#allocation7 + $0x280] sm:$0xff]
    %v2016 = vld [vmem:[#allocation7 + $0x288] sm:$0xff]
    %v2017 = vld [vmem:[#allocation7 + $0x290] sm:$0xff]
    %v2018 = vld [vmem:[#allocation7 + $0x298] sm:$0xff]
    %v2019 = vld [vmem:[#allocation7 + $0x2a0] sm:$0xff]
    %v2020 = vld [vmem:[#allocation7 + $0x2a8] sm:$0xff]
    %v2021 = vld [vmem:[#allocation7 + $0x2b0] sm:$0xff]
    %v2022 = vld [vmem:[#allocation7 + $0x2b8] sm:$0xff]
    %v2023 = vld [vmem:[#allocation7 + $0x2c0] sm:$0xff]
    %v2024 = vld [vmem:[#allocation7 + $0x2c8] sm:$0xff]
    %v2025 = vld [vmem:[#allocation7 + $0x2d0] sm:$0xff]
    %v2026 = vld [vmem:[#allocation7 + $0x2d8] sm:$0xff]
    %v2027 = vld [vmem:[#allocation7 + $0x2e0] sm:$0xff]
    %v2028 = vld [vmem:[#allocation7 + $0x2e8] sm:$0xff]
    %v2029 = vld [vmem:[#allocation7 + $0x2f0] sm:$0xff]
    %v2030 = vld [vmem:[#allocation7 + $0x2f8] sm:$0xff]
    %v2031 = vld [vmem:[#allocation7 + $0x300] sm:$0xff]
    %v2032 = vld [vmem:[#allocation7 + $0x308] sm:$0xff]
    %v2033 = vld [vmem:[#allocation7 + $0x310] sm:$0xff]
    %v2034 = vld [vmem:[#allocation7 + $0x318] sm:$0xff]
    %v2035 = vld [vmem:[#allocation7 + $0x320] sm:$0xff]
    %v2036 = vld [vmem:[#allocation7 + $0x328] sm:$0xff]
    %v2037 = vld [vmem:[#allocation7 + $0x330] sm:$0xff]
    %v2038 = vld [vmem:[#allocation7 + $0x338] sm:$0xff]
    %v2039 = vld [vmem:[#allocation7 + $0x340] sm:$0xff]
    %v2040 = vld [vmem:[#allocation7 + $0x348] sm:$0xff]
    %v2041 = vld [vmem:[#allocation7 + $0x350] sm:$0xff]
    %v2042 = vld [vmem:[#allocation7 + $0x358] sm:$0xff]
    %v2043 = vld [vmem:[#allocation7 + $0x360] sm:$0xff]
    %v2044 = vld [vmem:[#allocation7 + $0x368] sm:$0xff]
    %v2045 = vld [vmem:[#allocation7 + $0x370] sm:$0xff]
    %v2046 = vld [vmem:[#allocation7 + $0x378] sm:$0xff]
    %v2047 = vld [vmem:[#allocation7 + $0x380] sm:$0xff]
    %v2048 = vld [vmem:[#allocation7 + $0x388] sm:$0xff]
    %v2049 = vld [vmem:[#allocation7 + $0x390] sm:$0xff]
    %v2050 = vld [vmem:[#allocation7 + $0x398] sm:$0xff]
    %v2051 = vld [vmem:[#allocation7 + $0x3a0] sm:$0xff]
    %v2052 = vld [vmem:[#allocation7 + $0x3a8] sm:$0xff]
    %v2053 = vld [vmem:[#allocation7 + $0x3b0] sm:$0xff]
    %v2054 = vld [vmem:[#allocation7 + $0x3b8] sm:$0xff]
    %v2055 = vld [vmem:[#allocation7 + $0x3c0] sm:$0xff]
    %v2056 = vld [vmem:[#allocation7 + $0x3c8] sm:$0xff]
    %v2057 = vld [vmem:[#allocation7 + $0x3d0] sm:$0xff]
    %v2058 = vld [vmem:[#allocation7 + $0x3d8] sm:$0xff]
    %v2059 = vld [vmem:[#allocation7 + $0x3e0] sm:$0xff]
    %v2060 = vld [vmem:[#allocation7 + $0x3e8] sm:$0xff]
    %v2061 = vld [vmem:[#allocation7 + $0x3f0] sm:$0xff]
    %v2062 = vld [vmem:[#allocation7 + $0x3f8] sm:$0xff]
    %v2063 = vld [vmem:[%s4] sm:$0xf]
    %v2065 = vlaneseq
    %v2066 = vshrl.u32 %v2065, 7
    %v2067 = vsub.s32 0, %v2066
    %v2068 = vrot.slane %v2063, %v2067
    %v2069 = vlaneseq
    %v2070 = vshrl.u32 %v2069, 7
    %v2071 = vsub.s32 1, %v2070
    %v2072 = vrot.slane %v2063, %v2071
    %v2073 = vlaneseq
    %v2074 = vshrl.u32 %v2073, 7
    %v2075 = vsub.s32 2, %v2074
    %v2076 = vrot.slane %v2063, %v2075
    %v2077 = vlaneseq
    %v2078 = vshrl.u32 %v2077, 7
    %v2079 = vsub.s32 3, %v2078
    %v2080 = vrot.slane %v2063, %v2079
    %v2213 = vunpack.c.l.b16 %v1935
    %v2214 = vunpack.c.h.b16 %v1935
    %v2215 = vunpack.c.l.b16 %v1936
    %v2216 = vunpack.c.h.b16 %v1936
    %v2217 = vunpack.c.l.b16 %v1937
    %v2218 = vunpack.c.h.b16 %v1937
    %v2219 = vunpack.c.l.b16 %v1938
    %v2220 = vunpack.c.h.b16 %v1938
    %v2221 = vunpack.c.l.b16 %v1939
    %v2222 = vunpack.c.h.b16 %v1939
    %v2223 = vunpack.c.l.b16 %v1940
    %v2224 = vunpack.c.h.b16 %v1940
    %v2225 = vunpack.c.l.b16 %v1941
    %v2226 = vunpack.c.h.b16 %v1941
    %v2227 = vunpack.c.l.b16 %v1942
    %v2228 = vunpack.c.h.b16 %v1942
    %v2229 = vunpack.c.l.b16 %v1943
    %v2230 = vunpack.c.h.b16 %v1943
    %v2231 = vunpack.c.l.b16 %v1944
    %v2232 = vunpack.c.h.b16 %v1944
    %v2233 = vunpack.c.l.b16 %v1945
    %v2234 = vunpack.c.h.b16 %v1945
    %v2235 = vunpack.c.l.b16 %v1946
    %v2236 = vunpack.c.h.b16 %v1946
    %v2237 = vunpack.c.l.b16 %v1947
    %v2238 = vunpack.c.h.b16 %v1947
    %v2239 = vunpack.c.l.b16 %v1948
    %v2240 = vunpack.c.h.b16 %v1948
    %v2241 = vunpack.c.l.b16 %v1949
    %v2242 = vunpack.c.h.b16 %v1949
    %v2243 = vunpack.c.l.b16 %v1950
    %v2244 = vunpack.c.h.b16 %v1950
    %v2245 = vunpack.c.l.b16 %v1951
    %v2246 = vunpack.c.h.b16 %v1951
    %v2247 = vunpack.c.l.b16 %v1952
    %v2248 = vunpack.c.h.b16 %v1952
    %v2249 = vunpack.c.l.b16 %v1953
    %v2250 = vunpack.c.h.b16 %v1953
    %v2251 = vunpack.c.l.b16 %v1954
    %v2252 = vunpack.c.h.b16 %v1954
    %v2253 = vunpack.c.l.b16 %v1955
    %v2254 = vunpack.c.h.b16 %v1955
    %v2255 = vunpack.c.l.b16 %v1956
    %v2256 = vunpack.c.h.b16 %v1956
    %v2257 = vunpack.c.l.b16 %v1957
    %v2258 = vunpack.c.h.b16 %v1957
    %v2259 = vunpack.c.l.b16 %v1958
    %v2260 = vunpack.c.h.b16 %v1958
    %v2261 = vunpack.c.l.b16 %v1959
    %v2262 = vunpack.c.h.b16 %v1959
    %v2263 = vunpack.c.l.b16 %v1960
    %v2264 = vunpack.c.h.b16 %v1960
    %v2265 = vunpack.c.l.b16 %v1961
    %v2266 = vunpack.c.h.b16 %v1961
    %v2267 = vunpack.c.l.b16 %v1962
    %v2268 = vunpack.c.h.b16 %v1962
    %v2269 = vunpack.c.l.b16 %v1963
    %v2270 = vunpack.c.h.b16 %v1963
    %v2271 = vunpack.c.l.b16 %v1964
    %v2272 = vunpack.c.h.b16 %v1964
    %v2273 = vunpack.c.l.b16 %v1965
    %v2274 = vunpack.c.h.b16 %v1965
    %v2275 = vunpack.c.l.b16 %v1966
    %v2276 = vunpack.c.h.b16 %v1966
    %v2277 = vunpack.c.l.b16 %v1967
    %v2278 = vunpack.c.h.b16 %v1967
    %v2279 = vunpack.c.l.b16 %v1968
    %v2280 = vunpack.c.h.b16 %v1968
    %v2281 = vunpack.c.l.b16 %v1969
    %v2282 = vunpack.c.h.b16 %v1969
    %v2283 = vunpack.c.l.b16 %v1970
    %v2284 = vunpack.c.h.b16 %v1970
    %v2285 = vunpack.c.l.b16 %v1971
    %v2286 = vunpack.c.h.b16 %v1971
    %v2287 = vunpack.c.l.b16 %v1972
    %v2288 = vunpack.c.h.b16 %v1972
    %v2289 = vunpack.c.l.b16 %v1973
    %v2290 = vunpack.c.h.b16 %v1973
    %v2291 = vunpack.c.l.b16 %v1974
    %v2292 = vunpack.c.h.b16 %v1974
    %v2293 = vunpack.c.l.b16 %v1975
    %v2294 = vunpack.c.h.b16 %v1975
    %v2295 = vunpack.c.l.b16 %v1976
    %v2296 = vunpack.c.h.b16 %v1976
    %v2297 = vunpack.c.l.b16 %v1977
    %v2298 = vunpack.c.h.b16 %v1977
    %v2299 = vunpack.c.l.b16 %v1978
    %v2300 = vunpack.c.h.b16 %v1978
    %v2301 = vunpack.c.l.b16 %v1979
    %v2302 = vunpack.c.h.b16 %v1979
    %v2303 = vunpack.c.l.b16 %v1980
    %v2304 = vunpack.c.h.b16 %v1980
    %v2305 = vunpack.c.l.b16 %v1981
    %v2306 = vunpack.c.h.b16 %v1981
    %v2307 = vunpack.c.l.b16 %v1982
    %v2308 = vunpack.c.h.b16 %v1982
    %v2309 = vunpack.c.l.b16 %v1983
    %v2310 = vunpack.c.h.b16 %v1983
    %v2311 = vunpack.c.l.b16 %v1984
    %v2312 = vunpack.c.h.b16 %v1984
    %v2313 = vunpack.c.l.b16 %v1985
    %v2314 = vunpack.c.h.b16 %v1985
    %v2315 = vunpack.c.l.b16 %v1986
    %v2316 = vunpack.c.h.b16 %v1986
    %v2317 = vunpack.c.l.b16 %v1987
    %v2318 = vunpack.c.h.b16 %v1987
    %v2319 = vunpack.c.l.b16 %v1988
    %v2320 = vunpack.c.h.b16 %v1988
    %v2321 = vunpack.c.l.b16 %v1989
    %v2322 = vunpack.c.h.b16 %v1989
    %v2323 = vunpack.c.l.b16 %v1990
    %v2324 = vunpack.c.h.b16 %v1990
    %v2325 = vunpack.c.l.b16 %v1991
    %v2326 = vunpack.c.h.b16 %v1991
    %v2327 = vunpack.c.l.b16 %v1992
    %v2328 = vunpack.c.h.b16 %v1992
    %v2329 = vunpack.c.l.b16 %v1993
    %v2330 = vunpack.c.h.b16 %v1993
    %v2331 = vunpack.c.l.b16 %v1994
    %v2332 = vunpack.c.h.b16 %v1994
    %v2333 = vunpack.c.l.b16 %v1995
    %v2334 = vunpack.c.h.b16 %v1995
    %v2335 = vunpack.c.l.b16 %v1996
    %v2336 = vunpack.c.h.b16 %v1996
    %v2337 = vunpack.c.l.b16 %v1997
    %v2338 = vunpack.c.h.b16 %v1997
    %v2339 = vunpack.c.l.b16 %v1998
    %v2340 = vunpack.c.h.b16 %v1998
    %v2341 = vunpack.c.l.b16 %v1999
    %v2342 = vunpack.c.h.b16 %v1999
    %v2343 = vunpack.c.l.b16 %v2000
    %v2344 = vunpack.c.h.b16 %v2000
    %v2345 = vunpack.c.l.b16 %v2001
    %v2346 = vunpack.c.h.b16 %v2001
    %v2347 = vunpack.c.l.b16 %v2002
    %v2348 = vunpack.c.h.b16 %v2002
    %v2349 = vunpack.c.l.b16 %v2003
    %v2350 = vunpack.c.h.b16 %v2003
    %v2351 = vunpack.c.l.b16 %v2004
    %v2352 = vunpack.c.h.b16 %v2004
    %v2353 = vunpack.c.l.b16 %v2005
    %v2354 = vunpack.c.h.b16 %v2005
    %v2355 = vunpack.c.l.b16 %v2006
    %v2356 = vunpack.c.h.b16 %v2006
    %v2357 = vunpack.c.l.b16 %v2007
    %v2358 = vunpack.c.h.b16 %v2007
    %v2359 = vunpack.c.l.b16 %v2008
    %v2360 = vunpack.c.h.b16 %v2008
    %v2361 = vunpack.c.l.b16 %v2009
    %v2362 = vunpack.c.h.b16 %v2009
    %v2363 = vunpack.c.l.b16 %v2010
    %v2364 = vunpack.c.h.b16 %v2010
    %v2365 = vunpack.c.l.b16 %v2011
    %v2366 = vunpack.c.h.b16 %v2011
    %v2367 = vunpack.c.l.b16 %v2012
    %v2368 = vunpack.c.h.b16 %v2012
    %v2369 = vunpack.c.l.b16 %v2013
    %v2370 = vunpack.c.h.b16 %v2013
    %v2371 = vunpack.c.l.b16 %v2014
    %v2372 = vunpack.c.h.b16 %v2014
    %v2373 = vunpack.c.l.b16 %v2015
    %v2374 = vunpack.c.h.b16 %v2015
    %v2375 = vunpack.c.l.b16 %v2016
    %v2376 = vunpack.c.h.b16 %v2016
    %v2377 = vunpack.c.l.b16 %v2017
    %v2378 = vunpack.c.h.b16 %v2017
    %v2379 = vunpack.c.l.b16 %v2018
    %v2380 = vunpack.c.h.b16 %v2018
    %v2381 = vunpack.c.l.b16 %v2019
    %v2382 = vunpack.c.h.b16 %v2019
    %v2383 = vunpack.c.l.b16 %v2020
    %v2384 = vunpack.c.h.b16 %v2020
    %v2385 = vunpack.c.l.b16 %v2021
    %v2386 = vunpack.c.h.b16 %v2021
    %v2387 = vunpack.c.l.b16 %v2022
    %v2388 = vunpack.c.h.b16 %v2022
    %v2389 = vunpack.c.l.b16 %v2023
    %v2390 = vunpack.c.h.b16 %v2023
    %v2391 = vunpack.c.l.b16 %v2024
    %v2392 = vunpack.c.h.b16 %v2024
    %v2393 = vunpack.c.l.b16 %v2025
    %v2394 = vunpack.c.h.b16 %v2025
    %v2395 = vunpack.c.l.b16 %v2026
    %v2396 = vunpack.c.h.b16 %v2026
    %v2397 = vunpack.c.l.b16 %v2027
    %v2398 = vunpack.c.h.b16 %v2027
    %v2399 = vunpack.c.l.b16 %v2028
    %v2400 = vunpack.c.h.b16 %v2028
    %v2401 = vunpack.c.l.b16 %v2029
    %v2402 = vunpack.c.h.b16 %v2029
    %v2403 = vunpack.c.l.b16 %v2030
    %v2404 = vunpack.c.h.b16 %v2030
    %v2405 = vunpack.c.l.b16 %v2031
    %v2406 = vunpack.c.h.b16 %v2031
    %v2407 = vunpack.c.l.b16 %v2032
    %v2408 = vunpack.c.h.b16 %v2032
    %v2409 = vunpack.c.l.b16 %v2033
    %v2410 = vunpack.c.h.b16 %v2033
    %v2411 = vunpack.c.l.b16 %v2034
    %v2412 = vunpack.c.h.b16 %v2034
    %v2413 = vunpack.c.l.b16 %v2035
    %v2414 = vunpack.c.h.b16 %v2035
    %v2415 = vunpack.c.l.b16 %v2036
    %v2416 = vunpack.c.h.b16 %v2036
    %v2417 = vunpack.c.l.b16 %v2037
    %v2418 = vunpack.c.h.b16 %v2037
    %v2419 = vunpack.c.l.b16 %v2038
    %v2420 = vunpack.c.h.b16 %v2038
    %v2421 = vunpack.c.l.b16 %v2039
    %v2422 = vunpack.c.h.b16 %v2039
    %v2423 = vunpack.c.l.b16 %v2040
    %v2424 = vunpack.c.h.b16 %v2040
    %v2425 = vunpack.c.l.b16 %v2041
    %v2426 = vunpack.c.h.b16 %v2041
    %v2427 = vunpack.c.l.b16 %v2042
    %v2428 = vunpack.c.h.b16 %v2042
    %v2429 = vunpack.c.l.b16 %v2043
    %v2430 = vunpack.c.h.b16 %v2043
    %v2431 = vunpack.c.l.b16 %v2044
    %v2432 = vunpack.c.h.b16 %v2044
    %v2433 = vunpack.c.l.b16 %v2045
    %v2434 = vunpack.c.h.b16 %v2045
    %v2435 = vunpack.c.l.b16 %v2046
    %v2436 = vunpack.c.h.b16 %v2046
    %v2437 = vunpack.c.l.b16 %v2047
    %v2438 = vunpack.c.h.b16 %v2047
    %v2439 = vunpack.c.l.b16 %v2048
    %v2440 = vunpack.c.h.b16 %v2048
    %v2441 = vunpack.c.l.b16 %v2049
    %v2442 = vunpack.c.h.b16 %v2049
    %v2443 = vunpack.c.l.b16 %v2050
    %v2444 = vunpack.c.h.b16 %v2050
    %v2445 = vunpack.c.l.b16 %v2051
    %v2446 = vunpack.c.h.b16 %v2051
    %v2447 = vunpack.c.l.b16 %v2052
    %v2448 = vunpack.c.h.b16 %v2052
    %v2449 = vunpack.c.l.b16 %v2053
    %v2450 = vunpack.c.h.b16 %v2053
    %v2451 = vunpack.c.l.b16 %v2054
    %v2452 = vunpack.c.h.b16 %v2054
    %v2453 = vunpack.c.l.b16 %v2055
    %v2454 = vunpack.c.h.b16 %v2055
    %v2455 = vunpack.c.l.b16 %v2056
    %v2456 = vunpack.c.h.b16 %v2056
    %v2457 = vunpack.c.l.b16 %v2057
    %v2458 = vunpack.c.h.b16 %v2057
    %v2459 = vunpack.c.l.b16 %v2058
    %v2460 = vunpack.c.h.b16 %v2058
    %v2461 = vunpack.c.l.b16 %v2059
    %v2462 = vunpack.c.h.b16 %v2059
    %v2463 = vunpack.c.l.b16 %v2060
    %v2464 = vunpack.c.h.b16 %v2060
    %v2465 = vunpack.c.l.b16 %v2061
    %v2466 = vunpack.c.h.b16 %v2061
    %v2467 = vunpack.c.l.b16 %v2062
    %v2468 = vunpack.c.h.b16 %v2062
    %v2469 = vpack.c.b16 %v2217, %v2213
    %v2470 = vpack.c.b16 %v2218, %v2214
    %v2471 = vpack.c.b16 %v2219, %v2215
    %v2472 = vpack.c.b16 %v2220, %v2216
    %v2473 = vpack.c.b16 %v2225, %v2221
    %v2474 = vpack.c.b16 %v2226, %v2222
    %v2475 = vpack.c.b16 %v2227, %v2223
    %v2476 = vpack.c.b16 %v2228, %v2224
    %v2477 = vpack.c.b16 %v2233, %v2229
    %v2478 = vpack.c.b16 %v2234, %v2230
    %v2479 = vpack.c.b16 %v2235, %v2231
    %v2480 = vpack.c.b16 %v2236, %v2232
    %v2481 = vpack.c.b16 %v2241, %v2237
    %v2482 = vpack.c.b16 %v2242, %v2238
    %v2483 = vpack.c.b16 %v2243, %v2239
    %v2484 = vpack.c.b16 %v2244, %v2240
    %v2485 = vpack.c.b16 %v2249, %v2245
    %v2486 = vpack.c.b16 %v2250, %v2246
    %v2487 = vpack.c.b16 %v2251, %v2247
    %v2488 = vpack.c.b16 %v2252, %v2248
    %v2489 = vpack.c.b16 %v2257, %v2253
    %v2490 = vpack.c.b16 %v2258, %v2254
    %v2491 = vpack.c.b16 %v2259, %v2255
    %v2492 = vpack.c.b16 %v2260, %v2256
    %v2493 = vpack.c.b16 %v2265, %v2261
    %v2494 = vpack.c.b16 %v2266, %v2262
    %v2495 = vpack.c.b16 %v2267, %v2263
    %v2496 = vpack.c.b16 %v2268, %v2264
    %v2497 = vpack.c.b16 %v2273, %v2269
    %v2498 = vpack.c.b16 %v2274, %v2270
    %v2499 = vpack.c.b16 %v2275, %v2271
    %v2500 = vpack.c.b16 %v2276, %v2272
    %v2501 = vpack.c.b16 %v2281, %v2277
    %v2502 = vpack.c.b16 %v2282, %v2278
    %v2503 = vpack.c.b16 %v2283, %v2279
    %v2504 = vpack.c.b16 %v2284, %v2280
    %v2505 = vpack.c.b16 %v2289, %v2285
    %v2506 = vpack.c.b16 %v2290, %v2286
    %v2507 = vpack.c.b16 %v2291, %v2287
    %v2508 = vpack.c.b16 %v2292, %v2288
    %v2509 = vpack.c.b16 %v2297, %v2293
    %v2510 = vpack.c.b16 %v2298, %v2294
    %v2511 = vpack.c.b16 %v2299, %v2295
    %v2512 = vpack.c.b16 %v2300, %v2296
    %v2513 = vpack.c.b16 %v2305, %v2301
    %v2514 = vpack.c.b16 %v2306, %v2302
    %v2515 = vpack.c.b16 %v2307, %v2303
    %v2516 = vpack.c.b16 %v2308, %v2304
    %v2517 = vpack.c.b16 %v2313, %v2309
    %v2518 = vpack.c.b16 %v2314, %v2310
    %v2519 = vpack.c.b16 %v2315, %v2311
    %v2520 = vpack.c.b16 %v2316, %v2312
    %v2521 = vpack.c.b16 %v2321, %v2317
    %v2522 = vpack.c.b16 %v2322, %v2318
    %v2523 = vpack.c.b16 %v2323, %v2319
    %v2524 = vpack.c.b16 %v2324, %v2320
    %v2525 = vpack.c.b16 %v2329, %v2325
    %v2526 = vpack.c.b16 %v2330, %v2326
    %v2527 = vpack.c.b16 %v2331, %v2327
    %v2528 = vpack.c.b16 %v2332, %v2328
    %v2529 = vpack.c.b16 %v2337, %v2333
    %v2530 = vpack.c.b16 %v2338, %v2334
    %v2531 = vpack.c.b16 %v2339, %v2335
    %v2532 = vpack.c.b16 %v2340, %v2336
    %v2533 = vpack.c.b16 %v2345, %v2341
    %v2534 = vpack.c.b16 %v2346, %v2342
    %v2535 = vpack.c.b16 %v2347, %v2343
    %v2536 = vpack.c.b16 %v2348, %v2344
    %v2537 = vpack.c.b16 %v2353, %v2349
    %v2538 = vpack.c.b16 %v2354, %v2350
    %v2539 = vpack.c.b16 %v2355, %v2351
    %v2540 = vpack.c.b16 %v2356, %v2352
    %v2541 = vpack.c.b16 %v2361, %v2357
    %v2542 = vpack.c.b16 %v2362, %v2358
    %v2543 = vpack.c.b16 %v2363, %v2359
    %v2544 = vpack.c.b16 %v2364, %v2360
    %v2545 = vpack.c.b16 %v2369, %v2365
    %v2546 = vpack.c.b16 %v2370, %v2366
    %v2547 = vpack.c.b16 %v2371, %v2367
    %v2548 = vpack.c.b16 %v2372, %v2368
    %v2549 = vpack.c.b16 %v2377, %v2373
    %v2550 = vpack.c.b16 %v2378, %v2374
    %v2551 = vpack.c.b16 %v2379, %v2375
    %v2552 = vpack.c.b16 %v2380, %v2376
    %v2553 = vpack.c.b16 %v2385, %v2381
    %v2554 = vpack.c.b16 %v2386, %v2382
    %v2555 = vpack.c.b16 %v2387, %v2383
    %v2556 = vpack.c.b16 %v2388, %v2384
    %v2557 = vpack.c.b16 %v2393, %v2389
    %v2558 = vpack.c.b16 %v2394, %v2390
    %v2559 = vpack.c.b16 %v2395, %v2391
    %v2560 = vpack.c.b16 %v2396, %v2392
    %v2561 = vpack.c.b16 %v2401, %v2397
    %v2562 = vpack.c.b16 %v2402, %v2398
    %v2563 = vpack.c.b16 %v2403, %v2399
    %v2564 = vpack.c.b16 %v2404, %v2400
    %v2565 = vpack.c.b16 %v2409, %v2405
    %v2566 = vpack.c.b16 %v2410, %v2406
    %v2567 = vpack.c.b16 %v2411, %v2407
    %v2568 = vpack.c.b16 %v2412, %v2408
    %v2569 = vpack.c.b16 %v2417, %v2413
    %v2570 = vpack.c.b16 %v2418, %v2414
    %v2571 = vpack.c.b16 %v2419, %v2415
    %v2572 = vpack.c.b16 %v2420, %v2416
    %v2573 = vpack.c.b16 %v2425, %v2421
    %v2574 = vpack.c.b16 %v2426, %v2422
    %v2575 = vpack.c.b16 %v2427, %v2423
    %v2576 = vpack.c.b16 %v2428, %v2424
    %v2577 = vpack.c.b16 %v2433, %v2429
    %v2578 = vpack.c.b16 %v2434, %v2430
    %v2579 = vpack.c.b16 %v2435, %v2431
    %v2580 = vpack.c.b16 %v2436, %v2432
    %v2581 = vpack.c.b16 %v2441, %v2437
    %v2582 = vpack.c.b16 %v2442, %v2438
    %v2583 = vpack.c.b16 %v2443, %v2439
    %v2584 = vpack.c.b16 %v2444, %v2440
    %v2585 = vpack.c.b16 %v2449, %v2445
    %v2586 = vpack.c.b16 %v2450, %v2446
    %v2587 = vpack.c.b16 %v2451, %v2447
    %v2588 = vpack.c.b16 %v2452, %v2448
    %v2589 = vpack.c.b16 %v2457, %v2453
    %v2590 = vpack.c.b16 %v2458, %v2454
    %v2591 = vpack.c.b16 %v2459, %v2455
    %v2592 = vpack.c.b16 %v2460, %v2456
    %v2593 = vpack.c.b16 %v2465, %v2461
    %v2594 = vpack.c.b16 %v2466, %v2462
    %v2595 = vpack.c.b16 %v2467, %v2463
    %v2596 = vpack.c.b16 %v2468, %v2464
    %2725 = vmatprep.subr.bf16.mxu0 %v2470
    %2726 = vmatpush1.bf16.msra.mxu0 %v2469
    %2727 = vmatprep.subr.bf16.mxu0 %v2474
    %2728 = vmatpush1.bf16.msra.mxu0 %v2473
    %2729 = vmatprep.subr.bf16.mxu0 %v2478
    %2730 = vmatpush1.bf16.msra.mxu0 %v2477
    %2731 = vmatprep.subr.bf16.mxu0 %v2482
    %2732 = vmatpush1.bf16.msra.mxu0 %v2481
    %2733 = vmatprep.subr.bf16.mxu0 %v2486
    %2734 = vmatpush1.bf16.msra.mxu0 %v2485
    %2735 = vmatprep.subr.bf16.mxu0 %v2490
    %2736 = vmatpush1.bf16.msra.mxu0 %v2489
    %2737 = vmatprep.subr.bf16.mxu0 %v2494
    %2738 = vmatpush1.bf16.msra.mxu0 %v2493
    %2739 = vmatprep.subr.bf16.mxu0 %v2498
    %2740 = vmatpush1.bf16.msra.mxu0 %v2497
    %2741 = vmatprep.subr.bf16.mxu0 %v2502
    %2742 = vmatpush1.bf16.msra.mxu0 %v2501
    %2743 = vmatprep.subr.bf16.mxu0 %v2506
    %2744 = vmatpush1.bf16.msra.mxu0 %v2505
    %2745 = vmatprep.subr.bf16.mxu0 %v2510
    %2746 = vmatpush1.bf16.msra.mxu0 %v2509
    %2747 = vmatprep.subr.bf16.mxu0 %v2514
    %2748 = vmatpush1.bf16.msra.mxu0 %v2513
    %2749 = vmatprep.subr.bf16.mxu0 %v2518
    %2750 = vmatpush1.bf16.msra.mxu0 %v2517
    %2751 = vmatprep.subr.bf16.mxu0 %v2522
    %2752 = vmatpush1.bf16.msra.mxu0 %v2521
    %2753 = vmatprep.subr.bf16.mxu0 %v2526
    %2754 = vmatpush1.bf16.msra.mxu0 %v2525
    %2755 = vmatprep.subr.bf16.mxu0 %v2530
    %2756 = vmatpush1.bf16.msra.mxu0 %v2529
    %2757 = vmatprep.mubr.bf16.mxu0 %v1932
    %2758 = vmatmul.mubr.bf16.gmra.mrb[0].mxu0 %v1931
    %v2759 = vpop.f32.mrb[0].mxu0
    %v2760 = vadd.f32 %v2068, %v2759
    %v2761 = vpop.f32.mrb[0].mxu0
    %v2762 = vadd.f32 %v2072, %v2761
    %v2763 = vpop.f32.mrb[0].mxu0
    %v2764 = vadd.f32 %v2068, %v2763
    %v2765 = vpop.f32.mrb[0].mxu0
    %v2766 = vadd.f32 %v2072, %v2765
    %2767 = vdwg.mxu0
    %2768 = vmatprep.subr.bf16.mxu0 %v2534
    %2769 = vmatpush1.bf16.msra.mxu0 %v2533
    %2770 = vmatprep.subr.bf16.mxu0 %v2538
    %2771 = vmatpush1.bf16.msra.mxu0 %v2537
    %2772 = vmatprep.subr.bf16.mxu0 %v2542
    %2773 = vmatpush1.bf16.msra.mxu0 %v2541
    %2774 = vmatprep.subr.bf16.mxu0 %v2546
    %2775 = vmatpush1.bf16.msra.mxu0 %v2545
    %2776 = vmatprep.subr.bf16.mxu0 %v2550
    %2777 = vmatpush1.bf16.msra.mxu0 %v2549
    %2778 = vmatprep.subr.bf16.mxu0 %v2554
    %2779 = vmatpush1.bf16.msra.mxu0 %v2553
    %2780 = vmatprep.subr.bf16.mxu0 %v2558
    %2781 = vmatpush1.bf16.msra.mxu0 %v2557
    %2782 = vmatprep.subr.bf16.mxu0 %v2562
    %2783 = vmatpush1.bf16.msra.mxu0 %v2561
    %2784 = vmatprep.subr.bf16.mxu0 %v2566
    %2785 = vmatpush1.bf16.msra.mxu0 %v2565
    %2786 = vmatprep.subr.bf16.mxu0 %v2570
    %2787 = vmatpush1.bf16.msra.mxu0 %v2569
    %2788 = vmatprep.subr.bf16.mxu0 %v2574
    %2789 = vmatpush1.bf16.msra.mxu0 %v2573
    %2790 = vmatprep.subr.bf16.mxu0 %v2578
    %2791 = vmatpush1.bf16.msra.mxu0 %v2577
    %2792 = vmatprep.subr.bf16.mxu0 %v2582
    %2793 = vmatpush1.bf16.msra.mxu0 %v2581
    %2794 = vmatprep.subr.bf16.mxu0 %v2586
    %2795 = vmatpush1.bf16.msra.mxu0 %v2585
    %2796 = vmatprep.subr.bf16.mxu0 %v2590
    %2797 = vmatpush1.bf16.msra.mxu0 %v2589
    %2798 = vmatprep.subr.bf16.mxu0 %v2594
    %2799 = vmatpush1.bf16.msra.mxu0 %v2593
    %2800 = vmatprep.mubr.bf16.mxu0 %v1934
    %2801 = vmatmul.mubr.bf16.gmra.mrb[0].mxu0 %v1933
    %v2802 = vpop.f32.mrb[0].mxu0
    %v2803 = vadd.f32 %v2760, %v2802
    %v2804 = vpop.f32.mrb[0].mxu0
    %v2805 = vadd.f32 %v2762, %v2804
    %v2806 = vpop.f32.mrb[0].mxu0
    %v2807 = vadd.f32 %v2764, %v2806
    %v2808 = vpop.f32.mrb[0].mxu0
    %v2809 = vadd.f32 %v2766, %v2808
    %2810 = vdwg.mxu0
    %2811 = vmatprep.subr.bf16.mxu0 %v2472
    %2812 = vmatpush1.bf16.msra.mxu0 %v2471
    %2813 = vmatprep.subr.bf16.mxu0 %v2476
    %2814 = vmatpush1.bf16.msra.mxu0 %v2475
    %2815 = vmatprep.subr.bf16.mxu0 %v2480
    %2816 = vmatpush1.bf16.msra.mxu0 %v2479
    %2817 = vmatprep.subr.bf16.mxu0 %v2484
    %2818 = vmatpush1.bf16.msra.mxu0 %v2483
    %2819 = vmatprep.subr.bf16.mxu0 %v2488
    %2820 = vmatpush1.bf16.msra.mxu0 %v2487
    %2821 = vmatprep.subr.bf16.mxu0 %v2492
    %2822 = vmatpush1.bf16.msra.mxu0 %v2491
    %2823 = vmatprep.subr.bf16.mxu0 %v2496
    %2824 = vmatpush1.bf16.msra.mxu0 %v2495
    %2825 = vmatprep.subr.bf16.mxu0 %v2500
    %2826 = vmatpush1.bf16.msra.mxu0 %v2499
    %2827 = vmatprep.subr.bf16.mxu0 %v2504
    %2828 = vmatpush1.bf16.msra.mxu0 %v2503
    %2829 = vmatprep.subr.bf16.mxu0 %v2508
    %2830 = vmatpush1.bf16.msra.mxu0 %v2507
    %2831 = vmatprep.subr.bf16.mxu0 %v2512
    %2832 = vmatpush1.bf16.msra.mxu0 %v2511
    %2833 = vmatprep.subr.bf16.mxu0 %v2516
    %2834 = vmatpush1.bf16.msra.mxu0 %v2515
    %2835 = vmatprep.subr.bf16.mxu0 %v2520
    %2836 = vmatpush1.bf16.msra.mxu0 %v2519
    %2837 = vmatprep.subr.bf16.mxu0 %v2524
    %2838 = vmatpush1.bf16.msra.mxu0 %v2523
    %2839 = vmatprep.subr.bf16.mxu0 %v2528
    %2840 = vmatpush1.bf16.msra.mxu0 %v2527
    %2841 = vmatprep.subr.bf16.mxu0 %v2532
    %2842 = vmatpush1.bf16.msra.mxu0 %v2531
    %2843 = vmatprep.mubr.bf16.mxu0 %v1932
    %2844 = vmatmul.mubr.bf16.gmra.mrb[0].mxu0 %v1931
    %v2845 = vpop.f32.mrb[0].mxu0
    %v2846 = vadd.f32 %v2076, %v2845
    %v2847 = vpop.f32.mrb[0].mxu0
    %v2848 = vadd.f32 %v2080, %v2847
    %v2849 = vpop.f32.mrb[0].mxu0
    %v2850 = vadd.f32 %v2076, %v2849
    %v2851 = vpop.f32.mrb[0].mxu0
    %v2852 = vadd.f32 %v2080, %v2851
    %2853 = vdwg.mxu0
    %2854 = vmatprep.subr.bf16.mxu0 %v2536
    %2855 = vmatpush1.bf16.msra.mxu0 %v2535
    %2856 = vmatprep.subr.bf16.mxu0 %v2540
    %2857 = vmatpush1.bf16.msra.mxu0 %v2539
    %2858 = vmatprep.subr.bf16.mxu0 %v2544
    %2859 = vmatpush1.bf16.msra.mxu0 %v2543
    %2860 = vmatprep.subr.bf16.mxu0 %v2548
    %2861 = vmatpush1.bf16.msra.mxu0 %v2547
    %2862 = vmatprep.subr.bf16.mxu0 %v2552
    %2863 = vmatpush1.bf16.msra.mxu0 %v2551
    %2864 = vmatprep.subr.bf16.mxu0 %v2556
    %2865 = vmatpush1.bf16.msra.mxu0 %v2555
    %2866 = vmatprep.subr.bf16.mxu0 %v2560
    %2867 = vmatpush1.bf16.msra.mxu0 %v2559
    %2868 = vmatprep.subr.bf16.mxu0 %v2564
    %2869 = vmatpush1.bf16.msra.mxu0 %v2563
    %2870 = vmatprep.subr.bf16.mxu0 %v2568
    %2871 = vmatpush1.bf16.msra.mxu0 %v2567
    %2872 = vmatprep.subr.bf16.mxu0 %v2572
    %2873 = vmatpush1.bf16.msra.mxu0 %v2571
    %2874 = vmatprep.subr.bf16.mxu0 %v2576
    %2875 = vmatpush1.bf16.msra.mxu0 %v2575
    %2876 = vmatprep.subr.bf16.mxu0 %v2580
    %2877 = vmatpush1.bf16.msra.mxu0 %v2579
    %2878 = vmatprep.subr.bf16.mxu0 %v2584
    %2879 = vmatpush1.bf16.msra.mxu0 %v2583
    %2880 = vmatprep.subr.bf16.mxu0 %v2588
    %2881 = vmatpush1.bf16.msra.mxu0 %v2587
    %2882 = vmatprep.subr.bf16.mxu0 %v2592
    %2883 = vmatpush1.bf16.msra.mxu0 %v2591
    %2884 = vmatprep.subr.bf16.mxu0 %v2596
    %2885 = vmatpush1.bf16.msra.mxu0 %v2595
    %2886 = vmatprep.mubr.bf16.mxu0 %v1934
    %2887 = vmatmul.mubr.bf16.gmra.mrb[0].mxu0 %v1933
    %v2888 = vpop.f32.mrb[0].mxu0
    %v2889 = vadd.f32 %v2846, %v2888
    %v2890 = vpop.f32.mrb[0].mxu0
    %v2891 = vadd.f32 %v2848, %v2890
    %v2892 = vpop.f32.mrb[0].mxu0
    %v2893 = vadd.f32 %v2850, %v2892
    %v2894 = vpop.f32.mrb[0].mxu0
    %v2895 = vadd.f32 %v2852, %v2894
    %2896 = vdwg.mxu0
    %v2897 = vmul.f32 %v2803, 0.01
    %v2898 = vmul.f32 %v2805, 0.01
    %v2899 = vmul.f32 %v2889, 0.01
    %v2900 = vmul.f32 %v2891, 0.01
    %v2901 = vmul.f32 %v2807, 0.01
    %v2902 = vmul.f32 %v2809, 0.01
    %v2903 = vmul.f32 %v2893, 0.01
    %v2904 = vmul.f32 %v2895, 0.01
    %v2905 = vmax.f32 %v2803, %v2897
    %v2906 = vmax.f32 %v2805, %v2898
    %v2907 = vmax.f32 %v2889, %v2899
    %v2908 = vmax.f32 %v2891, %v2900
    %v2909 = vmax.f32 %v2807, %v2901
    %v2910 = vmax.f32 %v2809, %v2902
    %v2911 = vmax.f32 %v2893, %v2903
    %v2912 = vmax.f32 %v2895, %v2904
    %v2913 = vpack.c.bf16 %v2909, %v2905
    %v2914 = vpack.c.bf16 %v2910, %v2906
    %v2915 = vpack.c.bf16 %v2911, %v2907
    %v2916 = vpack.c.bf16 %v2912, %v2908
    %v2917 = vld [vmem:[#allocation8] sm:$0xff]
    %v2918 = vld [vmem:[#allocation8 + $0x8] sm:$0xff]
    %v2919 = vld [vmem:[#allocation8 + $0x10] sm:$0xff]
    %v2920 = vld [vmem:[#allocation8 + $0x18] sm:$0xff]
    %v2921 = vld [vmem:[#allocation8 + $0x20] sm:$0xff]
    %v2922 = vld [vmem:[#allocation8 + $0x28] sm:$0xff]
    %v2923 = vld [vmem:[#allocation8 + $0x30] sm:$0xff]
    %v2924 = vld [vmem:[#allocation8 + $0x38] sm:$0xff]
    %v2925 = vld [vmem:[#allocation8 + $0x40] sm:$0xff]
    %v2926 = vld [vmem:[#allocation8 + $0x48] sm:$0xff]
    %v2927 = vld [vmem:[#allocation8 + $0x50] sm:$0xff]
    %v2928 = vld [vmem:[#allocation8 + $0x58] sm:$0xff]
    %v2929 = vld [vmem:[#allocation8 + $0x60] sm:$0xff]
    %v2930 = vld [vmem:[#allocation8 + $0x68] sm:$0xff]
    %v2931 = vld [vmem:[#allocation8 + $0x70] sm:$0xff]
    %v2932 = vld [vmem:[#allocation8 + $0x78] sm:$0xff]
    %v2933 = vld [vmem:[#allocation8 + $0x80] sm:$0xff]
    %v2934 = vld [vmem:[#allocation8 + $0x88] sm:$0xff]
    %v2935 = vld [vmem:[#allocation8 + $0x90] sm:$0xff]
    %v2936 = vld [vmem:[#allocation8 + $0x98] sm:$0xff]
    %v2937 = vld [vmem:[#allocation8 + $0xa0] sm:$0xff]
    %v2938 = vld [vmem:[#allocation8 + $0xa8] sm:$0xff]
    %v2939 = vld [vmem:[#allocation8 + $0xb0] sm:$0xff]
    %v2940 = vld [vmem:[#allocation8 + $0xb8] sm:$0xff]
    %v2941 = vld [vmem:[#allocation8 + $0xc0] sm:$0xff]
    %v2942 = vld [vmem:[#allocation8 + $0xc8] sm:$0xff]
    %v2943 = vld [vmem:[#allocation8 + $0xd0] sm:$0xff]
    %v2944 = vld [vmem:[#allocation8 + $0xd8] sm:$0xff]
    %v2945 = vld [vmem:[#allocation8 + $0xe0] sm:$0xff]
    %v2946 = vld [vmem:[#allocation8 + $0xe8] sm:$0xff]
    %v2947 = vld [vmem:[#allocation8 + $0xf0] sm:$0xff]
    %v2948 = vld [vmem:[#allocation8 + $0xf8] sm:$0xff]
    %v2949 = vld [vmem:[#allocation8 + $0x100] sm:$0xff]
    %v2950 = vld [vmem:[#allocation8 + $0x108] sm:$0xff]
    %v2951 = vld [vmem:[#allocation8 + $0x110] sm:$0xff]
    %v2952 = vld [vmem:[#allocation8 + $0x118] sm:$0xff]
    %v2953 = vld [vmem:[#allocation8 + $0x120] sm:$0xff]
    %v2954 = vld [vmem:[#allocation8 + $0x128] sm:$0xff]
    %v2955 = vld [vmem:[#allocation8 + $0x130] sm:$0xff]
    %v2956 = vld [vmem:[#allocation8 + $0x138] sm:$0xff]
    %v2957 = vld [vmem:[#allocation8 + $0x140] sm:$0xff]
    %v2958 = vld [vmem:[#allocation8 + $0x148] sm:$0xff]
    %v2959 = vld [vmem:[#allocation8 + $0x150] sm:$0xff]
    %v2960 = vld [vmem:[#allocation8 + $0x158] sm:$0xff]
    %v2961 = vld [vmem:[#allocation8 + $0x160] sm:$0xff]
    %v2962 = vld [vmem:[#allocation8 + $0x168] sm:$0xff]
    %v2963 = vld [vmem:[#allocation8 + $0x170] sm:$0xff]
    %v2964 = vld [vmem:[#allocation8 + $0x178] sm:$0xff]
    %v2965 = vld [vmem:[#allocation8 + $0x180] sm:$0xff]
    %v2966 = vld [vmem:[#allocation8 + $0x188] sm:$0xff]
    %v2967 = vld [vmem:[#allocation8 + $0x190] sm:$0xff]
    %v2968 = vld [vmem:[#allocation8 + $0x198] sm:$0xff]
    %v2969 = vld [vmem:[#allocation8 + $0x1a0] sm:$0xff]
    %v2970 = vld [vmem:[#allocation8 + $0x1a8] sm:$0xff]
    %v2971 = vld [vmem:[#allocation8 + $0x1b0] sm:$0xff]
    %v2972 = vld [vmem:[#allocation8 + $0x1b8] sm:$0xff]
    %v2973 = vld [vmem:[#allocation8 + $0x1c0] sm:$0xff]
    %v2974 = vld [vmem:[#allocation8 + $0x1c8] sm:$0xff]
    %v2975 = vld [vmem:[#allocation8 + $0x1d0] sm:$0xff]
    %v2976 = vld [vmem:[#allocation8 + $0x1d8] sm:$0xff]
    %v2977 = vld [vmem:[#allocation8 + $0x1e0] sm:$0xff]
    %v2978 = vld [vmem:[#allocation8 + $0x1e8] sm:$0xff]
    %v2979 = vld [vmem:[#allocation8 + $0x1f0] sm:$0xff]
    %v2980 = vld [vmem:[#allocation8 + $0x1f8] sm:$0xff]
    %v2981 = vld [vmem:[%s6] sm:$0x3]
    %v2983 = vlaneseq
    %v2984 = vshrl.u32 %v2983, 7
    %v2985 = vsub.s32 0, %v2984
    %v2986 = vrot.slane %v2981, %v2985
    %v2987 = vlaneseq
    %v2988 = vshrl.u32 %v2987, 7
    %v2989 = vsub.s32 1, %v2988
    %v2990 = vrot.slane %v2981, %v2989
    %v3057 = vunpack.c.l.b16 %v2917
    %v3058 = vunpack.c.h.b16 %v2917
    %v3059 = vunpack.c.l.b16 %v2918
    %v3060 = vunpack.c.h.b16 %v2918
    %v3061 = vunpack.c.l.b16 %v2919
    %v3062 = vunpack.c.h.b16 %v2919
    %v3063 = vunpack.c.l.b16 %v2920
    %v3064 = vunpack.c.h.b16 %v2920
    %v3065 = vunpack.c.l.b16 %v2921
    %v3066 = vunpack.c.h.b16 %v2921
    %v3067 = vunpack.c.l.b16 %v2922
    %v3068 = vunpack.c.h.b16 %v2922
    %v3069 = vunpack.c.l.b16 %v2923
    %v3070 = vunpack.c.h.b16 %v2923
    %v3071 = vunpack.c.l.b16 %v2924
    %v3072 = vunpack.c.h.b16 %v2924
    %v3073 = vunpack.c.l.b16 %v2925
    %v3074 = vunpack.c.h.b16 %v2925
    %v3075 = vunpack.c.l.b16 %v2926
    %v3076 = vunpack.c.h.b16 %v2926
    %v3077 = vunpack.c.l.b16 %v2927
    %v3078 = vunpack.c.h.b16 %v2927
    %v3079 = vunpack.c.l.b16 %v2928
    %v3080 = vunpack.c.h.b16 %v2928
    %v3081 = vunpack.c.l.b16 %v2929
    %v3082 = vunpack.c.h.b16 %v2929
    %v3083 = vunpack.c.l.b16 %v2930
    %v3084 = vunpack.c.h.b16 %v2930
    %v3085 = vunpack.c.l.b16 %v2931
    %v3086 = vunpack.c.h.b16 %v2931
    %v3087 = vunpack.c.l.b16 %v2932
    %v3088 = vunpack.c.h.b16 %v2932
    %v3089 = vunpack.c.l.b16 %v2933
    %v3090 = vunpack.c.h.b16 %v2933
    %v3091 = vunpack.c.l.b16 %v2934
    %v3092 = vunpack.c.h.b16 %v2934
    %v3093 = vunpack.c.l.b16 %v2935
    %v3094 = vunpack.c.h.b16 %v2935
    %v3095 = vunpack.c.l.b16 %v2936
    %v3096 = vunpack.c.h.b16 %v2936
    %v3097 = vunpack.c.l.b16 %v2937
    %v3098 = vunpack.c.h.b16 %v2937
    %v3099 = vunpack.c.l.b16 %v2938
    %v3100 = vunpack.c.h.b16 %v2938
    %v3101 = vunpack.c.l.b16 %v2939
    %v3102 = vunpack.c.h.b16 %v2939
    %v3103 = vunpack.c.l.b16 %v2940
    %v3104 = vunpack.c.h.b16 %v2940
    %v3105 = vunpack.c.l.b16 %v2941
    %v3106 = vunpack.c.h.b16 %v2941
    %v3107 = vunpack.c.l.b16 %v2942
    %v3108 = vunpack.c.h.b16 %v2942
    %v3109 = vunpack.c.l.b16 %v2943
    %v3110 = vunpack.c.h.b16 %v2943
    %v3111 = vunpack.c.l.b16 %v2944
    %v3112 = vunpack.c.h.b16 %v2944
    %v3113 = vunpack.c.l.b16 %v2945
    %v3114 = vunpack.c.h.b16 %v2945
    %v3115 = vunpack.c.l.b16 %v2946
    %v3116 = vunpack.c.h.b16 %v2946
    %v3117 = vunpack.c.l.b16 %v2947
    %v3118 = vunpack.c.h.b16 %v2947
    %v3119 = vunpack.c.l.b16 %v2948
    %v3120 = vunpack.c.h.b16 %v2948
    %v3121 = vunpack.c.l.b16 %v2949
    %v3122 = vunpack.c.h.b16 %v2949
    %v3123 = vunpack.c.l.b16 %v2950
    %v3124 = vunpack.c.h.b16 %v2950
    %v3125 = vunpack.c.l.b16 %v2951
    %v3126 = vunpack.c.h.b16 %v2951
    %v3127 = vunpack.c.l.b16 %v2952
    %v3128 = vunpack.c.h.b16 %v2952
    %v3129 = vunpack.c.l.b16 %v2953
    %v3130 = vunpack.c.h.b16 %v2953
    %v3131 = vunpack.c.l.b16 %v2954
    %v3132 = vunpack.c.h.b16 %v2954
    %v3133 = vunpack.c.l.b16 %v2955
    %v3134 = vunpack.c.h.b16 %v2955
    %v3135 = vunpack.c.l.b16 %v2956
    %v3136 = vunpack.c.h.b16 %v2956
    %v3137 = vunpack.c.l.b16 %v2957
    %v3138 = vunpack.c.h.b16 %v2957
    %v3139 = vunpack.c.l.b16 %v2958
    %v3140 = vunpack.c.h.b16 %v2958
    %v3141 = vunpack.c.l.b16 %v2959
    %v3142 = vunpack.c.h.b16 %v2959
    %v3143 = vunpack.c.l.b16 %v2960
    %v3144 = vunpack.c.h.b16 %v2960
    %v3145 = vunpack.c.l.b16 %v2961
    %v3146 = vunpack.c.h.b16 %v2961
    %v3147 = vunpack.c.l.b16 %v2962
    %v3148 = vunpack.c.h.b16 %v2962
    %v3149 = vunpack.c.l.b16 %v2963
    %v3150 = vunpack.c.h.b16 %v2963
    %v3151 = vunpack.c.l.b16 %v2964
    %v3152 = vunpack.c.h.b16 %v2964
    %v3153 = vunpack.c.l.b16 %v2965
    %v3154 = vunpack.c.h.b16 %v2965
    %v3155 = vunpack.c.l.b16 %v2966
    %v3156 = vunpack.c.h.b16 %v2966
    %v3157 = vunpack.c.l.b16 %v2967
    %v3158 = vunpack.c.h.b16 %v2967
    %v3159 = vunpack.c.l.b16 %v2968
    %v3160 = vunpack.c.h.b16 %v2968
    %v3161 = vunpack.c.l.b16 %v2969
    %v3162 = vunpack.c.h.b16 %v2969
    %v3163 = vunpack.c.l.b16 %v2970
    %v3164 = vunpack.c.h.b16 %v2970
    %v3165 = vunpack.c.l.b16 %v2971
    %v3166 = vunpack.c.h.b16 %v2971
    %v3167 = vunpack.c.l.b16 %v2972
    %v3168 = vunpack.c.h.b16 %v2972
    %v3169 = vunpack.c.l.b16 %v2973
    %v3170 = vunpack.c.h.b16 %v2973
    %v3171 = vunpack.c.l.b16 %v2974
    %v3172 = vunpack.c.h.b16 %v2974
    %v3173 = vunpack.c.l.b16 %v2975
    %v3174 = vunpack.c.h.b16 %v2975
    %v3175 = vunpack.c.l.b16 %v2976
    %v3176 = vunpack.c.h.b16 %v2976
    %v3177 = vunpack.c.l.b16 %v2977
    %v3178 = vunpack.c.h.b16 %v2977
    %v3179 = vunpack.c.l.b16 %v2978
    %v3180 = vunpack.c.h.b16 %v2978
    %v3181 = vunpack.c.l.b16 %v2979
    %v3182 = vunpack.c.h.b16 %v2979
    %v3183 = vunpack.c.l.b16 %v2980
    %v3184 = vunpack.c.h.b16 %v2980
    %v3185 = vpack.c.b16 %v3059, %v3057
    %v3186 = vpack.c.b16 %v3060, %v3058
    %v3187 = vpack.c.b16 %v3063, %v3061
    %v3188 = vpack.c.b16 %v3064, %v3062
    %v3189 = vpack.c.b16 %v3067, %v3065
    %v3190 = vpack.c.b16 %v3068, %v3066
    %v3191 = vpack.c.b16 %v3071, %v3069
    %v3192 = vpack.c.b16 %v3072, %v3070
    %v3193 = vpack.c.b16 %v3075, %v3073
    %v3194 = vpack.c.b16 %v3076, %v3074
    %v3195 = vpack.c.b16 %v3079, %v3077
    %v3196 = vpack.c.b16 %v3080, %v3078
    %v3197 = vpack.c.b16 %v3083, %v3081
    %v3198 = vpack.c.b16 %v3084, %v3082
    %v3199 = vpack.c.b16 %v3087, %v3085
    %v3200 = vpack.c.b16 %v3088, %v3086
    %v3201 = vpack.c.b16 %v3091, %v3089
    %v3202 = vpack.c.b16 %v3092, %v3090
    %v3203 = vpack.c.b16 %v3095, %v3093
    %v3204 = vpack.c.b16 %v3096, %v3094
    %v3205 = vpack.c.b16 %v3099, %v3097
    %v3206 = vpack.c.b16 %v3100, %v3098
    %v3207 = vpack.c.b16 %v3103, %v3101
    %v3208 = vpack.c.b16 %v3104, %v3102
    %v3209 = vpack.c.b16 %v3107, %v3105
    %v3210 = vpack.c.b16 %v3108, %v3106
    %v3211 = vpack.c.b16 %v3111, %v3109
    %v3212 = vpack.c.b16 %v3112, %v3110
    %v3213 = vpack.c.b16 %v3115, %v3113
    %v3214 = vpack.c.b16 %v3116, %v3114
    %v3215 = vpack.c.b16 %v3119, %v3117
    %v3216 = vpack.c.b16 %v3120, %v3118
    %v3217 = vpack.c.b16 %v3123, %v3121
    %v3218 = vpack.c.b16 %v3124, %v3122
    %v3219 = vpack.c.b16 %v3127, %v3125
    %v3220 = vpack.c.b16 %v3128, %v3126
    %v3221 = vpack.c.b16 %v3131, %v3129
    %v3222 = vpack.c.b16 %v3132, %v3130
    %v3223 = vpack.c.b16 %v3135, %v3133
    %v3224 = vpack.c.b16 %v3136, %v3134
    %v3225 = vpack.c.b16 %v3139, %v3137
    %v3226 = vpack.c.b16 %v3140, %v3138
    %v3227 = vpack.c.b16 %v3143, %v3141
    %v3228 = vpack.c.b16 %v3144, %v3142
    %v3229 = vpack.c.b16 %v3147, %v3145
    %v3230 = vpack.c.b16 %v3148, %v3146
    %v3231 = vpack.c.b16 %v3151, %v3149
    %v3232 = vpack.c.b16 %v3152, %v3150
    %v3233 = vpack.c.b16 %v3155, %v3153
    %v3234 = vpack.c.b16 %v3156, %v3154
    %v3235 = vpack.c.b16 %v3159, %v3157
    %v3236 = vpack.c.b16 %v3160, %v3158
    %v3237 = vpack.c.b16 %v3163, %v3161
    %v3238 = vpack.c.b16 %v3164, %v3162
    %v3239 = vpack.c.b16 %v3167, %v3165
    %v3240 = vpack.c.b16 %v3168, %v3166
    %v3241 = vpack.c.b16 %v3171, %v3169
    %v3242 = vpack.c.b16 %v3172, %v3170
    %v3243 = vpack.c.b16 %v3175, %v3173
    %v3244 = vpack.c.b16 %v3176, %v3174
    %v3245 = vpack.c.b16 %v3179, %v3177
    %v3246 = vpack.c.b16 %v3180, %v3178
    %v3247 = vpack.c.b16 %v3183, %v3181
    %v3248 = vpack.c.b16 %v3184, %v3182
    %3313 = vmatprep.subr.bf16.mxu0 %v3186
    %3314 = vmatpush1.bf16.msra.mxu0 %v3185
    %3315 = vmatprep.subr.bf16.mxu0 %v3188
    %3316 = vmatpush1.bf16.msra.mxu0 %v3187
    %3317 = vmatprep.subr.bf16.mxu0 %v3190
    %3318 = vmatpush1.bf16.msra.mxu0 %v3189
    %3319 = vmatprep.subr.bf16.mxu0 %v3192
    %3320 = vmatpush1.bf16.msra.mxu0 %v3191
    %3321 = vmatprep.subr.bf16.mxu0 %v3194
    %3322 = vmatpush1.bf16.msra.mxu0 %v3193
    %3323 = vmatprep.subr.bf16.mxu0 %v3196
    %3324 = vmatpush1.bf16.msra.mxu0 %v3195
    %3325 = vmatprep.subr.bf16.mxu0 %v3198
    %3326 = vmatpush1.bf16.msra.mxu0 %v3197
    %3327 = vmatprep.subr.bf16.mxu0 %v3200
    %3328 = vmatpush1.bf16.msra.mxu0 %v3199
    %3329 = vmatprep.subr.bf16.mxu0 %v3202
    %3330 = vmatpush1.bf16.msra.mxu0 %v3201
    %3331 = vmatprep.subr.bf16.mxu0 %v3204
    %3332 = vmatpush1.bf16.msra.mxu0 %v3203
    %3333 = vmatprep.subr.bf16.mxu0 %v3206
    %3334 = vmatpush1.bf16.msra.mxu0 %v3205
    %3335 = vmatprep.subr.bf16.mxu0 %v3208
    %3336 = vmatpush1.bf16.msra.mxu0 %v3207
    %3337 = vmatprep.subr.bf16.mxu0 %v3210
    %3338 = vmatpush1.bf16.msra.mxu0 %v3209
    %3339 = vmatprep.subr.bf16.mxu0 %v3212
    %3340 = vmatpush1.bf16.msra.mxu0 %v3211
    %3341 = vmatprep.subr.bf16.mxu0 %v3214
    %3342 = vmatpush1.bf16.msra.mxu0 %v3213
    %3343 = vmatprep.subr.bf16.mxu0 %v3216
    %3344 = vmatpush1.bf16.msra.mxu0 %v3215
    %3345 = vmatprep.mubr.bf16.mxu0 %v2914
    %3346 = vmatmul.mubr.bf16.gmra.mrb[0].mxu0 %v2913
    %v3347 = vpop.f32.mrb[0].mxu0
    %v3348 = vadd.f32 %v2986, %v3347
    %v3349 = vpop.f32.mrb[0].mxu0
    %v3350 = vadd.f32 %v2990, %v3349
    %v3351 = vpop.f32.mrb[0].mxu0
    %v3352 = vadd.f32 %v2986, %v3351
    %v3353 = vpop.f32.mrb[0].mxu0
    %v3354 = vadd.f32 %v2990, %v3353
    %3355 = vdwg.mxu0
    %3356 = vmatprep.subr.bf16.mxu0 %v3218
    %3357 = vmatpush1.bf16.msra.mxu0 %v3217
    %3358 = vmatprep.subr.bf16.mxu0 %v3220
    %3359 = vmatpush1.bf16.msra.mxu0 %v3219
    %3360 = vmatprep.subr.bf16.mxu0 %v3222
    %3361 = vmatpush1.bf16.msra.mxu0 %v3221
    %3362 = vmatprep.subr.bf16.mxu0 %v3224
    %3363 = vmatpush1.bf16.msra.mxu0 %v3223
    %3364 = vmatprep.subr.bf16.mxu0 %v3226
    %3365 = vmatpush1.bf16.msra.mxu0 %v3225
    %3366 = vmatprep.subr.bf16.mxu0 %v3228
    %3367 = vmatpush1.bf16.msra.mxu0 %v3227
    %3368 = vmatprep.subr.bf16.mxu0 %v3230
    %3369 = vmatpush1.bf16.msra.mxu0 %v3229
    %3370 = vmatprep.subr.bf16.mxu0 %v3232
    %3371 = vmatpush1.bf16.msra.mxu0 %v3231
    %3372 = vmatprep.subr.bf16.mxu0 %v3234
    %3373 = vmatpush1.bf16.msra.mxu0 %v3233
    %3374 = vmatprep.subr.bf16.mxu0 %v3236
    %3375 = vmatpush1.bf16.msra.mxu0 %v3235
    %3376 = vmatprep.subr.bf16.mxu0 %v3238
    %3377 = vmatpush1.bf16.msra.mxu0 %v3237
    %3378 = vmatprep.subr.bf16.mxu0 %v3240
    %3379 = vmatpush1.bf16.msra.mxu0 %v3239
    %3380 = vmatprep.subr.bf16.mxu0 %v3242
    %3381 = vmatpush1.bf16.msra.mxu0 %v3241
    %3382 = vmatprep.subr.bf16.mxu0 %v3244
    %3383 = vmatpush1.bf16.msra.mxu0 %v3243
    %3384 = vmatprep.subr.bf16.mxu0 %v3246
    %3385 = vmatpush1.bf16.msra.mxu0 %v3245
    %3386 = vmatprep.subr.bf16.mxu0 %v3248
    %3387 = vmatpush1.bf16.msra.mxu0 %v3247
    %3388 = vmatprep.mubr.bf16.mxu0 %v2916
    %3389 = vmatmul.mubr.bf16.gmra.mrb[0].mxu0 %v2915
    %v3390 = vpop.f32.mrb[0].mxu0
    %v3391 = vadd.f32 %v3348, %v3390
    %v3392 = vpop.f32.mrb[0].mxu0
    %v3393 = vadd.f32 %v3350, %v3392
    %v3394 = vpop.f32.mrb[0].mxu0
    %v3395 = vadd.f32 %v3352, %v3394
    %v3396 = vpop.f32.mrb[0].mxu0
    %v3397 = vadd.f32 %v3354, %v3396
    %3398 = vdwg.mxu0
    %v3399 = vmul.f32 %v3391, 0.01
    %v3400 = vmul.f32 %v3393, 0.01
    %v3401 = vmul.f32 %v3395, 0.01
    %v3402 = vmul.f32 %v3397, 0.01
    %v3403 = vmax.f32 %v3391, %v3399
    %v3404 = vmax.f32 %v3393, %v3400
    %v3405 = vmax.f32 %v3395, %v3401
    %v3406 = vmax.f32 %v3397, %v3402
    %v3407 = vpack.c.bf16 %v3405, %v3403
    %v3408 = vpack.c.bf16 %v3406, %v3404
    %v3409 = vld [vmem:[#allocation10] sm:$0xf]
    %v3410 = vld [vmem:[#allocation10 + $0x4] sm:$0xf]
    %v3411 = vld [vmem:[#allocation10 + $0x8] sm:$0xf]
    %v3412 = vld [vmem:[#allocation10 + $0xc] sm:$0xf]
    %v3413 = vld [vmem:[#allocation10 + $0x10] sm:$0xf]
    %v3414 = vld [vmem:[#allocation10 + $0x14] sm:$0xf]
    %v3415 = vld [vmem:[#allocation10 + $0x18] sm:$0xf]
    %v3416 = vld [vmem:[#allocation10 + $0x1c] sm:$0xf]
    %v3417 = vld [vmem:[#allocation10 + $0x20] sm:$0xf]
    %v3418 = vld [vmem:[#allocation10 + $0x24] sm:$0xf]
    %v3419 = vld [vmem:[#allocation10 + $0x28] sm:$0xf]
    %v3420 = vld [vmem:[#allocation10 + $0x2c] sm:$0xf]
    %v3421 = vld [vmem:[#allocation10 + $0x30] sm:$0xf]
    %v3422 = vld [vmem:[#allocation10 + $0x34] sm:$0xf]
    %v3423 = vld [vmem:[#allocation10 + $0x38] sm:$0xf]
    %v3424 = vld [vmem:[#allocation10 + $0x3c] sm:$0xf]
    %v3425 = vld [vmem:[#allocation10 + $0x40] sm:$0xf]
    %v3426 = vld [vmem:[#allocation10 + $0x44] sm:$0xf]
    %v3427 = vld [vmem:[#allocation10 + $0x48] sm:$0xf]
    %v3428 = vld [vmem:[#allocation10 + $0x4c] sm:$0xf]
    %v3429 = vld [vmem:[#allocation10 + $0x50] sm:$0xf]
    %v3430 = vld [vmem:[#allocation10 + $0x54] sm:$0xf]
    %v3431 = vld [vmem:[#allocation10 + $0x58] sm:$0xf]
    %v3432 = vld [vmem:[#allocation10 + $0x5c] sm:$0xf]
    %v3433 = vld [vmem:[#allocation10 + $0x60] sm:$0xf]
    %v3434 = vld [vmem:[#allocation10 + $0x64] sm:$0xf]
    %v3435 = vld [vmem:[#allocation10 + $0x68] sm:$0xf]
    %v3436 = vld [vmem:[#allocation10 + $0x6c] sm:$0xf]
    %v3437 = vld [vmem:[#allocation10 + $0x70] sm:$0xf]
    %v3438 = vld [vmem:[#allocation10 + $0x74] sm:$0xf]
    %v3439 = vld [vmem:[#allocation10 + $0x78] sm:$0xf]
    %v3440 = vld [vmem:[#allocation10 + $0x7c] sm:$0xf]
    %v3441 = vld [vmem:[%s8] sm:$0x1]
    %v3443 = vlaneseq
    %v3444 = vshrl.u32 %v3443, 7
    %v3445 = vsub.s32 0, %v3444
    %v3446 = vrot.slane %v3441, %v3445
    %v3480 = vunpack.c.l.b16 %v3409
    %v3481 = vunpack.c.l.b16 %v3410
    %v3482 = vunpack.c.l.b16 %v3411
    %v3483 = vunpack.c.l.b16 %v3412
    %v3484 = vunpack.c.l.b16 %v3413
    %v3485 = vunpack.c.l.b16 %v3414
    %v3486 = vunpack.c.l.b16 %v3415
    %v3487 = vunpack.c.l.b16 %v3416
    %v3488 = vunpack.c.l.b16 %v3417
    %v3489 = vunpack.c.l.b16 %v3418
    %v3490 = vunpack.c.l.b16 %v3419
    %v3491 = vunpack.c.l.b16 %v3420
    %v3492 = vunpack.c.l.b16 %v3421
    %v3493 = vunpack.c.l.b16 %v3422
    %v3494 = vunpack.c.l.b16 %v3423
    %v3495 = vunpack.c.l.b16 %v3424
    %v3496 = vunpack.c.l.b16 %v3425
    %v3497 = vunpack.c.l.b16 %v3426
    %v3498 = vunpack.c.l.b16 %v3427
    %v3499 = vunpack.c.l.b16 %v3428
    %v3500 = vunpack.c.l.b16 %v3429
    %v3501 = vunpack.c.l.b16 %v3430
    %v3502 = vunpack.c.l.b16 %v3431
    %v3503 = vunpack.c.l.b16 %v3432
    %v3504 = vunpack.c.l.b16 %v3433
    %v3505 = vunpack.c.l.b16 %v3434
    %v3506 = vunpack.c.l.b16 %v3435
    %v3507 = vunpack.c.l.b16 %v3436
    %v3508 = vunpack.c.l.b16 %v3437
    %v3509 = vunpack.c.l.b16 %v3438
    %v3510 = vunpack.c.l.b16 %v3439
    %v3511 = vunpack.c.l.b16 %v3440
    %v3512 = vpack.c.b16 %v3481, %v3480
    %v3513 = vpack.c.b16 %v3483, %v3482
    %v3514 = vpack.c.b16 %v3485, %v3484
    %v3515 = vpack.c.b16 %v3487, %v3486
    %v3516 = vpack.c.b16 %v3489, %v3488
    %v3517 = vpack.c.b16 %v3491, %v3490
    %v3518 = vpack.c.b16 %v3493, %v3492
    %v3519 = vpack.c.b16 %v3495, %v3494
    %v3520 = vpack.c.b16 %v3497, %v3496
    %v3521 = vpack.c.b16 %v3499, %v3498
    %v3522 = vpack.c.b16 %v3501, %v3500
    %v3523 = vpack.c.b16 %v3503, %v3502
    %v3524 = vpack.c.b16 %v3505, %v3504
    %v3525 = vpack.c.b16 %v3507, %v3506
    %v3526 = vpack.c.b16 %v3509, %v3508
    %v3527 = vpack.c.b16 %v3511, %v3510
    %3544 = vmatprep.subr.bf16.mxu0 0
    %3545 = vmatpush1.bf16.msra.mxu0 %v3512
    %3546 = vmatprep.subr.bf16.mxu0 0
    %3547 = vmatpush1.bf16.msra.mxu0 %v3513
    %3548 = vmatprep.subr.bf16.mxu0 0
    %3549 = vmatpush1.bf16.msra.mxu0 %v3514
    %3550 = vmatprep.subr.bf16.mxu0 0
    %3551 = vmatpush1.bf16.msra.mxu0 %v3515
    %3552 = vmatprep.subr.bf16.mxu0 0
    %3553 = vmatpush1.bf16.msra.mxu0 %v3516
    %3554 = vmatprep.subr.bf16.mxu0 0
    %3555 = vmatpush1.bf16.msra.mxu0 %v3517
    %3556 = vmatprep.subr.bf16.mxu0 0
    %3557 = vmatpush1.bf16.msra.mxu0 %v3518
    %3558 = vmatprep.subr.bf16.mxu0 0
    %3559 = vmatpush1.bf16.msra.mxu0 %v3519
    %3560 = vmatprep.subr.bf16.mxu0 0
    %3561 = vmatpush1.bf16.msra.mxu0 %v3520
    %3562 = vmatprep.subr.bf16.mxu0 0
    %3563 = vmatpush1.bf16.msra.mxu0 %v3521
    %3564 = vmatprep.subr.bf16.mxu0 0
    %3565 = vmatpush1.bf16.msra.mxu0 %v3522
    %3566 = vmatprep.subr.bf16.mxu0 0
    %3567 = vmatpush1.bf16.msra.mxu0 %v3523
    %3568 = vmatprep.subr.bf16.mxu0 0
    %3569 = vmatpush1.bf16.msra.mxu0 %v3524
    %3570 = vmatprep.subr.bf16.mxu0 0
    %3571 = vmatpush1.bf16.msra.mxu0 %v3525
    %3572 = vmatprep.subr.bf16.mxu0 0
    %3573 = vmatpush1.bf16.msra.mxu0 %v3526
    %3574 = vmatprep.subr.bf16.mxu0 0
    %3575 = vmatpush1.bf16.msra.mxu0 %v3527
    %3576 = vmatprep.mubr.bf16.mxu0 %v3408
    %3577 = vmatmul.mubr.bf16.gmra.mrb[0].mxu0 %v3407
    %v3578 = vpop.f32.mrb[0].mxu0
    %v3579 = vadd.f32 %v3446, %v3578
    %v3580 = vpop.f32.mrb[0].mxu0
    %v3581 = vpop.f32.mrb[0].mxu0
    %v3582 = vadd.f32 %v3446, %v3581
    %v3583 = vpop.f32.mrb[0].mxu0
    %3584 = vdwg.mxu0
    %v3585 = vmul.f32 %v3579, 0.01
    %v3586 = vmul.f32 %v3582, 0.01
    %v3587 = vmax.f32 %v3579, %v3585
    %v3588 = vmax.f32 %v3582, %v3586
    %v3589 = vpack.c.bf16 %v3588, %v3587
    %v3590 = vld [vmem:[#allocation11] sm:$0xf]
    %v3591 = vld [vmem:[#allocation11 + $0x4] sm:$0xf]
    %v3592 = vld [vmem:[#allocation11 + $0x8] sm:$0xf]
    %v3593 = vld [vmem:[#allocation11 + $0xc] sm:$0xf]
    %v3594 = vld [vmem:[#allocation11 + $0x10] sm:$0xf]
    %v3595 = vld [vmem:[#allocation11 + $0x14] sm:$0xf]
    %v3596 = vld [vmem:[#allocation11 + $0x18] sm:$0xf]
    %v3597 = vld [vmem:[#allocation11 + $0x1c] sm:$0xf]
    %v3598 = vld [vmem:[#allocation11 + $0x20] sm:$0xf]
    %v3599 = vld [vmem:[#allocation11 + $0x24] sm:$0xf]
    %v3600 = vld [vmem:[#allocation11 + $0x28] sm:$0xf]
    %v3601 = vld [vmem:[#allocation11 + $0x2c] sm:$0xf]
    %v3602 = vld [vmem:[#allocation11 + $0x30] sm:$0xf]
    %v3603 = vld [vmem:[#allocation11 + $0x34] sm:$0xf]
    %v3604 = vld [vmem:[#allocation11 + $0x38] sm:$0xf]
    %v3605 = vld [vmem:[#allocation11 + $0x3c] sm:$0xf]
    %v3606 = vld [vmem:[%s10] sm:$0x1]
    %v3608 = vlaneseq
    %v3609 = vshrl.u32 %v3608, 7
    %v3610 = vsub.s32 0, %v3609
    %v3611 = vrot.slane %v3606, %v3610
    %v3629 = vunpack.c.l.b16 %v3590
    %v3630 = vunpack.c.l.b16 %v3591
    %v3631 = vunpack.c.l.b16 %v3592
    %v3632 = vunpack.c.l.b16 %v3593
    %v3633 = vunpack.c.l.b16 %v3594
    %v3634 = vunpack.c.l.b16 %v3595
    %v3635 = vunpack.c.l.b16 %v3596
    %v3636 = vunpack.c.l.b16 %v3597
    %v3637 = vunpack.c.l.b16 %v3598
    %v3638 = vunpack.c.l.b16 %v3599
    %v3639 = vunpack.c.l.b16 %v3600
    %v3640 = vunpack.c.l.b16 %v3601
    %v3641 = vunpack.c.l.b16 %v3602
    %v3642 = vunpack.c.l.b16 %v3603
    %v3643 = vunpack.c.l.b16 %v3604
    %v3644 = vunpack.c.l.b16 %v3605
    %v3645 = vpack.c.b16 %v3630, %v3629
    %v3646 = vpack.c.b16 %v3632, %v3631
    %v3647 = vpack.c.b16 %v3634, %v3633
    %v3648 = vpack.c.b16 %v3636, %v3635
    %v3649 = vpack.c.b16 %v3638, %v3637
    %v3650 = vpack.c.b16 %v3640, %v3639
    %v3651 = vpack.c.b16 %v3642, %v3641
    %v3652 = vpack.c.b16 %v3644, %v3643
    %3661 = vmatprep.subr.bf16.mxu0 0
    %3662 = vmatpush1.bf16.msra.mxu0 %v3645
    %3663 = vmatprep.subr.bf16.mxu0 0
    %3664 = vmatpush1.bf16.msra.mxu0 %v3646
    %3665 = vmatprep.subr.bf16.mxu0 0
    %3666 = vmatpush1.bf16.msra.mxu0 %v3647
    %3667 = vmatprep.subr.bf16.mxu0 0
    %3668 = vmatpush1.bf16.msra.mxu0 %v3648
    %3669 = vmatprep.subr.bf16.mxu0 0
    %3670 = vmatpush1.bf16.msra.mxu0 %v3649
    %3671 = vmatprep.subr.bf16.mxu0 0
    %3672 = vmatpush1.bf16.msra.mxu0 %v3650
    %3673 = vmatprep.subr.bf16.mxu0 0
    %3674 = vmatpush1.bf16.msra.mxu0 %v3651
    %3675 = vmatprep.subr.bf16.mxu0 0
    %3676 = vmatpush1.bf16.msra.mxu0 %v3652
    %3677 = vmatprep.subr.bf16.mxu0 0
    %3678 = vmatpush1.bf16.msra.mxu0 0
    %3679 = vmatprep.subr.bf16.mxu0 0
    %3680 = vmatpush1.bf16.msra.mxu0 0
    %3681 = vmatprep.subr.bf16.mxu0 0
    %3682 = vmatpush1.bf16.msra.mxu0 0
    %3683 = vmatprep.subr.bf16.mxu0 0
    %3684 = vmatpush1.bf16.msra.mxu0 0
    %3685 = vmatprep.subr.bf16.mxu0 0
    %3686 = vmatpush1.bf16.msra.mxu0 0
    %3687 = vmatprep.subr.bf16.mxu0 0
    %3688 = vmatpush1.bf16.msra.mxu0 0
    %3689 = vmatprep.subr.bf16.mxu0 0
    %3690 = vmatpush1.bf16.msra.mxu0 0
    %3691 = vmatprep.subr.bf16.mxu0 0
    %3692 = vmatpush1.bf16.msra.mxu0 0
    %3693 = vmatprep.mubr.bf16.mxu0 0
    %3694 = vmatmul.mubr.bf16.gmra.mrb[0].mxu0 %v3589
    %v3695 = vpop.f32.mrb[0].mxu0
    %v3696 = vadd.f32 %v3611, %v3695
    %v3697 = vpop.f32.mrb[0].mxu0
    %v3698 = vpop.f32.mrb[0].mxu0
    %v3699 = vadd.f32 %v3611, %v3698
    %v3700 = vpop.f32.mrb[0].mxu0
    %3701 = vdwg.mxu0
    %v3702 = vmul.f32 %v3696, 0.01
    %v3703 = vmul.f32 %v3699, 0.01
    %v3704 = vmax.f32 %v3696, %v3702
    %v3705 = vmax.f32 %v3699, %v3703
    %v3706 = vpack.c.bf16 %v3705, %v3704
    %v3707 = vld [vmem:[#allocation13] sm:$0xf]
    %v3708 = vld [vmem:[#allocation13 + $0x4] sm:$0xf]
    %v3709 = vld [vmem:[#allocation13 + $0x8] sm:$0xf]
    %v3710 = vld [vmem:[#allocation13 + $0xc] sm:$0xf]
    %v3711 = vld [vmem:[#allocation13 + $0x10] sm:$0xf]
    %v3712 = vld [vmem:[#allocation13 + $0x14] sm:$0xf]
    %v3713 = vld [vmem:[#allocation13 + $0x18] sm:$0xf]
    %v3714 = vld [vmem:[#allocation13 + $0x1c] sm:$0xf]
    %v3715 = vld [vmem:[#allocation13 + $0x20] sm:$0xf]
    %v3716 = vld [vmem:[#allocation13 + $0x24] sm:$0xf]
    %v3717 = vld [vmem:[#allocation13 + $0x28] sm:$0xf]
    %v3718 = vld [vmem:[#allocation13 + $0x2c] sm:$0xf]
    %v3719 = vld [vmem:[#allocation13 + $0x30] sm:$0xf]
    %v3720 = vld [vmem:[#allocation13 + $0x34] sm:$0xf]
    %v3721 = vld [vmem:[#allocation13 + $0x38] sm:$0xf]
    %v3722 = vld [vmem:[#allocation13 + $0x3c] sm:$0xf]
    %v3723 = vld [vmem:[%s12] sm:$0x1]
    %v3725 = vlaneseq
    %v3726 = vshrl.u32 %v3725, 7
    %v3727 = vsub.s32 0, %v3726
    %v3728 = vrot.slane %v3723, %v3727
    %v3746 = vunpack.c.l.b16 %v3707
    %v3747 = vunpack.c.l.b16 %v3708
    %v3748 = vunpack.c.l.b16 %v3709
    %v3749 = vunpack.c.l.b16 %v3710
    %v3750 = vunpack.c.l.b16 %v3711
    %v3751 = vunpack.c.l.b16 %v3712
    %v3752 = vunpack.c.l.b16 %v3713
    %v3753 = vunpack.c.l.b16 %v3714
    %v3754 = vunpack.c.l.b16 %v3715
    %v3755 = vunpack.c.l.b16 %v3716
    %v3756 = vunpack.c.l.b16 %v3717
    %v3757 = vunpack.c.l.b16 %v3718
    %v3758 = vunpack.c.l.b16 %v3719
    %v3759 = vunpack.c.l.b16 %v3720
    %v3760 = vunpack.c.l.b16 %v3721
    %v3761 = vunpack.c.l.b16 %v3722
    %v3762 = vpack.c.b16 %v3747, %v3746
    %v3763 = vpack.c.b16 %v3749, %v3748
    %v3764 = vpack.c.b16 %v3751, %v3750
    %v3765 = vpack.c.b16 %v3753, %v3752
    %v3766 = vpack.c.b16 %v3755, %v3754
    %v3767 = vpack.c.b16 %v3757, %v3756
    %v3768 = vpack.c.b16 %v3759, %v3758
    %v3769 = vpack.c.b16 %v3761, %v3760
    %3778 = vmatprep.subr.bf16.mxu0 0
    %3779 = vmatpush1.bf16.msra.mxu0 %v3762
    %3780 = vmatprep.subr.bf16.mxu0 0
    %3781 = vmatpush1.bf16.msra.mxu0 %v3763
    %3782 = vmatprep.subr.bf16.mxu0 0
    %3783 = vmatpush1.bf16.msra.mxu0 %v3764
    %3784 = vmatprep.subr.bf16.mxu0 0
    %3785 = vmatpush1.bf16.msra.mxu0 %v3765
    %3786 = vmatprep.subr.bf16.mxu0 0
    %3787 = vmatpush1.bf16.msra.mxu0 %v3766
    %3788 = vmatprep.subr.bf16.mxu0 0
    %3789 = vmatpush1.bf16.msra.mxu0 %v3767
    %3790 = vmatprep.subr.bf16.mxu0 0
    %3791 = vmatpush1.bf16.msra.mxu0 %v3768
    %3792 = vmatprep.subr.bf16.mxu0 0
    %3793 = vmatpush1.bf16.msra.mxu0 %v3769
    %3794 = vmatprep.subr.bf16.mxu0 0
    %3795 = vmatpush1.bf16.msra.mxu0 0
    %3796 = vmatprep.subr.bf16.mxu0 0
    %3797 = vmatpush1.bf16.msra.mxu0 0
    %3798 = vmatprep.subr.bf16.mxu0 0
    %3799 = vmatpush1.bf16.msra.mxu0 0
    %3800 = vmatprep.subr.bf16.mxu0 0
    %3801 = vmatpush1.bf16.msra.mxu0 0
    %3802 = vmatprep.subr.bf16.mxu0 0
    %3803 = vmatpush1.bf16.msra.mxu0 0
    %3804 = vmatprep.subr.bf16.mxu0 0
    %3805 = vmatpush1.bf16.msra.mxu0 0
    %3806 = vmatprep.subr.bf16.mxu0 0
    %3807 = vmatpush1.bf16.msra.mxu0 0
    %3808 = vmatprep.subr.bf16.mxu0 0
    %3809 = vmatpush1.bf16.msra.mxu0 0
    %3810 = vmatprep.mubr.bf16.mxu0 0
    %3811 = vmatmul.mubr.bf16.gmra.mrb[0].mxu0 %v3706
    %v3812 = vpop.f32.mrb[0].mxu0
    %v3813 = vadd.f32 %v3728, %v3812
    %v3814 = vpop.f32.mrb[0].mxu0
    %v3815 = vpop.f32.mrb[0].mxu0
    %v3816 = vadd.f32 %v3728, %v3815
    %v3817 = vpop.f32.mrb[0].mxu0
    %3818 = vdwg.mxu0
    %v3819 = vmul.f32 %v3813, 0.01
    %v3820 = vmul.f32 %v3816, 0.01
    %v3821 = vmax.f32 %v3813, %v3819
    %v3822 = vmax.f32 %v3816, %v3820
    %v3823 = vpack.c.bf16 %v3822, %v3821
    %v3824 = vld [vmem:[#allocation14] sm:$0xf]
    %v3825 = vld [vmem:[#allocation14 + $0x4] sm:$0xf]
    %v3826 = vld [vmem:[#allocation14 + $0x8] sm:$0xf]
    %v3827 = vld [vmem:[#allocation14 + $0xc] sm:$0xf]
    %v3828 = vld [vmem:[#allocation14 + $0x10] sm:$0xf]
    %v3829 = vld [vmem:[#allocation14 + $0x14] sm:$0xf]
    %v3830 = vld [vmem:[#allocation14 + $0x18] sm:$0xf]
    %v3831 = vld [vmem:[#allocation14 + $0x1c] sm:$0xf]
    %v3832 = vld [vmem:[#allocation14 + $0x20] sm:$0xf]
    %v3833 = vld [vmem:[#allocation14 + $0x24] sm:$0xf]
    %v3834 = vld [vmem:[#allocation14 + $0x28] sm:$0xf]
    %v3835 = vld [vmem:[#allocation14 + $0x2c] sm:$0xf]
    %v3836 = vld [vmem:[#allocation14 + $0x30] sm:$0xf]
    %v3837 = vld [vmem:[#allocation14 + $0x34] sm:$0xf]
    %v3838 = vld [vmem:[#allocation14 + $0x38] sm:$0xf]
    %v3839 = vld [vmem:[#allocation14 + $0x3c] sm:$0xf]
    %v3840 = vld [vmem:[%s14] sm:$0x1]
    %v3842 = vlaneseq
    %v3843 = vshrl.u32 %v3842, 7
    %v3844 = vsub.s32 0, %v3843
    %v3845 = vrot.slane %v3840, %v3844
    %v3863 = vunpack.c.l.b16 %v3824
    %v3864 = vunpack.c.l.b16 %v3825
    %v3865 = vunpack.c.l.b16 %v3826
    %v3866 = vunpack.c.l.b16 %v3827
    %v3867 = vunpack.c.l.b16 %v3828
    %v3868 = vunpack.c.l.b16 %v3829
    %v3869 = vunpack.c.l.b16 %v3830
    %v3870 = vunpack.c.l.b16 %v3831
    %v3871 = vunpack.c.l.b16 %v3832
    %v3872 = vunpack.c.l.b16 %v3833
    %v3873 = vunpack.c.l.b16 %v3834
    %v3874 = vunpack.c.l.b16 %v3835
    %v3875 = vunpack.c.l.b16 %v3836
    %v3876 = vunpack.c.l.b16 %v3837
    %v3877 = vunpack.c.l.b16 %v3838
    %v3878 = vunpack.c.l.b16 %v3839
    %v3879 = vpack.c.b16 %v3864, %v3863
    %v3880 = vpack.c.b16 %v3866, %v3865
    %v3881 = vpack.c.b16 %v3868, %v3867
    %v3882 = vpack.c.b16 %v3870, %v3869
    %v3883 = vpack.c.b16 %v3872, %v3871
    %v3884 = vpack.c.b16 %v3874, %v3873
    %v3885 = vpack.c.b16 %v3876, %v3875
    %v3886 = vpack.c.b16 %v3878, %v3877
    %3895 = vmatprep.subr.bf16.mxu0 0
    %3896 = vmatpush1.bf16.msra.mxu0 %v3879
    %3897 = vmatprep.subr.bf16.mxu0 0
    %3898 = vmatpush1.bf16.msra.mxu0 %v3880
    %3899 = vmatprep.subr.bf16.mxu0 0
    %3900 = vmatpush1.bf16.msra.mxu0 %v3881
    %3901 = vmatprep.subr.bf16.mxu0 0
    %3902 = vmatpush1.bf16.msra.mxu0 %v3882
    %3903 = vmatprep.subr.bf16.mxu0 0
    %3904 = vmatpush1.bf16.msra.mxu0 %v3883
    %3905 = vmatprep.subr.bf16.mxu0 0
    %3906 = vmatpush1.bf16.msra.mxu0 %v3884
    %3907 = vmatprep.subr.bf16.mxu0 0
    %3908 = vmatpush1.bf16.msra.mxu0 %v3885
    %3909 = vmatprep.subr.bf16.mxu0 0
    %3910 = vmatpush1.bf16.msra.mxu0 %v3886
    %3911 = vmatprep.subr.bf16.mxu0 0
    %3912 = vmatpush1.bf16.msra.mxu0 0
    %3913 = vmatprep.subr.bf16.mxu0 0
    %3914 = vmatpush1.bf16.msra.mxu0 0
    %3915 = vmatprep.subr.bf16.mxu0 0
    %3916 = vmatpush1.bf16.msra.mxu0 0
    %3917 = vmatprep.subr.bf16.mxu0 0
    %3918 = vmatpush1.bf16.msra.mxu0 0
    %3919 = vmatprep.subr.bf16.mxu0 0
    %3920 = vmatpush1.bf16.msra.mxu0 0
    %3921 = vmatprep.subr.bf16.mxu0 0
    %3922 = vmatpush1.bf16.msra.mxu0 0
    %3923 = vmatprep.subr.bf16.mxu0 0
    %3924 = vmatpush1.bf16.msra.mxu0 0
    %3925 = vmatprep.subr.bf16.mxu0 0
    %3926 = vmatpush1.bf16.msra.mxu0 0
    %3927 = vmatprep.mubr.bf16.mxu0 0
    %3928 = vmatmul.mubr.bf16.gmra.mrb[0].mxu0 %v3823
    %v3929 = vpop.f32.mrb[0].mxu0
    %v3930 = vadd.f32 %v3845, %v3929
    %v3931 = vpop.f32.mrb[0].mxu0
    %v3932 = vpop.f32.mrb[0].mxu0
    %v3933 = vadd.f32 %v3845, %v3932
    %v3934 = vpop.f32.mrb[0].mxu0
    %3935 = vdwg.mxu0
    %3936 = vst [vmem:[#allocation16] sm:$0xff] %v3930
    %3937 = vst [vmem:[#allocation16 + $0x8] sm:$0xff] %v3933
    // Predicated region
    $region94: #{tpu_custom_call.1} parent=1 // pred_check
      _
    $region95: #{tpu_custom_call.1} parent=1 // pred_check_branch
      %3939 = sbr.rel (0) target = $region97
    $region96: #{tpu_custom_call.1} parent=1 // pred_region
      %s3941 = ssub.s32 256, 256
      %3942 = vsyncadd [#allocation4], %s3941
      %s3943 = sshll.u32 [#allocation16], 4
      %s3944 = int_to_ptr.vmem [resolvable:$true] %s3943
      %3949 = dma.vmem_to_hbm [thread:$0]  %s3944, 256, %s15, [#allocation4], 128, 128, 8
    $region97: #{tpu_custom_call.1} parent=1 // pred_fallthru
      _
    // Predicated region
    $region98: #{tpu_custom_call.1} parent=1 // pred_check
      _
    $region99: #{tpu_custom_call.1} parent=1 // pred_check_branch
      %3951 = sbr.rel (0) target = $region101
    $region100: #{tpu_custom_call.1} parent=1 // pred_region
      %3952 = dma.done [#allocation4], 256
    $region101: #{tpu_custom_call.1} parent=1 // pred_fallthru
      _
    %3953 = vsyncpa [#allocation3], 1
    %3954 = vsyncpa [#allocation6], 1
    %3955 = vsyncpa [#allocation9], 1
    %3956 = vsyncpa [#allocation12], 1
    %3957 = vsyncpa [#allocation15], 1
    %3958 = vsyncpa [#allocation4], 1

</llo_original>
